<compile_context>
chip_gen: v5e
topology: v5e:2x2
jax: 0.10.0
libtpu: 0.0.40
codegen_flags: <defaults>
</compile_context>

<pallas_src>
import math

import jax
import jax.numpy as jnp
from jax.experimental import pallas as pl
from jax.experimental.pallas import tpu as pltpu


def _round_up(x, m):
    return (x + m - 1) // m * m


def _make_lstm_kernel(t_blk, tail_len, n_chunks, h_pad, unroll):
    """Kernel processing one chunk of `t_blk` timesteps per grid step."""
    four_h = 4 * h_pad
    bf16 = jnp.bfloat16

    def sigmoid(v):
        # logistic(v) == 0.5*tanh(0.5*v)+0.5 : one EUP op instead of exp+divide.
        return 0.5 * jnp.tanh(0.5 * v) + 0.5

    def kernel(x_ref, wih_ref, whh_ref, b_ref,   # inputs
               out_ref, cn_ref,                  # outputs
               gx_s, h_s, c_s):                  # VMEM scratch
        chunk = pl.program_id(0)
        bsz = x_ref.shape[0]

        @pl.when(chunk == 0)
        def _():
            h_s[...] = jnp.zeros_like(h_s)
            c_s[...] = jnp.zeros_like(c_s)

        # ---- Phase 1: input projection of the whole chunk as one bf16 MXU
        # matmul with f32 accumulation; bias broadcast once per chunk.
        x_flat = x_ref[...].reshape(bsz * t_blk, -1).astype(bf16)        # (B*T, I)
        gx = jnp.dot(x_flat, wih_ref[...],
                     preferred_element_type=jnp.float32) + b_ref[...]    # (B*T, 4H)
        gx_btk = gx.reshape(bsz, t_blk, four_h)                          # (B, T, 4H)
        # Reorder (B, T, 4H) -> (T, B, 4H) with `bsz` small static copies so the
        # per-timestep slice below is a cheap contiguous leading-dim index.
        for b in range(bsz):
            gx_s[:, b:b + 1, :] = gx_btk[b][:, None, :]

        whh = whh_ref[...]                                               # bf16

        # ---- Phase 2: serial recurrence; only h @ W_hh + gate math per step.
        def step(t, carry):
            h, c = carry
            gates = gx_s[t] + jnp.dot(h.astype(bf16), whh,
                                      preferred_element_type=jnp.float32)
            i = sigmoid(gates[:, 0:h_pad])
            f = sigmoid(gates[:, h_pad:2 * h_pad])
            g = jnp.tanh(gates[:, 2 * h_pad:3 * h_pad])
            o = sigmoid(gates[:, 3 * h_pad:4 * h_pad])
            c_new = f * c + i * g
            h_new = o * jnp.tanh(c_new)
            out_ref[t] = h_new        # keep f32 output to match nn.LSTM exactly
            return (h_new, c_new)

        def run(n_steps):
            h, c = jax.lax.fori_loop(0, n_steps, step, (h_s[...], c_s[...]),
                                     unroll=max(1, min(unroll, n_steps)))
            h_s[...] = h
            c_s[...] = c

        if n_chunks == 1:
            run(tail_len)
        elif tail_len == t_blk:
            run(t_blk)
        else:
            # Full chunks run unmasked; only the statically-sized ragged tail
            # uses a shorter loop -- no per-step masking on the hot path.
            @pl.when(chunk < n_chunks - 1)
            def _():
                run(t_blk)

            @pl.when(chunk == n_chunks - 1)
            def _():
                run(tail_len)

        # Keep c_n current every chunk (cheap VMEM store); also guarantees the
        # constant-index output block is never written back uninitialized.
        cn_ref[...] = c_s[...]

    return kernel


def encoder_lstm_forward(x_btf, w_ih, w_hh, b_ih, b_hh, *, t_blk=32, unroll=8):
    """x_btf: (batch, seq, input_size). Weights in PyTorch layout:
       w_ih (4H, I), w_hh (4H, H), b_ih (4H,), b_hh (4H,)."""
    B, S, I = x_btf.shape
    H = w_hh.shape[1]
    f32, bf16 = jnp.float32, jnp.bfloat16

    H_pad = _round_up(H, 128)
    # T_BLK is a multiple of 8 so in-kernel reshapes stay tile-aligned.
    T_BLK = min(_round_up(max(t_blk, 1), 8), _round_up(S, 8))
    n_chunks = pl.cdiv(S, T_BLK)
    S_pad = n_chunks * T_BLK
    tail_len = S - (n_chunks - 1) * T_BLK

    # Pack PyTorch weights (4H, in) -> (in, 4*H_pad): each gate's H columns in
    # its own 128-aligned H_pad slab (order i,f,g,o).  Zero padding keeps the
    # padded hidden columns exactly zero through the recurrence.  bf16 operands
    # for the MXU (halves weight VMEM/DMA, ~2x MXU throughput on v6e/v7x).
    def pack(w, in_dim):
        w4 = w.astype(f32).reshape(4, H, in_dim)
        w4p = jnp.zeros((4, H_pad, in_dim), f32).at[:, :H, :].set(w4)
        return jnp.transpose(w4p, (2, 0, 1)).reshape(in_dim, 4 * H_pad)

    wih_t = pack(w_ih, I).astype(bf16)                                   # (I, 4*H_pad)
    whh_t = (jnp.zeros((H_pad, 4 * H_pad), f32)
             .at[:H].set(pack(w_hh, H))).astype(bf16)                    # (H_pad, 4*H_pad)
    b4 = (b_ih + b_hh).astype(f32).reshape(4, H)
    bias = jnp.zeros((4, H_pad), f32).at[:, :H].set(b4).reshape(1, 4 * H_pad)

    # x is consumed directly -- no HBM transpose/pad pass before the kernel.
    x_in = x_btf.astype(f32)

    # Generation-aware VMEM cap: ~48 MiB on v7x (64 MiB phys), ~96 MiB on v5e/v6e.
    try:
        vmem_cap = pltpu.get_tpu_info().vmem_capacity_bytes
    except Exception:
        vmem_cap = 64 << 20

    def tile_bytes(shape, itemsize):
        s = list(shape)
        s[-1] = _round_up(s[-1], 128)
        if len(s) >= 2:
            s[-2] = _round_up(s[-2], 16)
        return itemsize * math.prod(s)

    kernel = _make_lstm_kernel(T_BLK, tail_len, n_chunks, H_pad, unroll)

    def call(single_buffer_weights):
        w_mode = pl.Buffered(1) if single_buffer_weights else None
        w_buf = 1 if single_buffer_weights else 2
        vmem_need = (
            2 * tile_bytes((B, T_BLK, I), 4)                  # x blocks (double-buffered)
            + 2 * tile_bytes((T_BLK, B, H_pad), 4)            # out blocks
            + 2 * tile_bytes((B, H_pad), 4)                   # c_n block
            + w_buf * (tile_bytes((I, 4 * H_pad), 2)          # weights / bias
                       + tile_bytes((H_pad, 4 * H_pad), 2)
                       + tile_bytes((1, 4 * H_pad), 4))
            + tile_bytes((T_BLK, B, 4 * H_pad), 4)            # gx scratch
            + 2 * tile_bytes((B, H_pad), 4)                   # h/c scratch
            + tile_bytes((B * T_BLK, 4 * H_pad), 4)           # phase-1 temporaries
        )
        vmem_limit = int(min(max(int(1.5 * vmem_need) + (4 << 20), 32 << 20),
                             int(0.75 * vmem_cap)))
        return pl.pallas_call(
            kernel,
            out_shape=(
                jax.ShapeDtypeStruct((S_pad, B, H_pad), f32),
                jax.ShapeDtypeStruct((B, H_pad), f32),
            ),
            grid_spec=pltpu.PrefetchScalarGridSpec(
                num_scalar_prefetch=0,
                grid=(n_chunks,),
                in_specs=[
                    pl.BlockSpec((B, T_BLK, I), lambda c: (0, c, 0)),
                    pl.BlockSpec((I, 4 * H_pad), lambda c: (0, 0),
                                 pipeline_mode=w_mode),
                    pl.BlockSpec((H_pad, 4 * H_pad), lambda c: (0, 0),
                                 pipeline_mode=w_mode),
                    pl.BlockSpec((1, 4 * H_pad), lambda c: (0, 0),
                                 pipeline_mode=w_mode),
                ],
                out_specs=[
                    pl.BlockSpec((T_BLK, B, H_pad), lambda c: (c, 0, 0)),
                    pl.BlockSpec((B, H_pad), lambda c: (0, 0)),
                ],
                scratch_shapes=[
                    pltpu.VMEM((T_BLK, B, 4 * H_pad), f32),   # chunk gate pre-acts
                    pltpu.VMEM((B, H_pad), f32),              # h state
                    pltpu.VMEM((B, H_pad), f32),              # c state
                ],
            ),
            compiler_params=pltpu.CompilerParams(
                dimension_semantics=("arbitrary",),           # serial time recurrence
                vmem_limit_bytes=vmem_limit,
            ),
        )(x_in, wih_t, whh_t, bias)

    try:
        out_pad, cn_pad = call(single_buffer_weights=True)
    except Exception:
        # pl.Buffered(1) not accepted on this jax version -> default buffering.
        out_pad, cn_pad = call(single_buffer_weights=False)

    # Strip padding; match nn.LSTM return: output (S, B, H), (h_n, c_n) (1, B, H).
    out = out_pad[:S, :, :H]
    h_n = out[S - 1][None]
    c_n = cn_pad[:, :H][None]
    return out, (h_n, c_n)


def _reference_lstm(x_btf, w_ih, w_hh, b_ih, b_hh, matmul_dtype=jnp.float32):
    """Pure-JAX reference (PyTorch gate order i,f,g,o); matmul operands may be
    cast to `matmul_dtype` (f32 accumulation) to mirror the kernel's bf16 MXU path."""
    B, S, I = x_btf.shape
    H = w_hh.shape[1]
    x_tbf = jnp.transpose(x_btf, (1, 0, 2))
    wih_t = w_ih.T.astype(matmul_dtype)
    whh_t = w_hh.T.astype(matmul_dtype)
    b = (b_ih + b_hh).astype(jnp.float32)

    def step(carry, x_t):
        h, c = carry
        gates = (jnp.dot(x_t.astype(matmul_dtype), wih_t,
                         preferred_element_type=jnp.float32)
                 + jnp.dot(h.astype(matmul_dtype), whh_t,
                           preferred_element_type=jnp.float32) + b)
        i = jax.nn.sigmoid(gates[:, 0:H])
        f = jax.nn.sigmoid(gates[:, H:2 * H])
        g = jnp.tanh(gates[:, 2 * H:3 * H])
        o = jax.nn.sigmoid(gates[:, 3 * H:4 * H])
        c = f * c + i * g
        h = o * jnp.tanh(c)
        return (h, c), h

    h0 = jnp.zeros((B, H), jnp.float32)
    c0 = jnp.zeros((B, H), jnp.float32)
    (h_n, c_n), out = jax.lax.scan(step, (h0, c0), x_tbf)
    return out, (h_n[None], c_n[None])


if __name__ == "__main__":
    # Small shapes consistent with the module: batch=2, seq=8, input=16, hidden=32
    B, S, I, H = 2, 8, 16, 32

    key = jax.random.PRNGKey(0)
    kx, k1, k2, k3, k4 = jax.random.split(key, 5)

    # Deterministic parameter init (PyTorch-style uniform(-1/sqrt(H), 1/sqrt(H)))
    scale = 1.0 / jnp.sqrt(jnp.float32(H))
    w_ih = jax.random.uniform(k1, (4 * H, I), jnp.float32, -scale, scale)
    w_hh = jax.random.uniform(k2, (4 * H, H), jnp.float32, -scale, scale)
    b_ih = jax.random.uniform(k3, (4 * H,), jnp.float32, -scale, scale)
    b_hh = jax.random.uniform(k4, (4 * H,), jnp.float32, -scale, scale)

    x = jax.random.normal(kx, (B, S, I), jnp.float32)

    out, (h_n, c_n) = encoder_lstm_forward(x, w_ih, w_hh, b_ih, b_hh)
    jax.block_until_ready((out, h_n, c_n))

    assert out.shape == (S, B, H) and h_n.shape == (1, B, H) and c_n.shape == (1, B, H)

    # Apples-to-apples check: reference with identical bf16 matmul operands.
    rb_out, (rb_h, rb_c) = _reference_lstm(x, w_ih, w_hh, b_ih, b_hh,
                                           matmul_dtype=jnp.bfloat16)
    assert jnp.allclose(out, rb_out, atol=1e-3, rtol=1e-3), "output mismatch (bf16 ref)"
    assert jnp.allclose(h_n, rb_h, atol=1e-3, rtol=1e-3), "h_n mismatch (bf16 ref)"
    assert jnp.allclose(c_n, rb_c, atol=1e-3, rtol=1e-3), "c_n mismatch (bf16 ref)"

    # Sanity check against the full-f32 reference (bf16 operand rounding only).
    rf_out, (rf_h, rf_c) = _reference_lstm(x, w_ih, w_hh, b_ih, b_hh,
                                           matmul_dtype=jnp.float32)
    assert jnp.allclose(out, rf_out, atol=5e-2), "output mismatch (f32 ref)"
    assert jnp.allclose(c_n, rf_c, atol=5e-2), "c_n mismatch (f32 ref)"

    print("KERNEL_OK")
</pallas_src>

<mosaic_0001>
module attributes {stable_mosaic.version = 11 : i64} {
  func.func @kernel(%arg0: i32, %arg1: memref<2x8x16xf32, #tpu.memory_space<vmem>>, %arg2: memref<16x512xbf16, #tpu.memory_space<vmem>>, %arg3: memref<128x512xbf16, #tpu.memory_space<vmem>>, %arg4: memref<1x512xf32, #tpu.memory_space<vmem>>, %arg5: memref<8x2x128xf32, #tpu.memory_space<vmem>>, %arg6: memref<2x128xf32, #tpu.memory_space<vmem>>, %arg7: memref<8x2x512xf32, #tpu.memory_space<vmem>>, %arg8: memref<2x128xf32, #tpu.memory_space<vmem>>, %arg9: memref<2x128xf32, #tpu.memory_space<vmem>>) attributes {dimension_semantics = [#tpu.dimension_semantics<arbitrary>], iteration_bounds = array<i64: 1>, scalar_prefetch = 0 : i64, scratch_operands = 3 : i64, tpu.core_type = #tpu.core_type<tc>, window_params = [{transform_indices = @transform_0, window_bounds = array<i64: 2, 8, 16>}, {pipeline_mode = #tpu.pipeline_mode<synchronous>, transform_indices = @transform_1, window_bounds = array<i64: 16, 512>}, {pipeline_mode = #tpu.pipeline_mode<synchronous>, transform_indices = @transform_2, window_bounds = array<i64: 128, 512>}, {pipeline_mode = #tpu.pipeline_mode<synchronous>, transform_indices = @transform_3, window_bounds = array<i64: 1, 512>}, {transform_indices = @transform_4, window_bounds = array<i64: 8, 2, 128>}, {pipeline_mode = #tpu.pipeline_mode<synchronous>, transform_indices = @transform_5, window_bounds = array<i64: 2, 128>}]} {
    %c0_i32 = arith.constant 0 : i32
    %0 = arith.cmpi eq, %arg0, %c0_i32 : i32
    %1 = arith.extui %0 : i1 to i32
    %c0_i32_0 = arith.constant 0 : i32
    %2 = arith.cmpi ne, %1, %c0_i32_0 : i32
    scf.if %2 {
      %cst_139 = arith.constant 0.000000e+00 : f32
      %355 = vector.broadcast %cst_139 : f32 to vector<2x128xf32>
      %c0_140 = arith.constant 0 : index
      %c0_141 = arith.constant 0 : index
      %356 = vector.load %arg8[%c0_140, %c0_141] : memref<2x128xf32, #tpu.memory_space<vmem>>, vector<2x128xf32>
      tpu.vector_store %arg8[%c0_140, %c0_141], %355 {strides = array<i32>} : memref<2x128xf32, #tpu.memory_space<vmem>>, vector<2x128xf32>,
      %cst_142 = arith.constant 0.000000e+00 : f32
      %357 = vector.broadcast %cst_142 : f32 to vector<2x128xf32>
      %c0_143 = arith.constant 0 : index
      %c0_144 = arith.constant 0 : index
      %358 = vector.load %arg9[%c0_143, %c0_144] : memref<2x128xf32, #tpu.memory_space<vmem>>, vector<2x128xf32>
      tpu.vector_store %arg9[%c0_143, %c0_144], %357 {strides = array<i32>} : memref<2x128xf32, #tpu.memory_space<vmem>>, vector<2x128xf32>,
    } else {
    }
    %c0 = arith.constant 0 : index
    %c0_1 = arith.constant 0 : index
    %c0_2 = arith.constant 0 : index
    %3 = vector.load %arg1[%c0, %c0_1, %c0_2] : memref<2x8x16xf32, #tpu.memory_space<vmem>>, vector<2x8x16xf32>
    %4 = vector.shape_cast %3 : vector<2x8x16xf32> to vector<16x16xf32>
    %5 = arith.truncf %4 : vector<16x16xf32> to vector<16x16xbf16>
    %c0_3 = arith.constant 0 : index
    %c0_4 = arith.constant 0 : index
    %6 = vector.load %arg2[%c0_3, %c0_4] : memref<16x512xbf16, #tpu.memory_space<vmem>>, vector<16x512xbf16>
    %cst = arith.constant dense<0.000000e+00> : vector<16x512xf32>
    %7 = tpu.matmul %5, %6, %cst {dimension_numbers = #tpu.dot_dimension_numbers<[1], [0], [0], [1], [0, 0, 1, 1], [], []>} : vector<16x16xbf16>, vector<16x512xbf16>, vector<16x512xf32> -> vector<16x512xf32>
    %c0_5 = arith.constant 0 : index
    %c0_6 = arith.constant 0 : index
    %8 = vector.load %arg4[%c0_5, %c0_6] : memref<1x512xf32, #tpu.memory_space<vmem>>, vector<1x512xf32>
    %9 = vector.broadcast %8 : vector<1x512xf32> to vector<16x512xf32>
    %10 = arith.addf %7, %9 : vector<16x512xf32>
    %11 = vector.shape_cast %10 : vector<16x512xf32> to vector<2x8x512xf32>
    %12 = vector.extract_strided_slice %11 {offsets = [0, 0, 0], sizes = [1, 8, 512], strides = [1, 1, 1]} : vector<2x8x512xf32> to vector<1x8x512xf32>
    %13 = vector.shape_cast %12 : vector<1x8x512xf32> to vector<8x512xf32>
    %14 = vector.shape_cast %13 : vector<8x512xf32> to vector<8x1x512xf32>
    %c0_7 = arith.constant 0 : index
    %c0_8 = arith.constant 0 : index
    %c0_9 = arith.constant 0 : index
    %15 = vector.load %arg7[%c0_7, %c0_8, %c0_9] : memref<8x2x512xf32, #tpu.memory_space<vmem>>, vector<8x1x512xf32>
    tpu.vector_store %arg7[%c0_7, %c0_8, %c0_9], %14 {strides = array<i32>} : memref<8x2x512xf32, #tpu.memory_space<vmem>>, vector<8x1x512xf32>,
    %16 = vector.extract_strided_slice %11 {offsets = [1, 0, 0], sizes = [1, 8, 512], strides = [1, 1, 1]} : vector<2x8x512xf32> to vector<1x8x512xf32>
    %17 = vector.shape_cast %16 : vector<1x8x512xf32> to vector<8x512xf32>
    %18 = vector.shape_cast %17 : vector<8x512xf32> to vector<8x1x512xf32>
    %c0_10 = arith.constant 0 : index
    %c1 = arith.constant 1 : index
    %c0_11 = arith.constant 0 : index
    %19 = vector.load %arg7[%c0_10, %c1, %c0_11] : memref<8x2x512xf32, #tpu.memory_space<vmem>>, vector<8x1x512xf32>
    tpu.vector_store %arg7[%c0_10, %c1, %c0_11], %18 {strides = array<i32>} : memref<8x2x512xf32, #tpu.memory_space<vmem>>, vector<8x1x512xf32>,
    %c0_12 = arith.constant 0 : index
    %c0_13 = arith.constant 0 : index
    %20 = vector.load %arg3[%c0_12, %c0_13] : memref<128x512xbf16, #tpu.memory_space<vmem>>, vector<128x512xbf16>
    %c0_14 = arith.constant 0 : index
    %c0_15 = arith.constant 0 : index
    %21 = vector.load %arg8[%c0_14, %c0_15] : memref<2x128xf32, #tpu.memory_space<vmem>>, vector<2x128xf32>
    %c0_16 = arith.constant 0 : index
    %c0_17 = arith.constant 0 : index
    %22 = vector.load %arg9[%c0_16, %c0_17] : memref<2x128xf32, #tpu.memory_space<vmem>>, vector<2x128xf32>
    %c0_i32_18 = arith.constant 0 : i32
    %23 = arith.index_cast %c0_i32_18 : i32 to index
    %c0_19 = arith.constant 0 : index
    %c0_20 = arith.constant 0 : index
    %24 = vector.load %arg7[%23, %c0_19, %c0_20] : memref<8x2x512xf32, #tpu.memory_space<vmem>>, vector<1x2x512xf32>
    %25 = vector.shape_cast %24 : vector<1x2x512xf32> to vector<2x512xf32>
    %26 = arith.truncf %21 : vector<2x128xf32> to vector<2x128xbf16>
    %cst_21 = arith.constant dense<0.000000e+00> : vector<2x512xf32>
    %27 = tpu.matmul %26, %20, %cst_21 {dimension_numbers = #tpu.dot_dimension_numbers<[1], [0], [0], [1], [0, 0, 1, 1], [], []>} : vector<2x128xbf16>, vector<128x512xbf16>, vector<2x512xf32> -> vector<2x512xf32>
    %28 = arith.addf %25, %27 : vector<2x512xf32>
    %29 = vector.extract_strided_slice %28 {offsets = [0, 0], sizes = [2, 128], strides = [1, 1]} : vector<2x512xf32> to vector<2x128xf32>
    %cst_22 = arith.constant 5.000000e-01 : f32
    %30 = vector.broadcast %cst_22 : f32 to vector<2x128xf32>
    %31 = arith.mulf %30, %29 : vector<2x128xf32>
    %32 = math.tanh %31 : vector<2x128xf32>
    %cst_23 = arith.constant 5.000000e-01 : f32
    %33 = vector.broadcast %cst_23 : f32 to vector<2x128xf32>
    %34 = arith.mulf %33, %32 : vector<2x128xf32>
    %cst_24 = arith.constant 5.000000e-01 : f32
    %35 = vector.broadcast %cst_24 : f32 to vector<2x128xf32>
    %36 = arith.addf %34, %35 : vector<2x128xf32>
    %37 = vector.extract_strided_slice %28 {offsets = [0, 128], sizes = [2, 128], strides = [1, 1]} : vector<2x512xf32> to vector<2x128xf32>
    %cst_25 = arith.constant 5.000000e-01 : f32
    %38 = vector.broadcast %cst_25 : f32 to vector<2x128xf32>
    %39 = arith.mulf %38, %37 : vector<2x128xf32>
    %40 = math.tanh %39 : vector<2x128xf32>
    %cst_26 = arith.constant 5.000000e-01 : f32
    %41 = vector.broadcast %cst_26 : f32 to vector<2x128xf32>
    %42 = arith.mulf %41, %40 : vector<2x128xf32>
    %cst_27 = arith.constant 5.000000e-01 : f32
    %43 = vector.broadcast %cst_27 : f32 to vector<2x128xf32>
    %44 = arith.addf %42, %43 : vector<2x128xf32>
    %45 = vector.extract_strided_slice %28 {offsets = [0, 256], sizes = [2, 128], strides = [1, 1]} : vector<2x512xf32> to vector<2x128xf32>
    %46 = math.tanh %45 : vector<2x128xf32>
    %47 = vector.extract_strided_slice %28 {offsets = [0, 384], sizes = [2, 128], strides = [1, 1]} : vector<2x512xf32> to vector<2x128xf32>
    %cst_28 = arith.constant 5.000000e-01 : f32
    %48 = vector.broadcast %cst_28 : f32 to vector<2x128xf32>
    %49 = arith.mulf %48, %47 : vector<2x128xf32>
    %50 = math.tanh %49 : vector<2x128xf32>
    %cst_29 = arith.constant 5.000000e-01 : f32
    %51 = vector.broadcast %cst_29 : f32 to vector<2x128xf32>
    %52 = arith.mulf %51, %50 : vector<2x128xf32>
    %cst_30 = arith.constant 5.000000e-01 : f32
    %53 = vector.broadcast %cst_30 : f32 to vector<2x128xf32>
    %54 = arith.addf %52, %53 : vector<2x128xf32>
    %55 = arith.mulf %44, %22 : vector<2x128xf32>
    %56 = arith.mulf %36, %46 : vector<2x128xf32>
    %57 = arith.addf %55, %56 : vector<2x128xf32>
    %58 = math.tanh %57 : vector<2x128xf32>
    %59 = arith.mulf %54, %58 : vector<2x128xf32>
    %60 = arith.index_cast %c0_i32_18 : i32 to index
    %c0_31 = arith.constant 0 : index
    %c0_32 = arith.constant 0 : index
    %61 = vector.load %arg5[%60, %c0_31, %c0_32] : memref<8x2x128xf32, #tpu.memory_space<vmem>>, vector<1x2x128xf32>
    %62 = vector.shape_cast %61 : vector<1x2x128xf32> to vector<2x128xf32>
    %63 = vector.shape_cast %59 : vector<2x128xf32> to vector<1x2x128xf32>
    tpu.vector_store %arg5[%60, %c0_31, %c0_32], %63 {strides = array<i32>} : memref<8x2x128xf32, #tpu.memory_space<vmem>>, vector<1x2x128xf32>,
    %c1_i32 = arith.constant 1 : i32
    %64 = arith.index_cast %c1_i32 : i32 to index
    %c0_33 = arith.constant 0 : index
    %c0_34 = arith.constant 0 : index
    %65 = vector.load %arg7[%64, %c0_33, %c0_34] : memref<8x2x512xf32, #tpu.memory_space<vmem>>, vector<1x2x512xf32>
    %66 = vector.shape_cast %65 : vector<1x2x512xf32> to vector<2x512xf32>
    %67 = arith.truncf %59 : vector<2x128xf32> to vector<2x128xbf16>
    %cst_35 = arith.constant dense<0.000000e+00> : vector<2x512xf32>
    %68 = tpu.matmul %67, %20, %cst_35 {dimension_numbers = #tpu.dot_dimension_numbers<[1], [0], [0], [1], [0, 0, 1, 1], [], []>} : vector<2x128xbf16>, vector<128x512xbf16>, vector<2x512xf32> -> vector<2x512xf32>
    %69 = arith.addf %66, %68 : vector<2x512xf32>
    %70 = vector.extract_strided_slice %69 {offsets = [0, 0], sizes = [2, 128], strides = [1, 1]} : vector<2x512xf32> to vector<2x128xf32>
    %cst_36 = arith.constant 5.000000e-01 : f32
    %71 = vector.broadcast %cst_36 : f32 to vector<2x128xf32>
    %72 = arith.mulf %71, %70 : vector<2x128xf32>
    %73 = math.tanh %72 : vector<2x128xf32>
    %cst_37 = arith.constant 5.000000e-01 : f32
    %74 = vector.broadcast %cst_37 : f32 to vector<2x128xf32>
    %75 = arith.mulf %74, %73 : vector<2x128xf32>
    %cst_38 = arith.constant 5.000000e-01 : f32
    %76 = vector.broadcast %cst_38 : f32 to vector<2x128xf32>
    %77 = arith.addf %75, %76 : vector<2x128xf32>
    %78 = vector.extract_strided_slice %69 {offsets = [0, 128], sizes = [2, 128], strides = [1, 1]} : vector<2x512xf32> to vector<2x128xf32>
    %cst_39 = arith.constant 5.000000e-01 : f32
    %79 = vector.broadcast %cst_39 : f32 to vector<2x128xf32>
    %80 = arith.mulf %79, %78 : vector<2x128xf32>
    %81 = math.tanh %80 : vector<2x128xf32>
    %cst_40 = arith.constant 5.000000e-01 : f32
    %82 = vector.broadcast %cst_40 : f32 to vector<2x128xf32>
    %83 = arith.mulf %82, %81 : vector<2x128xf32>
    %cst_41 = arith.constant 5.000000e-01 : f32
    %84 = vector.broadcast %cst_41 : f32 to vector<2x128xf32>
    %85 = arith.addf %83, %84 : vector<2x128xf32>
    %86 = vector.extract_strided_slice %69 {offsets = [0, 256], sizes = [2, 128], strides = [1, 1]} : vector<2x512xf32> to vector<2x128xf32>
    %87 = math.tanh %86 : vector<2x128xf32>
    %88 = vector.extract_strided_slice %69 {offsets = [0, 384], sizes = [2, 128], strides = [1, 1]} : vector<2x512xf32> to vector<2x128xf32>
    %cst_42 = arith.constant 5.000000e-01 : f32
    %89 = vector.broadcast %cst_42 : f32 to vector<2x128xf32>
    %90 = arith.mulf %89, %88 : vector<2x128xf32>
    %91 = math.tanh %90 : vector<2x128xf32>
    %cst_43 = arith.constant 5.000000e-01 : f32
    %92 = vector.broadcast %cst_43 : f32 to vector<2x128xf32>
    %93 = arith.mulf %92, %91 : vector<2x128xf32>
    %cst_44 = arith.constant 5.000000e-01 : f32
    %94 = vector.broadcast %cst_44 : f32 to vector<2x128xf32>
    %95 = arith.addf %93, %94 : vector<2x128xf32>
    %96 = arith.mulf %85, %57 : vector<2x128xf32>
    %97 = arith.mulf %77, %87 : vector<2x128xf32>
    %98 = arith.addf %96, %97 : vector<2x128xf32>
    %99 = math.tanh %98 : vector<2x128xf32>
    %100 = arith.mulf %95, %99 : vector<2x128xf32>
    %101 = arith.index_cast %c1_i32 : i32 to index
    %c0_45 = arith.constant 0 : index
    %c0_46 = arith.constant 0 : index
    %102 = vector.load %arg5[%101, %c0_45, %c0_46] : memref<8x2x128xf32, #tpu.memory_space<vmem>>, vector<1x2x128xf32>
    %103 = vector.shape_cast %102 : vector<1x2x128xf32> to vector<2x128xf32>
    %104 = vector.shape_cast %100 : vector<2x128xf32> to vector<1x2x128xf32>
    tpu.vector_store %arg5[%101, %c0_45, %c0_46], %104 {strides = array<i32>} : memref<8x2x128xf32, #tpu.memory_space<vmem>>, vector<1x2x128xf32>,
    %c2_i32 = arith.constant 2 : i32
    %105 = arith.index_cast %c2_i32 : i32 to index
    %c0_47 = arith.constant 0 : index
    %c0_48 = arith.constant 0 : index
    %106 = vector.load %arg7[%105, %c0_47, %c0_48] : memref<8x2x512xf32, #tpu.memory_space<vmem>>, vector<1x2x512xf32>
    %107 = vector.shape_cast %106 : vector<1x2x512xf32> to vector<2x512xf32>
    %108 = arith.truncf %100 : vector<2x128xf32> to vector<2x128xbf16>
    %cst_49 = arith.constant dense<0.000000e+00> : vector<2x512xf32>
    %109 = tpu.matmul %108, %20, %cst_49 {dimension_numbers = #tpu.dot_dimension_numbers<[1], [0], [0], [1], [0, 0, 1, 1], [], []>} : vector<2x128xbf16>, vector<128x512xbf16>, vector<2x512xf32> -> vector<2x512xf32>
    %110 = arith.addf %107, %109 : vector<2x512xf32>
    %111 = vector.extract_strided_slice %110 {offsets = [0, 0], sizes = [2, 128], strides = [1, 1]} : vector<2x512xf32> to vector<2x128xf32>
    %cst_50 = arith.constant 5.000000e-01 : f32
    %112 = vector.broadcast %cst_50 : f32 to vector<2x128xf32>
    %113 = arith.mulf %112, %111 : vector<2x128xf32>
    %114 = math.tanh %113 : vector<2x128xf32>
    %cst_51 = arith.constant 5.000000e-01 : f32
    %115 = vector.broadcast %cst_51 : f32 to vector<2x128xf32>
    %116 = arith.mulf %115, %114 : vector<2x128xf32>
    %cst_52 = arith.constant 5.000000e-01 : f32
    %117 = vector.broadcast %cst_52 : f32 to vector<2x128xf32>
    %118 = arith.addf %116, %117 : vector<2x128xf32>
    %119 = vector.extract_strided_slice %110 {offsets = [0, 128], sizes = [2, 128], strides = [1, 1]} : vector<2x512xf32> to vector<2x128xf32>
    %cst_53 = arith.constant 5.000000e-01 : f32
    %120 = vector.broadcast %cst_53 : f32 to vector<2x128xf32>
    %121 = arith.mulf %120, %119 : vector<2x128xf32>
    %122 = math.tanh %121 : vector<2x128xf32>
    %cst_54 = arith.constant 5.000000e-01 : f32
    %123 = vector.broadcast %cst_54 : f32 to vector<2x128xf32>
    %124 = arith.mulf %123, %122 : vector<2x128xf32>
    %cst_55 = arith.constant 5.000000e-01 : f32
    %125 = vector.broadcast %cst_55 : f32 to vector<2x128xf32>
    %126 = arith.addf %124, %125 : vector<2x128xf32>
    %127 = vector.extract_strided_slice %110 {offsets = [0, 256], sizes = [2, 128], strides = [1, 1]} : vector<2x512xf32> to vector<2x128xf32>
    %128 = math.tanh %127 : vector<2x128xf32>
    %129 = vector.extract_strided_slice %110 {offsets = [0, 384], sizes = [2, 128], strides = [1, 1]} : vector<2x512xf32> to vector<2x128xf32>
    %cst_56 = arith.constant 5.000000e-01 : f32
    %130 = vector.broadcast %cst_56 : f32 to vector<2x128xf32>
    %131 = arith.mulf %130, %129 : vector<2x128xf32>
    %132 = math.tanh %131 : vector<2x128xf32>
    %cst_57 = arith.constant 5.000000e-01 : f32
    %133 = vector.broadcast %cst_57 : f32 to vector<2x128xf32>
    %134 = arith.mulf %133, %132 : vector<2x128xf32>
    %cst_58 = arith.constant 5.000000e-01 : f32
    %135 = vector.broadcast %cst_58 : f32 to vector<2x128xf32>
    %136 = arith.addf %134, %135 : vector<2x128xf32>
    %137 = arith.mulf %126, %98 : vector<2x128xf32>
    %138 = arith.mulf %118, %128 : vector<2x128xf32>
    %139 = arith.addf %137, %138 : vector<2x128xf32>
    %140 = math.tanh %139 : vector<2x128xf32>
    %141 = arith.mulf %136, %140 : vector<2x128xf32>
    %142 = arith.index_cast %c2_i32 : i32 to index
    %c0_59 = arith.constant 0 : index
    %c0_60 = arith.constant 0 : index
    %143 = vector.load %arg5[%142, %c0_59, %c0_60] : memref<8x2x128xf32, #tpu.memory_space<vmem>>, vector<1x2x128xf32>
    %144 = vector.shape_cast %143 : vector<1x2x128xf32> to vector<2x128xf32>
    %145 = vector.shape_cast %141 : vector<2x128xf32> to vector<1x2x128xf32>
    tpu.vector_store %arg5[%142, %c0_59, %c0_60], %145 {strides = array<i32>} : memref<8x2x128xf32, #tpu.memory_space<vmem>>, vector<1x2x128xf32>,
    %c3_i32 = arith.constant 3 : i32
    %146 = arith.index_cast %c3_i32 : i32 to index
    %c0_61 = arith.constant 0 : index
    %c0_62 = arith.constant 0 : index
    %147 = vector.load %arg7[%146, %c0_61, %c0_62] : memref<8x2x512xf32, #tpu.memory_space<vmem>>, vector<1x2x512xf32>
    %148 = vector.shape_cast %147 : vector<1x2x512xf32> to vector<2x512xf32>
    %149 = arith.truncf %141 : vector<2x128xf32> to vector<2x128xbf16>
    %cst_63 = arith.constant dense<0.000000e+00> : vector<2x512xf32>
    %150 = tpu.matmul %149, %20, %cst_63 {dimension_numbers = #tpu.dot_dimension_numbers<[1], [0], [0], [1], [0, 0, 1, 1], [], []>} : vector<2x128xbf16>, vector<128x512xbf16>, vector<2x512xf32> -> vector<2x512xf32>
    %151 = arith.addf %148, %150 : vector<2x512xf32>
    %152 = vector.extract_strided_slice %151 {offsets = [0, 0], sizes = [2, 128], strides = [1, 1]} : vector<2x512xf32> to vector<2x128xf32>
    %cst_64 = arith.constant 5.000000e-01 : f32
    %153 = vector.broadcast %cst_64 : f32 to vector<2x128xf32>
    %154 = arith.mulf %153, %152 : vector<2x128xf32>
    %155 = math.tanh %154 : vector<2x128xf32>
    %cst_65 = arith.constant 5.000000e-01 : f32
    %156 = vector.broadcast %cst_65 : f32 to vector<2x128xf32>
    %157 = arith.mulf %156, %155 : vector<2x128xf32>
    %cst_66 = arith.constant 5.000000e-01 : f32
    %158 = vector.broadcast %cst_66 : f32 to vector<2x128xf32>
    %159 = arith.addf %157, %158 : vector<2x128xf32>
    %160 = vector.extract_strided_slice %151 {offsets = [0, 128], sizes = [2, 128], strides = [1, 1]} : vector<2x512xf32> to vector<2x128xf32>
    %cst_67 = arith.constant 5.000000e-01 : f32
    %161 = vector.broadcast %cst_67 : f32 to vector<2x128xf32>
    %162 = arith.mulf %161, %160 : vector<2x128xf32>
    %163 = math.tanh %162 : vector<2x128xf32>
    %cst_68 = arith.constant 5.000000e-01 : f32
    %164 = vector.broadcast %cst_68 : f32 to vector<2x128xf32>
    %165 = arith.mulf %164, %163 : vector<2x128xf32>
    %cst_69 = arith.constant 5.000000e-01 : f32
    %166 = vector.broadcast %cst_69 : f32 to vector<2x128xf32>
    %167 = arith.addf %165, %166 : vector<2x128xf32>
    %168 = vector.extract_strided_slice %151 {offsets = [0, 256], sizes = [2, 128], strides = [1, 1]} : vector<2x512xf32> to vector<2x128xf32>
    %169 = math.tanh %168 : vector<2x128xf32>
    %170 = vector.extract_strided_slice %151 {offsets = [0, 384], sizes = [2, 128], strides = [1, 1]} : vector<2x512xf32> to vector<2x128xf32>
    %cst_70 = arith.constant 5.000000e-01 : f32
    %171 = vector.broadcast %cst_70 : f32 to vector<2x128xf32>
    %172 = arith.mulf %171, %170 : vector<2x128xf32>
    %173 = math.tanh %172 : vector<2x128xf32>
    %cst_71 = arith.constant 5.000000e-01 : f32
    %174 = vector.broadcast %cst_71 : f32 to vector<2x128xf32>
    %175 = arith.mulf %174, %173 : vector<2x128xf32>
    %cst_72 = arith.constant 5.000000e-01 : f32
    %176 = vector.broadcast %cst_72 : f32 to vector<2x128xf32>
    %177 = arith.addf %175, %176 : vector<2x128xf32>
    %178 = arith.mulf %167, %139 : vector<2x128xf32>
    %179 = arith.mulf %159, %169 : vector<2x128xf32>
    %180 = arith.addf %178, %179 : vector<2x128xf32>
    %181 = math.tanh %180 : vector<2x128xf32>
    %182 = arith.mulf %177, %181 : vector<2x128xf32>
    %183 = arith.index_cast %c3_i32 : i32 to index
    %c0_73 = arith.constant 0 : index
    %c0_74 = arith.constant 0 : index
    %184 = vector.load %arg5[%183, %c0_73, %c0_74] : memref<8x2x128xf32, #tpu.memory_space<vmem>>, vector<1x2x128xf32>
    %185 = vector.shape_cast %184 : vector<1x2x128xf32> to vector<2x128xf32>
    %186 = vector.shape_cast %182 : vector<2x128xf32> to vector<1x2x128xf32>
    tpu.vector_store %arg5[%183, %c0_73, %c0_74], %186 {strides = array<i32>} : memref<8x2x128xf32, #tpu.memory_space<vmem>>, vector<1x2x128xf32>,
    %c4_i32 = arith.constant 4 : i32
    %187 = arith.index_cast %c4_i32 : i32 to index
    %c0_75 = arith.constant 0 : index
    %c0_76 = arith.constant 0 : index
    %188 = vector.load %arg7[%187, %c0_75, %c0_76] : memref<8x2x512xf32, #tpu.memory_space<vmem>>, vector<1x2x512xf32>
    %189 = vector.shape_cast %188 : vector<1x2x512xf32> to vector<2x512xf32>
    %190 = arith.truncf %182 : vector<2x128xf32> to vector<2x128xbf16>
    %cst_77 = arith.constant dense<0.000000e+00> : vector<2x512xf32>
    %191 = tpu.matmul %190, %20, %cst_77 {dimension_numbers = #tpu.dot_dimension_numbers<[1], [0], [0], [1], [0, 0, 1, 1], [], []>} : vector<2x128xbf16>, vector<128x512xbf16>, vector<2x512xf32> -> vector<2x512xf32>
    %192 = arith.addf %189, %191 : vector<2x512xf32>
    %193 = vector.extract_strided_slice %192 {offsets = [0, 0], sizes = [2, 128], strides = [1, 1]} : vector<2x512xf32> to vector<2x128xf32>
    %cst_78 = arith.constant 5.000000e-01 : f32
    %194 = vector.broadcast %cst_78 : f32 to vector<2x128xf32>
    %195 = arith.mulf %194, %193 : vector<2x128xf32>
    %196 = math.tanh %195 : vector<2x128xf32>
    %cst_79 = arith.constant 5.000000e-01 : f32
    %197 = vector.broadcast %cst_79 : f32 to vector<2x128xf32>
    %198 = arith.mulf %197, %196 : vector<2x128xf32>
    %cst_80 = arith.constant 5.000000e-01 : f32
    %199 = vector.broadcast %cst_80 : f32 to vector<2x128xf32>
    %200 = arith.addf %198, %199 : vector<2x128xf32>
    %201 = vector.extract_strided_slice %192 {offsets = [0, 128], sizes = [2, 128], strides = [1, 1]} : vector<2x512xf32> to vector<2x128xf32>
    %cst_81 = arith.constant 5.000000e-01 : f32
    %202 = vector.broadcast %cst_81 : f32 to vector<2x128xf32>
    %203 = arith.mulf %202, %201 : vector<2x128xf32>
    %204 = math.tanh %203 : vector<2x128xf32>
    %cst_82 = arith.constant 5.000000e-01 : f32
    %205 = vector.broadcast %cst_82 : f32 to vector<2x128xf32>
    %206 = arith.mulf %205, %204 : vector<2x128xf32>
    %cst_83 = arith.constant 5.000000e-01 : f32
    %207 = vector.broadcast %cst_83 : f32 to vector<2x128xf32>
    %208 = arith.addf %206, %207 : vector<2x128xf32>
    %209 = vector.extract_strided_slice %192 {offsets = [0, 256], sizes = [2, 128], strides = [1, 1]} : vector<2x512xf32> to vector<2x128xf32>
    %210 = math.tanh %209 : vector<2x128xf32>
    %211 = vector.extract_strided_slice %192 {offsets = [0, 384], sizes = [2, 128], strides = [1, 1]} : vector<2x512xf32> to vector<2x128xf32>
    %cst_84 = arith.constant 5.000000e-01 : f32
    %212 = vector.broadcast %cst_84 : f32 to vector<2x128xf32>
    %213 = arith.mulf %212, %211 : vector<2x128xf32>
    %214 = math.tanh %213 : vector<2x128xf32>
    %cst_85 = arith.constant 5.000000e-01 : f32
    %215 = vector.broadcast %cst_85 : f32 to vector<2x128xf32>
    %216 = arith.mulf %215, %214 : vector<2x128xf32>
    %cst_86 = arith.constant 5.000000e-01 : f32
    %217 = vector.broadcast %cst_86 : f32 to vector<2x128xf32>
    %218 = arith.addf %216, %217 : vector<2x128xf32>
    %219 = arith.mulf %208, %180 : vector<2x128xf32>
    %220 = arith.mulf %200, %210 : vector<2x128xf32>
    %221 = arith.addf %219, %220 : vector<2x128xf32>
    %222 = math.tanh %221 : vector<2x128xf32>
    %223 = arith.mulf %218, %222 : vector<2x128xf32>
    %224 = arith.index_cast %c4_i32 : i32 to index
    %c0_87 = arith.constant 0 : index
    %c0_88 = arith.constant 0 : index
    %225 = vector.load %arg5[%224, %c0_87, %c0_88] : memref<8x2x128xf32, #tpu.memory_space<vmem>>, vector<1x2x128xf32>
    %226 = vector.shape_cast %225 : vector<1x2x128xf32> to vector<2x128xf32>
    %227 = vector.shape_cast %223 : vector<2x128xf32> to vector<1x2x128xf32>
    tpu.vector_store %arg5[%224, %c0_87, %c0_88], %227 {strides = array<i32>} : memref<8x2x128xf32, #tpu.memory_space<vmem>>, vector<1x2x128xf32>,
    %c5_i32 = arith.constant 5 : i32
    %228 = arith.index_cast %c5_i32 : i32 to index
    %c0_89 = arith.constant 0 : index
    %c0_90 = arith.constant 0 : index
    %229 = vector.load %arg7[%228, %c0_89, %c0_90] : memref<8x2x512xf32, #tpu.memory_space<vmem>>, vector<1x2x512xf32>
    %230 = vector.shape_cast %229 : vector<1x2x512xf32> to vector<2x512xf32>
    %231 = arith.truncf %223 : vector<2x128xf32> to vector<2x128xbf16>
    %cst_91 = arith.constant dense<0.000000e+00> : vector<2x512xf32>
    %232 = tpu.matmul %231, %20, %cst_91 {dimension_numbers = #tpu.dot_dimension_numbers<[1], [0], [0], [1], [0, 0, 1, 1], [], []>} : vector<2x128xbf16>, vector<128x512xbf16>, vector<2x512xf32> -> vector<2x512xf32>
    %233 = arith.addf %230, %232 : vector<2x512xf32>
    %234 = vector.extract_strided_slice %233 {offsets = [0, 0], sizes = [2, 128], strides = [1, 1]} : vector<2x512xf32> to vector<2x128xf32>
    %cst_92 = arith.constant 5.000000e-01 : f32
    %235 = vector.broadcast %cst_92 : f32 to vector<2x128xf32>
    %236 = arith.mulf %235, %234 : vector<2x128xf32>
    %237 = math.tanh %236 : vector<2x128xf32>
    %cst_93 = arith.constant 5.000000e-01 : f32
    %238 = vector.broadcast %cst_93 : f32 to vector<2x128xf32>
    %239 = arith.mulf %238, %237 : vector<2x128xf32>
    %cst_94 = arith.constant 5.000000e-01 : f32
    %240 = vector.broadcast %cst_94 : f32 to vector<2x128xf32>
    %241 = arith.addf %239, %240 : vector<2x128xf32>
    %242 = vector.extract_strided_slice %233 {offsets = [0, 128], sizes = [2, 128], strides = [1, 1]} : vector<2x512xf32> to vector<2x128xf32>
    %cst_95 = arith.constant 5.000000e-01 : f32
    %243 = vector.broadcast %cst_95 : f32 to vector<2x128xf32>
    %244 = arith.mulf %243, %242 : vector<2x128xf32>
    %245 = math.tanh %244 : vector<2x128xf32>
    %cst_96 = arith.constant 5.000000e-01 : f32
    %246 = vector.broadcast %cst_96 : f32 to vector<2x128xf32>
    %247 = arith.mulf %246, %245 : vector<2x128xf32>
    %cst_97 = arith.constant 5.000000e-01 : f32
    %248 = vector.broadcast %cst_97 : f32 to vector<2x128xf32>
    %249 = arith.addf %247, %248 : vector<2x128xf32>
    %250 = vector.extract_strided_slice %233 {offsets = [0, 256], sizes = [2, 128], strides = [1, 1]} : vector<2x512xf32> to vector<2x128xf32>
    %251 = math.tanh %250 : vector<2x128xf32>
    %252 = vector.extract_strided_slice %233 {offsets = [0, 384], sizes = [2, 128], strides = [1, 1]} : vector<2x512xf32> to vector<2x128xf32>
    %cst_98 = arith.constant 5.000000e-01 : f32
    %253 = vector.broadcast %cst_98 : f32 to vector<2x128xf32>
    %254 = arith.mulf %253, %252 : vector<2x128xf32>
    %255 = math.tanh %254 : vector<2x128xf32>
    %cst_99 = arith.constant 5.000000e-01 : f32
    %256 = vector.broadcast %cst_99 : f32 to vector<2x128xf32>
    %257 = arith.mulf %256, %255 : vector<2x128xf32>
    %cst_100 = arith.constant 5.000000e-01 : f32
    %258 = vector.broadcast %cst_100 : f32 to vector<2x128xf32>
    %259 = arith.addf %257, %258 : vector<2x128xf32>
    %260 = arith.mulf %249, %221 : vector<2x128xf32>
    %261 = arith.mulf %241, %251 : vector<2x128xf32>
    %262 = arith.addf %260, %261 : vector<2x128xf32>
    %263 = math.tanh %262 : vector<2x128xf32>
    %264 = arith.mulf %259, %263 : vector<2x128xf32>
    %265 = arith.index_cast %c5_i32 : i32 to index
    %c0_101 = arith.constant 0 : index
    %c0_102 = arith.constant 0 : index
    %266 = vector.load %arg5[%265, %c0_101, %c0_102] : memref<8x2x128xf32, #tpu.memory_space<vmem>>, vector<1x2x128xf32>
    %267 = vector.shape_cast %266 : vector<1x2x128xf32> to vector<2x128xf32>
    %268 = vector.shape_cast %264 : vector<2x128xf32> to vector<1x2x128xf32>
    tpu.vector_store %arg5[%265, %c0_101, %c0_102], %268 {strides = array<i32>} : memref<8x2x128xf32, #tpu.memory_space<vmem>>, vector<1x2x128xf32>,
    %c6_i32 = arith.constant 6 : i32
    %269 = arith.index_cast %c6_i32 : i32 to index
    %c0_103 = arith.constant 0 : index
    %c0_104 = arith.constant 0 : index
    %270 = vector.load %arg7[%269, %c0_103, %c0_104] : memref<8x2x512xf32, #tpu.memory_space<vmem>>, vector<1x2x512xf32>
    %271 = vector.shape_cast %270 : vector<1x2x512xf32> to vector<2x512xf32>
    %272 = arith.truncf %264 : vector<2x128xf32> to vector<2x128xbf16>
    %cst_105 = arith.constant dense<0.000000e+00> : vector<2x512xf32>
    %273 = tpu.matmul %272, %20, %cst_105 {dimension_numbers = #tpu.dot_dimension_numbers<[1], [0], [0], [1], [0, 0, 1, 1], [], []>} : vector<2x128xbf16>, vector<128x512xbf16>, vector<2x512xf32> -> vector<2x512xf32>
    %274 = arith.addf %271, %273 : vector<2x512xf32>
    %275 = vector.extract_strided_slice %274 {offsets = [0, 0], sizes = [2, 128], strides = [1, 1]} : vector<2x512xf32> to vector<2x128xf32>
    %cst_106 = arith.constant 5.000000e-01 : f32
    %276 = vector.broadcast %cst_106 : f32 to vector<2x128xf32>
    %277 = arith.mulf %276, %275 : vector<2x128xf32>
    %278 = math.tanh %277 : vector<2x128xf32>
    %cst_107 = arith.constant 5.000000e-01 : f32
    %279 = vector.broadcast %cst_107 : f32 to vector<2x128xf32>
    %280 = arith.mulf %279, %278 : vector<2x128xf32>
    %cst_108 = arith.constant 5.000000e-01 : f32
    %281 = vector.broadcast %cst_108 : f32 to vector<2x128xf32>
    %282 = arith.addf %280, %281 : vector<2x128xf32>
    %283 = vector.extract_strided_slice %274 {offsets = [0, 128], sizes = [2, 128], strides = [1, 1]} : vector<2x512xf32> to vector<2x128xf32>
    %cst_109 = arith.constant 5.000000e-01 : f32
    %284 = vector.broadcast %cst_109 : f32 to vector<2x128xf32>
    %285 = arith.mulf %284, %283 : vector<2x128xf32>
    %286 = math.tanh %285 : vector<2x128xf32>
    %cst_110 = arith.constant 5.000000e-01 : f32
    %287 = vector.broadcast %cst_110 : f32 to vector<2x128xf32>
    %288 = arith.mulf %287, %286 : vector<2x128xf32>
    %cst_111 = arith.constant 5.000000e-01 : f32
    %289 = vector.broadcast %cst_111 : f32 to vector<2x128xf32>
    %290 = arith.addf %288, %289 : vector<2x128xf32>
    %291 = vector.extract_strided_slice %274 {offsets = [0, 256], sizes = [2, 128], strides = [1, 1]} : vector<2x512xf32> to vector<2x128xf32>
    %292 = math.tanh %291 : vector<2x128xf32>
    %293 = vector.extract_strided_slice %274 {offsets = [0, 384], sizes = [2, 128], strides = [1, 1]} : vector<2x512xf32> to vector<2x128xf32>
    %cst_112 = arith.constant 5.000000e-01 : f32
    %294 = vector.broadcast %cst_112 : f32 to vector<2x128xf32>
    %295 = arith.mulf %294, %293 : vector<2x128xf32>
    %296 = math.tanh %295 : vector<2x128xf32>
    %cst_113 = arith.constant 5.000000e-01 : f32
    %297 = vector.broadcast %cst_113 : f32 to vector<2x128xf32>
    %298 = arith.mulf %297, %296 : vector<2x128xf32>
    %cst_114 = arith.constant 5.000000e-01 : f32
    %299 = vector.broadcast %cst_114 : f32 to vector<2x128xf32>
    %300 = arith.addf %298, %299 : vector<2x128xf32>
    %301 = arith.mulf %290, %262 : vector<2x128xf32>
    %302 = arith.mulf %282, %292 : vector<2x128xf32>
    %303 = arith.addf %301, %302 : vector<2x128xf32>
    %304 = math.tanh %303 : vector<2x128xf32>
    %305 = arith.mulf %300, %304 : vector<2x128xf32>
    %306 = arith.index_cast %c6_i32 : i32 to index
    %c0_115 = arith.constant 0 : index
    %c0_116 = arith.constant 0 : index
    %307 = vector.load %arg5[%306, %c0_115, %c0_116] : memref<8x2x128xf32, #tpu.memory_space<vmem>>, vector<1x2x128xf32>
    %308 = vector.shape_cast %307 : vector<1x2x128xf32> to vector<2x128xf32>
    %309 = vector.shape_cast %305 : vector<2x128xf32> to vector<1x2x128xf32>
    tpu.vector_store %arg5[%306, %c0_115, %c0_116], %309 {strides = array<i32>} : memref<8x2x128xf32, #tpu.memory_space<vmem>>, vector<1x2x128xf32>,
    %c7_i32 = arith.constant 7 : i32
    %310 = arith.index_cast %c7_i32 : i32 to index
    %c0_117 = arith.constant 0 : index
    %c0_118 = arith.constant 0 : index
    %311 = vector.load %arg7[%310, %c0_117, %c0_118] : memref<8x2x512xf32, #tpu.memory_space<vmem>>, vector<1x2x512xf32>
    %312 = vector.shape_cast %311 : vector<1x2x512xf32> to vector<2x512xf32>
    %313 = arith.truncf %305 : vector<2x128xf32> to vector<2x128xbf16>
    %cst_119 = arith.constant dense<0.000000e+00> : vector<2x512xf32>
    %314 = tpu.matmul %313, %20, %cst_119 {dimension_numbers = #tpu.dot_dimension_numbers<[1], [0], [0], [1], [0, 0, 1, 1], [], []>} : vector<2x128xbf16>, vector<128x512xbf16>, vector<2x512xf32> -> vector<2x512xf32>
    %315 = arith.addf %312, %314 : vector<2x512xf32>
    %316 = vector.extract_strided_slice %315 {offsets = [0, 0], sizes = [2, 128], strides = [1, 1]} : vector<2x512xf32> to vector<2x128xf32>
    %cst_120 = arith.constant 5.000000e-01 : f32
    %317 = vector.broadcast %cst_120 : f32 to vector<2x128xf32>
    %318 = arith.mulf %317, %316 : vector<2x128xf32>
    %319 = math.tanh %318 : vector<2x128xf32>
    %cst_121 = arith.constant 5.000000e-01 : f32
    %320 = vector.broadcast %cst_121 : f32 to vector<2x128xf32>
    %321 = arith.mulf %320, %319 : vector<2x128xf32>
    %cst_122 = arith.constant 5.000000e-01 : f32
    %322 = vector.broadcast %cst_122 : f32 to vector<2x128xf32>
    %323 = arith.addf %321, %322 : vector<2x128xf32>
    %324 = vector.extract_strided_slice %315 {offsets = [0, 128], sizes = [2, 128], strides = [1, 1]} : vector<2x512xf32> to vector<2x128xf32>
    %cst_123 = arith.constant 5.000000e-01 : f32
    %325 = vector.broadcast %cst_123 : f32 to vector<2x128xf32>
    %326 = arith.mulf %325, %324 : vector<2x128xf32>
    %327 = math.tanh %326 : vector<2x128xf32>
    %cst_124 = arith.constant 5.000000e-01 : f32
    %328 = vector.broadcast %cst_124 : f32 to vector<2x128xf32>
    %329 = arith.mulf %328, %327 : vector<2x128xf32>
    %cst_125 = arith.constant 5.000000e-01 : f32
    %330 = vector.broadcast %cst_125 : f32 to vector<2x128xf32>
    %331 = arith.addf %329, %330 : vector<2x128xf32>
    %332 = vector.extract_strided_slice %315 {offsets = [0, 256], sizes = [2, 128], strides = [1, 1]} : vector<2x512xf32> to vector<2x128xf32>
    %333 = math.tanh %332 : vector<2x128xf32>
    %334 = vector.extract_strided_slice %315 {offsets = [0, 384], sizes = [2, 128], strides = [1, 1]} : vector<2x512xf32> to vector<2x128xf32>
    %cst_126 = arith.constant 5.000000e-01 : f32
    %335 = vector.broadcast %cst_126 : f32 to vector<2x128xf32>
    %336 = arith.mulf %335, %334 : vector<2x128xf32>
    %337 = math.tanh %336 : vector<2x128xf32>
    %cst_127 = arith.constant 5.000000e-01 : f32
    %338 = vector.broadcast %cst_127 : f32 to vector<2x128xf32>
    %339 = arith.mulf %338, %337 : vector<2x128xf32>
    %cst_128 = arith.constant 5.000000e-01 : f32
    %340 = vector.broadcast %cst_128 : f32 to vector<2x128xf32>
    %341 = arith.addf %339, %340 : vector<2x128xf32>
    %342 = arith.mulf %331, %303 : vector<2x128xf32>
    %343 = arith.mulf %323, %333 : vector<2x128xf32>
    %344 = arith.addf %342, %343 : vector<2x128xf32>
    %345 = math.tanh %344 : vector<2x128xf32>
    %346 = arith.mulf %341, %345 : vector<2x128xf32>
    %347 = arith.index_cast %c7_i32 : i32 to index
    %c0_129 = arith.constant 0 : index
    %c0_130 = arith.constant 0 : index
    %348 = vector.load %arg5[%347, %c0_129, %c0_130] : memref<8x2x128xf32, #tpu.memory_space<vmem>>, vector<1x2x128xf32>
    %349 = vector.shape_cast %348 : vector<1x2x128xf32> to vector<2x128xf32>
    %350 = vector.shape_cast %346 : vector<2x128xf32> to vector<1x2x128xf32>
    tpu.vector_store %arg5[%347, %c0_129, %c0_130], %350 {strides = array<i32>} : memref<8x2x128xf32, #tpu.memory_space<vmem>>, vector<1x2x128xf32>,
    %c8_i32 = arith.constant 8 : i32
    %c0_131 = arith.constant 0 : index
    %c0_132 = arith.constant 0 : index
    %351 = vector.load %arg8[%c0_131, %c0_132] : memref<2x128xf32, #tpu.memory_space<vmem>>, vector<2x128xf32>
    tpu.vector_store %arg8[%c0_131, %c0_132], %346 {strides = array<i32>} : memref<2x128xf32, #tpu.memory_space<vmem>>, vector<2x128xf32>,
    %c0_133 = arith.constant 0 : index
    %c0_134 = arith.constant 0 : index
    %352 = vector.load %arg9[%c0_133, %c0_134] : memref<2x128xf32, #tpu.memory_space<vmem>>, vector<2x128xf32>
    tpu.vector_store %arg9[%c0_133, %c0_134], %344 {strides = array<i32>} : memref<2x128xf32, #tpu.memory_space<vmem>>, vector<2x128xf32>,
    %c0_135 = arith.constant 0 : index
    %c0_136 = arith.constant 0 : index
    %353 = vector.load %arg9[%c0_135, %c0_136] : memref<2x128xf32, #tpu.memory_space<vmem>>, vector<2x128xf32>
    %c0_137 = arith.constant 0 : index
    %c0_138 = arith.constant 0 : index
    %354 = vector.load %arg6[%c0_137, %c0_138] : memref<2x128xf32, #tpu.memory_space<vmem>>, vector<2x128xf32>
    tpu.vector_store %arg6[%c0_137, %c0_138], %353 {strides = array<i32>} : memref<2x128xf32, #tpu.memory_space<vmem>>, vector<2x128xf32>,
    return
  }
  func.func @transform_0(%arg0: i32) -> (i32, i32, i32) {
    %c0_i32 = arith.constant 0 : i32
    %c0_i32_0 = arith.constant 0 : i32
    %c0_i32_1 = arith.constant 0 : i32
    return %c0_i32, %arg0, %c0_i32_0 : i32, i32, i32
  }
  func.func @transform_1(%arg0: i32) -> (i32, i32) {
    %c0_i32 = arith.constant 0 : i32
    %c0_i32_0 = arith.constant 0 : i32
    %c0_i32_1 = arith.constant 0 : i32
    return %c0_i32, %c0_i32_0 : i32, i32
  }
  func.func @transform_2(%arg0: i32) -> (i32, i32) {
    %c0_i32 = arith.constant 0 : i32
    %c0_i32_0 = arith.constant 0 : i32
    %c0_i32_1 = arith.constant 0 : i32
    return %c0_i32, %c0_i32_0 : i32, i32
  }
  func.func @transform_3(%arg0: i32) -> (i32, i32) {
    %c0_i32 = arith.constant 0 : i32
    %c0_i32_0 = arith.constant 0 : i32
    %c0_i32_1 = arith.constant 0 : i32
    return %c0_i32, %c0_i32_0 : i32, i32
  }
  func.func @transform_4(%arg0: i32) -> (i32, i32, i32) {
    %c0_i32 = arith.constant 0 : i32
    %c0_i32_0 = arith.constant 0 : i32
    %c0_i32_1 = arith.constant 0 : i32
    return %arg0, %c0_i32, %c0_i32_0 : i32, i32, i32
  }
  func.func @transform_5(%arg0: i32) -> (i32, i32) {
    %c0_i32 = arith.constant 0 : i32
    %c0_i32_0 = arith.constant 0 : i32
    %c0_i32_1 = arith.constant 0 : i32
    return %c0_i32, %c0_i32_0 : i32, i32
  }
}

module attributes {stable_mosaic.version = 11 : i64} {
  func.func @kernel(%arg0: i32, %arg1: memref<2x8x16xf32, #tpu.memory_space<vmem>>, %arg2: memref<16x512xbf16, #tpu.memory_space<vmem>>, %arg3: memref<128x512xbf16, #tpu.memory_space<vmem>>, %arg4: memref<1x512xf32, #tpu.memory_space<vmem>>, %arg5: memref<8x2x128xf32, #tpu.memory_space<vmem>>, %arg6: memref<2x128xf32, #tpu.memory_space<vmem>>, %arg7: memref<8x2x512xf32, #tpu.memory_space<vmem>>, %arg8: memref<2x128xf32, #tpu.memory_space<vmem>>, %arg9: memref<2x128xf32, #tpu.memory_space<vmem>>) attributes {dimension_semantics = [#tpu.dimension_semantics<arbitrary>], iteration_bounds = array<i64: 1>, scalar_prefetch = 0 : i64, scratch_operands = 3 : i64, tpu.core_type = #tpu.core_type<tc>, window_params = [{transform_indices = @transform_0, window_bounds = array<i64: 2, 8, 16>}, {pipeline_mode = #tpu.pipeline_mode<synchronous>, transform_indices = @transform_1, window_bounds = array<i64: 16, 512>}, {pipeline_mode = #tpu.pipeline_mode<synchronous>, transform_indices = @transform_2, window_bounds = array<i64: 128, 512>}, {pipeline_mode = #tpu.pipeline_mode<synchronous>, transform_indices = @transform_3, window_bounds = array<i64: 1, 512>}, {transform_indices = @transform_4, window_bounds = array<i64: 8, 2, 128>}, {pipeline_mode = #tpu.pipeline_mode<synchronous>, transform_indices = @transform_5, window_bounds = array<i64: 2, 128>}]} {
    %c0_i32 = arith.constant 0 : i32
    %0 = arith.cmpi eq, %arg0, %c0_i32 : i32
    %1 = arith.extui %0 : i1 to i32
    %c0_i32_0 = arith.constant 0 : i32
    %2 = arith.cmpi ne, %1, %c0_i32_0 : i32
    scf.if %2 {
      %cst_139 = arith.constant 0.000000e+00 : f32
      %355 = vector.broadcast %cst_139 : f32 to vector<2x128xf32>
      %c0_140 = arith.constant 0 : index
      %c0_141 = arith.constant 0 : index
      %356 = vector.load %arg8[%c0_140, %c0_141] : memref<2x128xf32, #tpu.memory_space<vmem>>, vector<2x128xf32>
      tpu.vector_store %arg8[%c0_140, %c0_141], %355 {strides = array<i32>} : memref<2x128xf32, #tpu.memory_space<vmem>>, vector<2x128xf32>,
      %cst_142 = arith.constant 0.000000e+00 : f32
      %357 = vector.broadcast %cst_142 : f32 to vector<2x128xf32>
      %c0_143 = arith.constant 0 : index
      %c0_144 = arith.constant 0 : index
      %358 = vector.load %arg9[%c0_143, %c0_144] : memref<2x128xf32, #tpu.memory_space<vmem>>, vector<2x128xf32>
      tpu.vector_store %arg9[%c0_143, %c0_144], %357 {strides = array<i32>} : memref<2x128xf32, #tpu.memory_space<vmem>>, vector<2x128xf32>,
    } else {
    }
    %c0 = arith.constant 0 : index
    %c0_1 = arith.constant 0 : index
    %c0_2 = arith.constant 0 : index
    %3 = vector.load %arg1[%c0, %c0_1, %c0_2] : memref<2x8x16xf32, #tpu.memory_space<vmem>>, vector<2x8x16xf32>
    %4 = vector.shape_cast %3 : vector<2x8x16xf32> to vector<16x16xf32>
    %5 = arith.truncf %4 : vector<16x16xf32> to vector<16x16xbf16>
    %c0_3 = arith.constant 0 : index
    %c0_4 = arith.constant 0 : index
    %6 = vector.load %arg2[%c0_3, %c0_4] : memref<16x512xbf16, #tpu.memory_space<vmem>>, vector<16x512xbf16>
    %cst = arith.constant dense<0.000000e+00> : vector<16x512xf32>
    %7 = tpu.matmul %5, %6, %cst {dimension_numbers = #tpu.dot_dimension_numbers<[1], [0], [0], [1], [0, 0, 1, 1], [], []>} : vector<16x16xbf16>, vector<16x512xbf16>, vector<16x512xf32> -> vector<16x512xf32>
    %c0_5 = arith.constant 0 : index
    %c0_6 = arith.constant 0 : index
    %8 = vector.load %arg4[%c0_5, %c0_6] : memref<1x512xf32, #tpu.memory_space<vmem>>, vector<1x512xf32>
    %9 = vector.broadcast %8 : vector<1x512xf32> to vector<16x512xf32>
    %10 = arith.addf %7, %9 : vector<16x512xf32>
    %11 = vector.shape_cast %10 : vector<16x512xf32> to vector<2x8x512xf32>
    %12 = vector.extract_strided_slice %11 {offsets = [0, 0, 0], sizes = [1, 8, 512], strides = [1, 1, 1]} : vector<2x8x512xf32> to vector<1x8x512xf32>
    %13 = vector.shape_cast %12 : vector<1x8x512xf32> to vector<8x512xf32>
    %14 = vector.shape_cast %13 : vector<8x512xf32> to vector<8x1x512xf32>
    %c0_7 = arith.constant 0 : index
    %c0_8 = arith.constant 0 : index
    %c0_9 = arith.constant 0 : index
    %15 = vector.load %arg7[%c0_7, %c0_8, %c0_9] : memref<8x2x512xf32, #tpu.memory_space<vmem>>, vector<8x1x512xf32>
    tpu.vector_store %arg7[%c0_7, %c0_8, %c0_9], %14 {strides = array<i32>} : memref<8x2x512xf32, #tpu.memory_space<vmem>>, vector<8x1x512xf32>,
    %16 = vector.extract_strided_slice %11 {offsets = [1, 0, 0], sizes = [1, 8, 512], strides = [1, 1, 1]} : vector<2x8x512xf32> to vector<1x8x512xf32>
    %17 = vector.shape_cast %16 : vector<1x8x512xf32> to vector<8x512xf32>
    %18 = vector.shape_cast %17 : vector<8x512xf32> to vector<8x1x512xf32>
    %c0_10 = arith.constant 0 : index
    %c1 = arith.constant 1 : index
    %c0_11 = arith.constant 0 : index
    %19 = vector.load %arg7[%c0_10, %c1, %c0_11] : memref<8x2x512xf32, #tpu.memory_space<vmem>>, vector<8x1x512xf32>
    tpu.vector_store %arg7[%c0_10, %c1, %c0_11], %18 {strides = array<i32>} : memref<8x2x512xf32, #tpu.memory_space<vmem>>, vector<8x1x512xf32>,
    %c0_12 = arith.constant 0 : index
    %c0_13 = arith.constant 0 : index
    %20 = vector.load %arg3[%c0_12, %c0_13] : memref<128x512xbf16, #tpu.memory_space<vmem>>, vector<128x512xbf16>
    %c0_14 = arith.constant 0 : index
    %c0_15 = arith.constant 0 : index
    %21 = vector.load %arg8[%c0_14, %c0_15] : memref<2x128xf32, #tpu.memory_space<vmem>>, vector<2x128xf32>
    %c0_16 = arith.constant 0 : index
    %c0_17 = arith.constant 0 : index
    %22 = vector.load %arg9[%c0_16, %c0_17] : memref<2x128xf32, #tpu.memory_space<vmem>>, vector<2x128xf32>
    %c0_i32_18 = arith.constant 0 : i32
    %23 = arith.index_cast %c0_i32_18 : i32 to index
    %c0_19 = arith.constant 0 : index
    %c0_20 = arith.constant 0 : index
    %24 = vector.load %arg7[%23, %c0_19, %c0_20] : memref<8x2x512xf32, #tpu.memory_space<vmem>>, vector<1x2x512xf32>
    %25 = vector.shape_cast %24 : vector<1x2x512xf32> to vector<2x512xf32>
    %26 = arith.truncf %21 : vector<2x128xf32> to vector<2x128xbf16>
    %cst_21 = arith.constant dense<0.000000e+00> : vector<2x512xf32>
    %27 = tpu.matmul %26, %20, %cst_21 {dimension_numbers = #tpu.dot_dimension_numbers<[1], [0], [0], [1], [0, 0, 1, 1], [], []>} : vector<2x128xbf16>, vector<128x512xbf16>, vector<2x512xf32> -> vector<2x512xf32>
    %28 = arith.addf %25, %27 : vector<2x512xf32>
    %29 = vector.extract_strided_slice %28 {offsets = [0, 0], sizes = [2, 128], strides = [1, 1]} : vector<2x512xf32> to vector<2x128xf32>
    %cst_22 = arith.constant 5.000000e-01 : f32
    %30 = vector.broadcast %cst_22 : f32 to vector<2x128xf32>
    %31 = arith.mulf %30, %29 : vector<2x128xf32>
    %32 = math.tanh %31 : vector<2x128xf32>
    %cst_23 = arith.constant 5.000000e-01 : f32
    %33 = vector.broadcast %cst_23 : f32 to vector<2x128xf32>
    %34 = arith.mulf %33, %32 : vector<2x128xf32>
    %cst_24 = arith.constant 5.000000e-01 : f32
    %35 = vector.broadcast %cst_24 : f32 to vector<2x128xf32>
    %36 = arith.addf %34, %35 : vector<2x128xf32>
    %37 = vector.extract_strided_slice %28 {offsets = [0, 128], sizes = [2, 128], strides = [1, 1]} : vector<2x512xf32> to vector<2x128xf32>
    %cst_25 = arith.constant 5.000000e-01 : f32
    %38 = vector.broadcast %cst_25 : f32 to vector<2x128xf32>
    %39 = arith.mulf %38, %37 : vector<2x128xf32>
    %40 = math.tanh %39 : vector<2x128xf32>
    %cst_26 = arith.constant 5.000000e-01 : f32
    %41 = vector.broadcast %cst_26 : f32 to vector<2x128xf32>
    %42 = arith.mulf %41, %40 : vector<2x128xf32>
    %cst_27 = arith.constant 5.000000e-01 : f32
    %43 = vector.broadcast %cst_27 : f32 to vector<2x128xf32>
    %44 = arith.addf %42, %43 : vector<2x128xf32>
    %45 = vector.extract_strided_slice %28 {offsets = [0, 256], sizes = [2, 128], strides = [1, 1]} : vector<2x512xf32> to vector<2x128xf32>
    %46 = math.tanh %45 : vector<2x128xf32>
    %47 = vector.extract_strided_slice %28 {offsets = [0, 384], sizes = [2, 128], strides = [1, 1]} : vector<2x512xf32> to vector<2x128xf32>
    %cst_28 = arith.constant 5.000000e-01 : f32
    %48 = vector.broadcast %cst_28 : f32 to vector<2x128xf32>
    %49 = arith.mulf %48, %47 : vector<2x128xf32>
    %50 = math.tanh %49 : vector<2x128xf32>
    %cst_29 = arith.constant 5.000000e-01 : f32
    %51 = vector.broadcast %cst_29 : f32 to vector<2x128xf32>
    %52 = arith.mulf %51, %50 : vector<2x128xf32>
    %cst_30 = arith.constant 5.000000e-01 : f32
    %53 = vector.broadcast %cst_30 : f32 to vector<2x128xf32>
    %54 = arith.addf %52, %53 : vector<2x128xf32>
    %55 = arith.mulf %44, %22 : vector<2x128xf32>
    %56 = arith.mulf %36, %46 : vector<2x128xf32>
    %57 = arith.addf %55, %56 : vector<2x128xf32>
    %58 = math.tanh %57 : vector<2x128xf32>
    %59 = arith.mulf %54, %58 : vector<2x128xf32>
    %60 = arith.index_cast %c0_i32_18 : i32 to index
    %c0_31 = arith.constant 0 : index
    %c0_32 = arith.constant 0 : index
    %61 = vector.load %arg5[%60, %c0_31, %c0_32] : memref<8x2x128xf32, #tpu.memory_space<vmem>>, vector<1x2x128xf32>
    %62 = vector.shape_cast %61 : vector<1x2x128xf32> to vector<2x128xf32>
    %63 = vector.shape_cast %59 : vector<2x128xf32> to vector<1x2x128xf32>
    tpu.vector_store %arg5[%60, %c0_31, %c0_32], %63 {strides = array<i32>} : memref<8x2x128xf32, #tpu.memory_space<vmem>>, vector<1x2x128xf32>,
    %c1_i32 = arith.constant 1 : i32
    %64 = arith.index_cast %c1_i32 : i32 to index
    %c0_33 = arith.constant 0 : index
    %c0_34 = arith.constant 0 : index
    %65 = vector.load %arg7[%64, %c0_33, %c0_34] : memref<8x2x512xf32, #tpu.memory_space<vmem>>, vector<1x2x512xf32>
    %66 = vector.shape_cast %65 : vector<1x2x512xf32> to vector<2x512xf32>
    %67 = arith.truncf %59 : vector<2x128xf32> to vector<2x128xbf16>
    %cst_35 = arith.constant dense<0.000000e+00> : vector<2x512xf32>
    %68 = tpu.matmul %67, %20, %cst_35 {dimension_numbers = #tpu.dot_dimension_numbers<[1], [0], [0], [1], [0, 0, 1, 1], [], []>} : vector<2x128xbf16>, vector<128x512xbf16>, vector<2x512xf32> -> vector<2x512xf32>
    %69 = arith.addf %66, %68 : vector<2x512xf32>
    %70 = vector.extract_strided_slice %69 {offsets = [0, 0], sizes = [2, 128], strides = [1, 1]} : vector<2x512xf32> to vector<2x128xf32>
    %cst_36 = arith.constant 5.000000e-01 : f32
    %71 = vector.broadcast %cst_36 : f32 to vector<2x128xf32>
    %72 = arith.mulf %71, %70 : vector<2x128xf32>
    %73 = math.tanh %72 : vector<2x128xf32>
    %cst_37 = arith.constant 5.000000e-01 : f32
    %74 = vector.broadcast %cst_37 : f32 to vector<2x128xf32>
    %75 = arith.mulf %74, %73 : vector<2x128xf32>
    %cst_38 = arith.constant 5.000000e-01 : f32
    %76 = vector.broadcast %cst_38 : f32 to vector<2x128xf32>
    %77 = arith.addf %75, %76 : vector<2x128xf32>
    %78 = vector.extract_strided_slice %69 {offsets = [0, 128], sizes = [2, 128], strides = [1, 1]} : vector<2x512xf32> to vector<2x128xf32>
    %cst_39 = arith.constant 5.000000e-01 : f32
    %79 = vector.broadcast %cst_39 : f32 to vector<2x128xf32>
    %80 = arith.mulf %79, %78 : vector<2x128xf32>
    %81 = math.tanh %80 : vector<2x128xf32>
    %cst_40 = arith.constant 5.000000e-01 : f32
    %82 = vector.broadcast %cst_40 : f32 to vector<2x128xf32>
    %83 = arith.mulf %82, %81 : vector<2x128xf32>
    %cst_41 = arith.constant 5.000000e-01 : f32
    %84 = vector.broadcast %cst_41 : f32 to vector<2x128xf32>
    %85 = arith.addf %83, %84 : vector<2x128xf32>
    %86 = vector.extract_strided_slice %69 {offsets = [0, 256], sizes = [2, 128], strides = [1, 1]} : vector<2x512xf32> to vector<2x128xf32>
    %87 = math.tanh %86 : vector<2x128xf32>
    %88 = vector.extract_strided_slice %69 {offsets = [0, 384], sizes = [2, 128], strides = [1, 1]} : vector<2x512xf32> to vector<2x128xf32>
    %cst_42 = arith.constant 5.000000e-01 : f32
    %89 = vector.broadcast %cst_42 : f32 to vector<2x128xf32>
    %90 = arith.mulf %89, %88 : vector<2x128xf32>
    %91 = math.tanh %90 : vector<2x128xf32>
    %cst_43 = arith.constant 5.000000e-01 : f32
    %92 = vector.broadcast %cst_43 : f32 to vector<2x128xf32>
    %93 = arith.mulf %92, %91 : vector<2x128xf32>
    %cst_44 = arith.constant 5.000000e-01 : f32
    %94 = vector.broadcast %cst_44 : f32 to vector<2x128xf32>
    %95 = arith.addf %93, %94 : vector<2x128xf32>
    %96 = arith.mulf %85, %57 : vector<2x128xf32>
    %97 = arith.mulf %77, %87 : vector<2x128xf32>
    %98 = arith.addf %96, %97 : vector<2x128xf32>
    %99 = math.tanh %98 : vector<2x128xf32>
    %100 = arith.mulf %95, %99 : vector<2x128xf32>
    %101 = arith.index_cast %c1_i32 : i32 to index
    %c0_45 = arith.constant 0 : index
    %c0_46 = arith.constant 0 : index
    %102 = vector.load %arg5[%101, %c0_45, %c0_46] : memref<8x2x128xf32, #tpu.memory_space<vmem>>, vector<1x2x128xf32>
    %103 = vector.shape_cast %102 : vector<1x2x128xf32> to vector<2x128xf32>
    %104 = vector.shape_cast %100 : vector<2x128xf32> to vector<1x2x128xf32>
    tpu.vector_store %arg5[%101, %c0_45, %c0_46], %104 {strides = array<i32>} : memref<8x2x128xf32, #tpu.memory_space<vmem>>, vector<1x2x128xf32>,
    %c2_i32 = arith.constant 2 : i32
    %105 = arith.index_cast %c2_i32 : i32 to index
    %c0_47 = arith.constant 0 : index
    %c0_48 = arith.constant 0 : index
    %106 = vector.load %arg7[%105, %c0_47, %c0_48] : memref<8x2x512xf32, #tpu.memory_space<vmem>>, vector<1x2x512xf32>
    %107 = vector.shape_cast %106 : vector<1x2x512xf32> to vector<2x512xf32>
    %108 = arith.truncf %100 : vector<2x128xf32> to vector<2x128xbf16>
    %cst_49 = arith.constant dense<0.000000e+00> : vector<2x512xf32>
    %109 = tpu.matmul %108, %20, %cst_49 {dimension_numbers = #tpu.dot_dimension_numbers<[1], [0], [0], [1], [0, 0, 1, 1], [], []>} : vector<2x128xbf16>, vector<128x512xbf16>, vector<2x512xf32> -> vector<2x512xf32>
    %110 = arith.addf %107, %109 : vector<2x512xf32>
    %111 = vector.extract_strided_slice %110 {offsets = [0, 0], sizes = [2, 128], strides = [1, 1]} : vector<2x512xf32> to vector<2x128xf32>
    %cst_50 = arith.constant 5.000000e-01 : f32
    %112 = vector.broadcast %cst_50 : f32 to vector<2x128xf32>
    %113 = arith.mulf %112, %111 : vector<2x128xf32>
    %114 = math.tanh %113 : vector<2x128xf32>
    %cst_51 = arith.constant 5.000000e-01 : f32
    %115 = vector.broadcast %cst_51 : f32 to vector<2x128xf32>
    %116 = arith.mulf %115, %114 : vector<2x128xf32>
    %cst_52 = arith.constant 5.000000e-01 : f32
    %117 = vector.broadcast %cst_52 : f32 to vector<2x128xf32>
    %118 = arith.addf %116, %117 : vector<2x128xf32>
    %119 = vector.extract_strided_slice %110 {offsets = [0, 128], sizes = [2, 128], strides = [1, 1]} : vector<2x512xf32> to vector<2x128xf32>
    %cst_53 = arith.constant 5.000000e-01 : f32
    %120 = vector.broadcast %cst_53 : f32 to vector<2x128xf32>
    %121 = arith.mulf %120, %119 : vector<2x128xf32>
    %122 = math.tanh %121 : vector<2x128xf32>
    %cst_54 = arith.constant 5.000000e-01 : f32
    %123 = vector.broadcast %cst_54 : f32 to vector<2x128xf32>
    %124 = arith.mulf %123, %122 : vector<2x128xf32>
    %cst_55 = arith.constant 5.000000e-01 : f32
    %125 = vector.broadcast %cst_55 : f32 to vector<2x128xf32>
    %126 = arith.addf %124, %125 : vector<2x128xf32>
    %127 = vector.extract_strided_slice %110 {offsets = [0, 256], sizes = [2, 128], strides = [1, 1]} : vector<2x512xf32> to vector<2x128xf32>
    %128 = math.tanh %127 : vector<2x128xf32>
    %129 = vector.extract_strided_slice %110 {offsets = [0, 384], sizes = [2, 128], strides = [1, 1]} : vector<2x512xf32> to vector<2x128xf32>
    %cst_56 = arith.constant 5.000000e-01 : f32
    %130 = vector.broadcast %cst_56 : f32 to vector<2x128xf32>
    %131 = arith.mulf %130, %129 : vector<2x128xf32>
    %132 = math.tanh %131 : vector<2x128xf32>
    %cst_57 = arith.constant 5.000000e-01 : f32
    %133 = vector.broadcast %cst_57 : f32 to vector<2x128xf32>
    %134 = arith.mulf %133, %132 : vector<2x128xf32>
    %cst_58 = arith.constant 5.000000e-01 : f32
    %135 = vector.broadcast %cst_58 : f32 to vector<2x128xf32>
    %136 = arith.addf %134, %135 : vector<2x128xf32>
    %137 = arith.mulf %126, %98 : vector<2x128xf32>
    %138 = arith.mulf %118, %128 : vector<2x128xf32>
    %139 = arith.addf %137, %138 : vector<2x128xf32>
    %140 = math.tanh %139 : vector<2x128xf32>
    %141 = arith.mulf %136, %140 : vector<2x128xf32>
    %142 = arith.index_cast %c2_i32 : i32 to index
    %c0_59 = arith.constant 0 : index
    %c0_60 = arith.constant 0 : index
    %143 = vector.load %arg5[%142, %c0_59, %c0_60] : memref<8x2x128xf32, #tpu.memory_space<vmem>>, vector<1x2x128xf32>
    %144 = vector.shape_cast %143 : vector<1x2x128xf32> to vector<2x128xf32>
    %145 = vector.shape_cast %141 : vector<2x128xf32> to vector<1x2x128xf32>
    tpu.vector_store %arg5[%142, %c0_59, %c0_60], %145 {strides = array<i32>} : memref<8x2x128xf32, #tpu.memory_space<vmem>>, vector<1x2x128xf32>,
    %c3_i32 = arith.constant 3 : i32
    %146 = arith.index_cast %c3_i32 : i32 to index
    %c0_61 = arith.constant 0 : index
    %c0_62 = arith.constant 0 : index
    %147 = vector.load %arg7[%146, %c0_61, %c0_62] : memref<8x2x512xf32, #tpu.memory_space<vmem>>, vector<1x2x512xf32>
    %148 = vector.shape_cast %147 : vector<1x2x512xf32> to vector<2x512xf32>
    %149 = arith.truncf %141 : vector<2x128xf32> to vector<2x128xbf16>
    %cst_63 = arith.constant dense<0.000000e+00> : vector<2x512xf32>
    %150 = tpu.matmul %149, %20, %cst_63 {dimension_numbers = #tpu.dot_dimension_numbers<[1], [0], [0], [1], [0, 0, 1, 1], [], []>} : vector<2x128xbf16>, vector<128x512xbf16>, vector<2x512xf32> -> vector<2x512xf32>
    %151 = arith.addf %148, %150 : vector<2x512xf32>
    %152 = vector.extract_strided_slice %151 {offsets = [0, 0], sizes = [2, 128], strides = [1, 1]} : vector<2x512xf32> to vector<2x128xf32>
    %cst_64 = arith.constant 5.000000e-01 : f32
    %153 = vector.broadcast %cst_64 : f32 to vector<2x128xf32>
    %154 = arith.mulf %153, %152 : vector<2x128xf32>
    %155 = math.tanh %154 : vector<2x128xf32>
    %cst_65 = arith.constant 5.000000e-01 : f32
    %156 = vector.broadcast %cst_65 : f32 to vector<2x128xf32>
    %157 = arith.mulf %156, %155 : vector<2x128xf32>
    %cst_66 = arith.constant 5.000000e-01 : f32
    %158 = vector.broadcast %cst_66 : f32 to vector<2x128xf32>
    %159 = arith.addf %157, %158 : vector<2x128xf32>
    %160 = vector.extract_strided_slice %151 {offsets = [0, 128], sizes = [2, 128], strides = [1, 1]} : vector<2x512xf32> to vector<2x128xf32>
    %cst_67 = arith.constant 5.000000e-01 : f32
    %161 = vector.broadcast %cst_67 : f32 to vector<2x128xf32>
    %162 = arith.mulf %161, %160 : vector<2x128xf32>
    %163 = math.tanh %162 : vector<2x128xf32>
    %cst_68 = arith.constant 5.000000e-01 : f32
    %164 = vector.broadcast %cst_68 : f32 to vector<2x128xf32>
    %165 = arith.mulf %164, %163 : vector<2x128xf32>
    %cst_69 = arith.constant 5.000000e-01 : f32
    %166 = vector.broadcast %cst_69 : f32 to vector<2x128xf32>
    %167 = arith.addf %165, %166 : vector<2x128xf32>
    %168 = vector.extract_strided_slice %151 {offsets = [0, 256], sizes = [2, 128], strides = [1, 1]} : vector<2x512xf32> to vector<2x128xf32>
    %169 = math.tanh %168 : vector<2x128xf32>
    %170 = vector.extract_strided_slice %151 {offsets = [0, 384], sizes = [2, 128], strides = [1, 1]} : vector<2x512xf32> to vector<2x128xf32>
    %cst_70 = arith.constant 5.000000e-01 : f32
    %171 = vector.broadcast %cst_70 : f32 to vector<2x128xf32>
    %172 = arith.mulf %171, %170 : vector<2x128xf32>
    %173 = math.tanh %172 : vector<2x128xf32>
    %cst_71 = arith.constant 5.000000e-01 : f32
    %174 = vector.broadcast %cst_71 : f32 to vector<2x128xf32>
    %175 = arith.mulf %174, %173 : vector<2x128xf32>
    %cst_72 = arith.constant 5.000000e-01 : f32
    %176 = vector.broadcast %cst_72 : f32 to vector<2x128xf32>
    %177 = arith.addf %175, %176 : vector<2x128xf32>
    %178 = arith.mulf %167, %139 : vector<2x128xf32>
    %179 = arith.mulf %159, %169 : vector<2x128xf32>
    %180 = arith.addf %178, %179 : vector<2x128xf32>
    %181 = math.tanh %180 : vector<2x128xf32>
    %182 = arith.mulf %177, %181 : vector<2x128xf32>
    %183 = arith.index_cast %c3_i32 : i32 to index
    %c0_73 = arith.constant 0 : index
    %c0_74 = arith.constant 0 : index
    %184 = vector.load %arg5[%183, %c0_73, %c0_74] : memref<8x2x128xf32, #tpu.memory_space<vmem>>, vector<1x2x128xf32>
    %185 = vector.shape_cast %184 : vector<1x2x128xf32> to vector<2x128xf32>
    %186 = vector.shape_cast %182 : vector<2x128xf32> to vector<1x2x128xf32>
    tpu.vector_store %arg5[%183, %c0_73, %c0_74], %186 {strides = array<i32>} : memref<8x2x128xf32, #tpu.memory_space<vmem>>, vector<1x2x128xf32>,
    %c4_i32 = arith.constant 4 : i32
    %187 = arith.index_cast %c4_i32 : i32 to index
    %c0_75 = arith.constant 0 : index
    %c0_76 = arith.constant 0 : index
    %188 = vector.load %arg7[%187, %c0_75, %c0_76] : memref<8x2x512xf32, #tpu.memory_space<vmem>>, vector<1x2x512xf32>
    %189 = vector.shape_cast %188 : vector<1x2x512xf32> to vector<2x512xf32>
    %190 = arith.truncf %182 : vector<2x128xf32> to vector<2x128xbf16>
    %cst_77 = arith.constant dense<0.000000e+00> : vector<2x512xf32>
    %191 = tpu.matmul %190, %20, %cst_77 {dimension_numbers = #tpu.dot_dimension_numbers<[1], [0], [0], [1], [0, 0, 1, 1], [], []>} : vector<2x128xbf16>, vector<128x512xbf16>, vector<2x512xf32> -> vector<2x512xf32>
    %192 = arith.addf %189, %191 : vector<2x512xf32>
    %193 = vector.extract_strided_slice %192 {offsets = [0, 0], sizes = [2, 128], strides = [1, 1]} : vector<2x512xf32> to vector<2x128xf32>
    %cst_78 = arith.constant 5.000000e-01 : f32
    %194 = vector.broadcast %cst_78 : f32 to vector<2x128xf32>
    %195 = arith.mulf %194, %193 : vector<2x128xf32>
    %196 = math.tanh %195 : vector<2x128xf32>
    %cst_79 = arith.constant 5.000000e-01 : f32
    %197 = vector.broadcast %cst_79 : f32 to vector<2x128xf32>
    %198 = arith.mulf %197, %196 : vector<2x128xf32>
    %cst_80 = arith.constant 5.000000e-01 : f32
    %199 = vector.broadcast %cst_80 : f32 to vector<2x128xf32>
    %200 = arith.addf %198, %199 : vector<2x128xf32>
    %201 = vector.extract_strided_slice %192 {offsets = [0, 128], sizes = [2, 128], strides = [1, 1]} : vector<2x512xf32> to vector<2x128xf32>
    %cst_81 = arith.constant 5.000000e-01 : f32
    %202 = vector.broadcast %cst_81 : f32 to vector<2x128xf32>
    %203 = arith.mulf %202, %201 : vector<2x128xf32>
    %204 = math.tanh %203 : vector<2x128xf32>
    %cst_82 = arith.constant 5.000000e-01 : f32
    %205 = vector.broadcast %cst_82 : f32 to vector<2x128xf32>
    %206 = arith.mulf %205, %204 : vector<2x128xf32>
    %cst_83 = arith.constant 5.000000e-01 : f32
    %207 = vector.broadcast %cst_83 : f32 to vector<2x128xf32>
    %208 = arith.addf %206, %207 : vector<2x128xf32>
    %209 = vector.extract_strided_slice %192 {offsets = [0, 256], sizes = [2, 128], strides = [1, 1]} : vector<2x512xf32> to vector<2x128xf32>
    %210 = math.tanh %209 : vector<2x128xf32>
    %211 = vector.extract_strided_slice %192 {offsets = [0, 384], sizes = [2, 128], strides = [1, 1]} : vector<2x512xf32> to vector<2x128xf32>
    %cst_84 = arith.constant 5.000000e-01 : f32
    %212 = vector.broadcast %cst_84 : f32 to vector<2x128xf32>
    %213 = arith.mulf %212, %211 : vector<2x128xf32>
    %214 = math.tanh %213 : vector<2x128xf32>
    %cst_85 = arith.constant 5.000000e-01 : f32
    %215 = vector.broadcast %cst_85 : f32 to vector<2x128xf32>
    %216 = arith.mulf %215, %214 : vector<2x128xf32>
    %cst_86 = arith.constant 5.000000e-01 : f32
    %217 = vector.broadcast %cst_86 : f32 to vector<2x128xf32>
    %218 = arith.addf %216, %217 : vector<2x128xf32>
    %219 = arith.mulf %208, %180 : vector<2x128xf32>
    %220 = arith.mulf %200, %210 : vector<2x128xf32>
    %221 = arith.addf %219, %220 : vector<2x128xf32>
    %222 = math.tanh %221 : vector<2x128xf32>
    %223 = arith.mulf %218, %222 : vector<2x128xf32>
    %224 = arith.index_cast %c4_i32 : i32 to index
    %c0_87 = arith.constant 0 : index
    %c0_88 = arith.constant 0 : index
    %225 = vector.load %arg5[%224, %c0_87, %c0_88] : memref<8x2x128xf32, #tpu.memory_space<vmem>>, vector<1x2x128xf32>
    %226 = vector.shape_cast %225 : vector<1x2x128xf32> to vector<2x128xf32>
    %227 = vector.shape_cast %223 : vector<2x128xf32> to vector<1x2x128xf32>
    tpu.vector_store %arg5[%224, %c0_87, %c0_88], %227 {strides = array<i32>} : memref<8x2x128xf32, #tpu.memory_space<vmem>>, vector<1x2x128xf32>,
    %c5_i32 = arith.constant 5 : i32
    %228 = arith.index_cast %c5_i32 : i32 to index
    %c0_89 = arith.constant 0 : index
    %c0_90 = arith.constant 0 : index
    %229 = vector.load %arg7[%228, %c0_89, %c0_90] : memref<8x2x512xf32, #tpu.memory_space<vmem>>, vector<1x2x512xf32>
    %230 = vector.shape_cast %229 : vector<1x2x512xf32> to vector<2x512xf32>
    %231 = arith.truncf %223 : vector<2x128xf32> to vector<2x128xbf16>
    %cst_91 = arith.constant dense<0.000000e+00> : vector<2x512xf32>
    %232 = tpu.matmul %231, %20, %cst_91 {dimension_numbers = #tpu.dot_dimension_numbers<[1], [0], [0], [1], [0, 0, 1, 1], [], []>} : vector<2x128xbf16>, vector<128x512xbf16>, vector<2x512xf32> -> vector<2x512xf32>
    %233 = arith.addf %230, %232 : vector<2x512xf32>
    %234 = vector.extract_strided_slice %233 {offsets = [0, 0], sizes = [2, 128], strides = [1, 1]} : vector<2x512xf32> to vector<2x128xf32>
    %cst_92 = arith.constant 5.000000e-01 : f32
    %235 = vector.broadcast %cst_92 : f32 to vector<2x128xf32>
    %236 = arith.mulf %235, %234 : vector<2x128xf32>
    %237 = math.tanh %236 : vector<2x128xf32>
    %cst_93 = arith.constant 5.000000e-01 : f32
    %238 = vector.broadcast %cst_93 : f32 to vector<2x128xf32>
    %239 = arith.mulf %238, %237 : vector<2x128xf32>
    %cst_94 = arith.constant 5.000000e-01 : f32
    %240 = vector.broadcast %cst_94 : f32 to vector<2x128xf32>
    %241 = arith.addf %239, %240 : vector<2x128xf32>
    %242 = vector.extract_strided_slice %233 {offsets = [0, 128], sizes = [2, 128], strides = [1, 1]} : vector<2x512xf32> to vector<2x128xf32>
    %cst_95 = arith.constant 5.000000e-01 : f32
    %243 = vector.broadcast %cst_95 : f32 to vector<2x128xf32>
    %244 = arith.mulf %243, %242 : vector<2x128xf32>
    %245 = math.tanh %244 : vector<2x128xf32>
    %cst_96 = arith.constant 5.000000e-01 : f32
    %246 = vector.broadcast %cst_96 : f32 to vector<2x128xf32>
    %247 = arith.mulf %246, %245 : vector<2x128xf32>
    %cst_97 = arith.constant 5.000000e-01 : f32
    %248 = vector.broadcast %cst_97 : f32 to vector<2x128xf32>
    %249 = arith.addf %247, %248 : vector<2x128xf32>
    %250 = vector.extract_strided_slice %233 {offsets = [0, 256], sizes = [2, 128], strides = [1, 1]} : vector<2x512xf32> to vector<2x128xf32>
    %251 = math.tanh %250 : vector<2x128xf32>
    %252 = vector.extract_strided_slice %233 {offsets = [0, 384], sizes = [2, 128], strides = [1, 1]} : vector<2x512xf32> to vector<2x128xf32>
    %cst_98 = arith.constant 5.000000e-01 : f32
    %253 = vector.broadcast %cst_98 : f32 to vector<2x128xf32>
    %254 = arith.mulf %253, %252 : vector<2x128xf32>
    %255 = math.tanh %254 : vector<2x128xf32>
    %cst_99 = arith.constant 5.000000e-01 : f32
    %256 = vector.broadcast %cst_99 : f32 to vector<2x128xf32>
    %257 = arith.mulf %256, %255 : vector<2x128xf32>
    %cst_100 = arith.constant 5.000000e-01 : f32
    %258 = vector.broadcast %cst_100 : f32 to vector<2x128xf32>
    %259 = arith.addf %257, %258 : vector<2x128xf32>
    %260 = arith.mulf %249, %221 : vector<2x128xf32>
    %261 = arith.mulf %241, %251 : vector<2x128xf32>
    %262 = arith.addf %260, %261 : vector<2x128xf32>
    %263 = math.tanh %262 : vector<2x128xf32>
    %264 = arith.mulf %259, %263 : vector<2x128xf32>
    %265 = arith.index_cast %c5_i32 : i32 to index
    %c0_101 = arith.constant 0 : index
    %c0_102 = arith.constant 0 : index
    %266 = vector.load %arg5[%265, %c0_101, %c0_102] : memref<8x2x128xf32, #tpu.memory_space<vmem>>, vector<1x2x128xf32>
    %267 = vector.shape_cast %266 : vector<1x2x128xf32> to vector<2x128xf32>
    %268 = vector.shape_cast %264 : vector<2x128xf32> to vector<1x2x128xf32>
    tpu.vector_store %arg5[%265, %c0_101, %c0_102], %268 {strides = array<i32>} : memref<8x2x128xf32, #tpu.memory_space<vmem>>, vector<1x2x128xf32>,
    %c6_i32 = arith.constant 6 : i32
    %269 = arith.index_cast %c6_i32 : i32 to index
    %c0_103 = arith.constant 0 : index
    %c0_104 = arith.constant 0 : index
    %270 = vector.load %arg7[%269, %c0_103, %c0_104] : memref<8x2x512xf32, #tpu.memory_space<vmem>>, vector<1x2x512xf32>
    %271 = vector.shape_cast %270 : vector<1x2x512xf32> to vector<2x512xf32>
    %272 = arith.truncf %264 : vector<2x128xf32> to vector<2x128xbf16>
    %cst_105 = arith.constant dense<0.000000e+00> : vector<2x512xf32>
    %273 = tpu.matmul %272, %20, %cst_105 {dimension_numbers = #tpu.dot_dimension_numbers<[1], [0], [0], [1], [0, 0, 1, 1], [], []>} : vector<2x128xbf16>, vector<128x512xbf16>, vector<2x512xf32> -> vector<2x512xf32>
    %274 = arith.addf %271, %273 : vector<2x512xf32>
    %275 = vector.extract_strided_slice %274 {offsets = [0, 0], sizes = [2, 128], strides = [1, 1]} : vector<2x512xf32> to vector<2x128xf32>
    %cst_106 = arith.constant 5.000000e-01 : f32
    %276 = vector.broadcast %cst_106 : f32 to vector<2x128xf32>
    %277 = arith.mulf %276, %275 : vector<2x128xf32>
    %278 = math.tanh %277 : vector<2x128xf32>
    %cst_107 = arith.constant 5.000000e-01 : f32
    %279 = vector.broadcast %cst_107 : f32 to vector<2x128xf32>
    %280 = arith.mulf %279, %278 : vector<2x128xf32>
    %cst_108 = arith.constant 5.000000e-01 : f32
    %281 = vector.broadcast %cst_108 : f32 to vector<2x128xf32>
    %282 = arith.addf %280, %281 : vector<2x128xf32>
    %283 = vector.extract_strided_slice %274 {offsets = [0, 128], sizes = [2, 128], strides = [1, 1]} : vector<2x512xf32> to vector<2x128xf32>
    %cst_109 = arith.constant 5.000000e-01 : f32
    %284 = vector.broadcast %cst_109 : f32 to vector<2x128xf32>
    %285 = arith.mulf %284, %283 : vector<2x128xf32>
    %286 = math.tanh %285 : vector<2x128xf32>
    %cst_110 = arith.constant 5.000000e-01 : f32
    %287 = vector.broadcast %cst_110 : f32 to vector<2x128xf32>
    %288 = arith.mulf %287, %286 : vector<2x128xf32>
    %cst_111 = arith.constant 5.000000e-01 : f32
    %289 = vector.broadcast %cst_111 : f32 to vector<2x128xf32>
    %290 = arith.addf %288, %289 : vector<2x128xf32>
    %291 = vector.extract_strided_slice %274 {offsets = [0, 256], sizes = [2, 128], strides = [1, 1]} : vector<2x512xf32> to vector<2x128xf32>
    %292 = math.tanh %291 : vector<2x128xf32>
    %293 = vector.extract_strided_slice %274 {offsets = [0, 384], sizes = [2, 128], strides = [1, 1]} : vector<2x512xf32> to vector<2x128xf32>
    %cst_112 = arith.constant 5.000000e-01 : f32
    %294 = vector.broadcast %cst_112 : f32 to vector<2x128xf32>
    %295 = arith.mulf %294, %293 : vector<2x128xf32>
    %296 = math.tanh %295 : vector<2x128xf32>
    %cst_113 = arith.constant 5.000000e-01 : f32
    %297 = vector.broadcast %cst_113 : f32 to vector<2x128xf32>
    %298 = arith.mulf %297, %296 : vector<2x128xf32>
    %cst_114 = arith.constant 5.000000e-01 : f32
    %299 = vector.broadcast %cst_114 : f32 to vector<2x128xf32>
    %300 = arith.addf %298, %299 : vector<2x128xf32>
    %301 = arith.mulf %290, %262 : vector<2x128xf32>
    %302 = arith.mulf %282, %292 : vector<2x128xf32>
    %303 = arith.addf %301, %302 : vector<2x128xf32>
    %304 = math.tanh %303 : vector<2x128xf32>
    %305 = arith.mulf %300, %304 : vector<2x128xf32>
    %306 = arith.index_cast %c6_i32 : i32 to index
    %c0_115 = arith.constant 0 : index
    %c0_116 = arith.constant 0 : index
    %307 = vector.load %arg5[%306, %c0_115, %c0_116] : memref<8x2x128xf32, #tpu.memory_space<vmem>>, vector<1x2x128xf32>
    %308 = vector.shape_cast %307 : vector<1x2x128xf32> to vector<2x128xf32>
    %309 = vector.shape_cast %305 : vector<2x128xf32> to vector<1x2x128xf32>
    tpu.vector_store %arg5[%306, %c0_115, %c0_116], %309 {strides = array<i32>} : memref<8x2x128xf32, #tpu.memory_space<vmem>>, vector<1x2x128xf32>,
    %c7_i32 = arith.constant 7 : i32
    %310 = arith.index_cast %c7_i32 : i32 to index
    %c0_117 = arith.constant 0 : index
    %c0_118 = arith.constant 0 : index
    %311 = vector.load %arg7[%310, %c0_117, %c0_118] : memref<8x2x512xf32, #tpu.memory_space<vmem>>, vector<1x2x512xf32>
    %312 = vector.shape_cast %311 : vector<1x2x512xf32> to vector<2x512xf32>
    %313 = arith.truncf %305 : vector<2x128xf32> to vector<2x128xbf16>
    %cst_119 = arith.constant dense<0.000000e+00> : vector<2x512xf32>
    %314 = tpu.matmul %313, %20, %cst_119 {dimension_numbers = #tpu.dot_dimension_numbers<[1], [0], [0], [1], [0, 0, 1, 1], [], []>} : vector<2x128xbf16>, vector<128x512xbf16>, vector<2x512xf32> -> vector<2x512xf32>
    %315 = arith.addf %312, %314 : vector<2x512xf32>
    %316 = vector.extract_strided_slice %315 {offsets = [0, 0], sizes = [2, 128], strides = [1, 1]} : vector<2x512xf32> to vector<2x128xf32>
    %cst_120 = arith.constant 5.000000e-01 : f32
    %317 = vector.broadcast %cst_120 : f32 to vector<2x128xf32>
    %318 = arith.mulf %317, %316 : vector<2x128xf32>
    %319 = math.tanh %318 : vector<2x128xf32>
    %cst_121 = arith.constant 5.000000e-01 : f32
    %320 = vector.broadcast %cst_121 : f32 to vector<2x128xf32>
    %321 = arith.mulf %320, %319 : vector<2x128xf32>
    %cst_122 = arith.constant 5.000000e-01 : f32
    %322 = vector.broadcast %cst_122 : f32 to vector<2x128xf32>
    %323 = arith.addf %321, %322 : vector<2x128xf32>
    %324 = vector.extract_strided_slice %315 {offsets = [0, 128], sizes = [2, 128], strides = [1, 1]} : vector<2x512xf32> to vector<2x128xf32>
    %cst_123 = arith.constant 5.000000e-01 : f32
    %325 = vector.broadcast %cst_123 : f32 to vector<2x128xf32>
    %326 = arith.mulf %325, %324 : vector<2x128xf32>
    %327 = math.tanh %326 : vector<2x128xf32>
    %cst_124 = arith.constant 5.000000e-01 : f32
    %328 = vector.broadcast %cst_124 : f32 to vector<2x128xf32>
    %329 = arith.mulf %328, %327 : vector<2x128xf32>
    %cst_125 = arith.constant 5.000000e-01 : f32
    %330 = vector.broadcast %cst_125 : f32 to vector<2x128xf32>
    %331 = arith.addf %329, %330 : vector<2x128xf32>
    %332 = vector.extract_strided_slice %315 {offsets = [0, 256], sizes = [2, 128], strides = [1, 1]} : vector<2x512xf32> to vector<2x128xf32>
    %333 = math.tanh %332 : vector<2x128xf32>
    %334 = vector.extract_strided_slice %315 {offsets = [0, 384], sizes = [2, 128], strides = [1, 1]} : vector<2x512xf32> to vector<2x128xf32>
    %cst_126 = arith.constant 5.000000e-01 : f32
    %335 = vector.broadcast %cst_126 : f32 to vector<2x128xf32>
    %336 = arith.mulf %335, %334 : vector<2x128xf32>
    %337 = math.tanh %336 : vector<2x128xf32>
    %cst_127 = arith.constant 5.000000e-01 : f32
    %338 = vector.broadcast %cst_127 : f32 to vector<2x128xf32>
    %339 = arith.mulf %338, %337 : vector<2x128xf32>
    %cst_128 = arith.constant 5.000000e-01 : f32
    %340 = vector.broadcast %cst_128 : f32 to vector<2x128xf32>
    %341 = arith.addf %339, %340 : vector<2x128xf32>
    %342 = arith.mulf %331, %303 : vector<2x128xf32>
    %343 = arith.mulf %323, %333 : vector<2x128xf32>
    %344 = arith.addf %342, %343 : vector<2x128xf32>
    %345 = math.tanh %344 : vector<2x128xf32>
    %346 = arith.mulf %341, %345 : vector<2x128xf32>
    %347 = arith.index_cast %c7_i32 : i32 to index
    %c0_129 = arith.constant 0 : index
    %c0_130 = arith.constant 0 : index
    %348 = vector.load %arg5[%347, %c0_129, %c0_130] : memref<8x2x128xf32, #tpu.memory_space<vmem>>, vector<1x2x128xf32>
    %349 = vector.shape_cast %348 : vector<1x2x128xf32> to vector<2x128xf32>
    %350 = vector.shape_cast %346 : vector<2x128xf32> to vector<1x2x128xf32>
    tpu.vector_store %arg5[%347, %c0_129, %c0_130], %350 {strides = array<i32>} : memref<8x2x128xf32, #tpu.memory_space<vmem>>, vector<1x2x128xf32>,
    %c8_i32 = arith.constant 8 : i32
    %c0_131 = arith.constant 0 : index
    %c0_132 = arith.constant 0 : index
    %351 = vector.load %arg8[%c0_131, %c0_132] : memref<2x128xf32, #tpu.memory_space<vmem>>, vector<2x128xf32>
    tpu.vector_store %arg8[%c0_131, %c0_132], %346 {strides = array<i32>} : memref<2x128xf32, #tpu.memory_space<vmem>>, vector<2x128xf32>,
    %c0_133 = arith.constant 0 : index
    %c0_134 = arith.constant 0 : index
    %352 = vector.load %arg9[%c0_133, %c0_134] : memref<2x128xf32, #tpu.memory_space<vmem>>, vector<2x128xf32>
    tpu.vector_store %arg9[%c0_133, %c0_134], %344 {strides = array<i32>} : memref<2x128xf32, #tpu.memory_space<vmem>>, vector<2x128xf32>,
    %c0_135 = arith.constant 0 : index
    %c0_136 = arith.constant 0 : index
    %353 = vector.load %arg9[%c0_135, %c0_136] : memref<2x128xf32, #tpu.memory_space<vmem>>, vector<2x128xf32>
    %c0_137 = arith.constant 0 : index
    %c0_138 = arith.constant 0 : index
    %354 = vector.load %arg6[%c0_137, %c0_138] : memref<2x128xf32, #tpu.memory_space<vmem>>, vector<2x128xf32>
    tpu.vector_store %arg6[%c0_137, %c0_138], %353 {strides = array<i32>} : memref<2x128xf32, #tpu.memory_space<vmem>>, vector<2x128xf32>,
    return
  }
  func.func @transform_0(%arg0: i32) -> (i32, i32, i32) {
    %c0_i32 = arith.constant 0 : i32
    %c0_i32_0 = arith.constant 0 : i32
    %c0_i32_1 = arith.constant 0 : i32
    return %c0_i32, %arg0, %c0_i32_0 : i32, i32, i32
  }
  func.func @transform_1(%arg0: i32) -> (i32, i32) {
    %c0_i32 = arith.constant 0 : i32
    %c0_i32_0 = arith.constant 0 : i32
    %c0_i32_1 = arith.constant 0 : i32
    return %c0_i32, %c0_i32_0 : i32, i32
  }
  func.func @transform_2(%arg0: i32) -> (i32, i32) {
    %c0_i32 = arith.constant 0 : i32
    %c0_i32_0 = arith.constant 0 : i32
    %c0_i32_1 = arith.constant 0 : i32
    return %c0_i32, %c0_i32_0 : i32, i32
  }
  func.func @transform_3(%arg0: i32) -> (i32, i32) {
    %c0_i32 = arith.constant 0 : i32
    %c0_i32_0 = arith.constant 0 : i32
    %c0_i32_1 = arith.constant 0 : i32
    return %c0_i32, %c0_i32_0 : i32, i32
  }
  func.func @transform_4(%arg0: i32) -> (i32, i32, i32) {
    %c0_i32 = arith.constant 0 : i32
    %c0_i32_0 = arith.constant 0 : i32
    %c0_i32_1 = arith.constant 0 : i32
    return %arg0, %c0_i32, %c0_i32_0 : i32, i32, i32
  }
  func.func @transform_5(%arg0: i32) -> (i32, i32) {
    %c0_i32 = arith.constant 0 : i32
    %c0_i32_0 = arith.constant 0 : i32
    %c0_i32_1 = arith.constant 0 : i32
    return %c0_i32, %c0_i32_0 : i32, i32
  }
}

</mosaic_0001>

<llo_original>
// kernel: tpu_custom_call.1
$region0: #{tpu_custom_call.1}
  #allocation0 [shape = 'u32[]', space=smem, size = 0x4, offset = 0x4, fixed_abs, tag = 'smem constant byte address 0x4 - core index']
  #allocation1 [shape = 'u32[72,128]{1,0:T(1,128)}', space=vmem, size = 0x9000, scoped, tag = 'internal scratch']
  #allocation2 [shape = 'f32[8,2,512]{2,1,0:T(2,128)}', space=vmem, size = 0x8000, scoped, tag = 'scratch operand']
  #allocation3 [shape = 'f32[2,128]{1,0:T(2,128)}', space=vmem, size = 0x400, scoped, tag = 'scratch operand']
  #allocation4 [shape = 'f32[2,128]{1,0:T(2,128)}', space=vmem, size = 0x400, scoped, tag = 'scratch operand']
  %s0 = inlined_call_operand.hbm [shape: f32[2,8,16], index: 0, kind: input, shape index: {}]
  %s1 = inlined_call_operand.hbm [shape: bf16[16,512], index: 1, kind: input, shape index: {}]
  %s2 = inlined_call_operand.hbm [shape: bf16[128,512], index: 2, kind: input, shape index: {}]
  %s3 = inlined_call_operand.hbm [shape: f32[1,512], index: 3, kind: input, shape index: {}]
  %s4 = inlined_call_operand.hbm [shape: f32[8,2,128], index: 4, kind: output, shape index: {0}]
  %s5 = inlined_call_operand.hbm [shape: f32[2,128], index: 5, kind: output, shape index: {1}]
  %6 = xla_tuple %s4, %s5
  %s7 = sld [smem:[#allocation0]]
  $region54: #{tpu_custom_call.1} parent=0
    _
  %s9 = ssub.s32 1, %s7
  %s10 = scalar_select 0, %s9, %s7
  $region1: #{tpu_custom_call.1} parent=0
    #allocation5 [shape = 'u8[8192]{0}', space=vmem, size = 0x2000, scoped, tag = 'input window, operand 0, single buffered']
    #allocation6 [shape = 's32[1]{0}', space=sflag, size = 0x4, scoped, tag = 'scoped memory for tpu_custom_call.1']
    #allocation7 [shape = 's32[1]{0}', space=sflag, size = 0x4, scoped, tag = 'scoped memory for tpu_custom_call.1']
    #allocation8 [shape = 'u8[16384]{0}', space=vmem, size = 0x4000, scoped, tag = 'input window, operand 1, single buffered']
    #allocation9 [shape = 's32[1]{0}', space=sflag, size = 0x4, scoped, tag = 'scoped memory for tpu_custom_call.1']
    #allocation10 [shape = 'u8[131072]{0}', space=vmem, size = 0x20000, scoped, tag = 'input window, operand 2, single buffered']
    #allocation11 [shape = 'u8[2048]{0}', space=vmem, size = 0x800, scoped, tag = 'input window, operand 3, single buffered']
    #allocation12 [shape = 's32[1]{0}', space=sflag, size = 0x4, scoped, tag = 'scoped memory for tpu_custom_call.1']
    #allocation13 [shape = 'u8[8192]{0}', space=vmem, size = 0x2000, scoped, tag = 'output window, operand 0, single buffered']
    #allocation14 [shape = 'u8[1024]{0}', space=vmem, size = 0x400, scoped, tag = 'output window, operand 1, single buffered']
    #allocation15 [shape = 's32[1]{0}', space=sflag, size = 0x4, scoped, tag = 'scoped memory for tpu_custom_call.1']
    %11 = vsyncpa [#allocation6], 0
    %12 = vsyncpa [#allocation9], 0
    %13 = vsyncpa [#allocation12], 0
    %14 = vsyncpa [#allocation7], 0
    %15 = vsyncpa [#allocation15], 0
    // Predicated region
    $region2: #{tpu_custom_call.1} parent=1 // pred_check
      _
    $region3: #{tpu_custom_call.1} parent=1 // pred_check_branch
      %17 = sbr.rel (0) target = $region5
    $region4: #{tpu_custom_call.1} parent=1 // pred_region
      %19 = vsyncadd [#allocation6], 0
      %s20 = sshll.u32 %s0, 4
      %s21 = int_to_ptr.hbm [resolvable:$true] %s20
      %s22 = sshll.u32 [#allocation5], 4
      %s23 = int_to_ptr.vmem [resolvable:$true] %s22
      %28 = dma.hbm_to_vmem [thread:$0]  %s21, 256, %s23, [#allocation6], 128, 128, 8
    $region5: #{tpu_custom_call.1} parent=1 // pred_fallthru
      _
    // Predicated region
    $region6: #{tpu_custom_call.1} parent=1 // pred_check
      _
    $region7: #{tpu_custom_call.1} parent=1 // pred_check_branch
      %30 = sbr.rel (0) target = $region9
    $region8: #{tpu_custom_call.1} parent=1 // pred_region
      %32 = vsyncadd [#allocation9], 0
      %s33 = sshll.u32 %s1, 4
      %s34 = int_to_ptr.hbm [resolvable:$true] %s33
      %s35 = sshll.u32 [#allocation8], 4
      %s36 = int_to_ptr.vmem [resolvable:$true] %s35
      %41 = dma.hbm_to_vmem [thread:$0]  %s34, 512, %s36, [#allocation9], 256, 256, 16
    $region9: #{tpu_custom_call.1} parent=1 // pred_fallthru
      _
    // Predicated region
    $region10: #{tpu_custom_call.1} parent=1 // pred_check
      _
    $region11: #{tpu_custom_call.1} parent=1 // pred_check_branch
      %43 = sbr.rel (0) target = $region13
    $region12: #{tpu_custom_call.1} parent=1 // pred_region
      %45 = vsyncadd [#allocation9], 0
      %s46 = sshll.u32 %s2, 4
      %s47 = int_to_ptr.hbm [resolvable:$true] %s46
      %s48 = sshll.u32 [#allocation10], 4
      %s49 = int_to_ptr.vmem [resolvable:$true] %s48
      %54 = dma.hbm_to_vmem [thread:$0]  %s47, 4096, %s49, [#allocation9], 256, 256, 16
    $region13: #{tpu_custom_call.1} parent=1 // pred_fallthru
      _
    // Predicated region
    $region14: #{tpu_custom_call.1} parent=1 // pred_check
      _
    $region15: #{tpu_custom_call.1} parent=1 // pred_check_branch
      %56 = sbr.rel (0) target = $region17
    $region16: #{tpu_custom_call.1} parent=1 // pred_region
      %58 = vsyncadd [#allocation12], 0
      %s60 = sshll.u32 %s3, 4
      %s61 = int_to_ptr.hbm [resolvable:$true] %s60
      %s62 = sshll.u32 [#allocation11], 4
      %s63 = int_to_ptr.vmem [resolvable:$true] %s62
      %65 = dma.hbm_to_vmem [thread:$0]  %s61, 64, %s63, [#allocation12]
    $region17: #{tpu_custom_call.1} parent=1 // pred_fallthru
      _
    // Predicated region
    $region18: #{tpu_custom_call.1} parent=1 // pred_check
      _
    $region19: #{tpu_custom_call.1} parent=1 // pred_check_branch
      %67 = sbr.rel (0) target = $region21
    $region20: #{tpu_custom_call.1} parent=1 // pred_region
      %69 = dma.done [#allocation6], 256
    $region21: #{tpu_custom_call.1} parent=1 // pred_fallthru
      _
    // Predicated region
    $region22: #{tpu_custom_call.1} parent=1 // pred_check
      _
    $region23: #{tpu_custom_call.1} parent=1 // pred_check_branch
      %71 = sbr.rel (0) target = $region25
    $region24: #{tpu_custom_call.1} parent=1 // pred_region
      %73 = dma.done [#allocation9], 512
    $region25: #{tpu_custom_call.1} parent=1 // pred_fallthru
      _
    // Predicated region
    $region26: #{tpu_custom_call.1} parent=1 // pred_check
      _
    $region27: #{tpu_custom_call.1} parent=1 // pred_check_branch
      %75 = sbr.rel (0) target = $region29
    $region28: #{tpu_custom_call.1} parent=1 // pred_region
      %77 = dma.done [#allocation9], 4096
    $region29: #{tpu_custom_call.1} parent=1 // pred_fallthru
      _
    // Predicated region
    $region30: #{tpu_custom_call.1} parent=1 // pred_check
      _
    $region31: #{tpu_custom_call.1} parent=1 // pred_check_branch
      %79 = sbr.rel (0) target = $region33
    $region32: #{tpu_custom_call.1} parent=1 // pred_region
      %81 = dma.done [#allocation12], 64
    $region33: #{tpu_custom_call.1} parent=1 // pred_fallthru
      _
    %p83 = scmp.eq.s32.totalorder 0, 0
    // Predicated region
    $region34: #{tpu_custom_call.1} parent=1 // pred_check
      %p84 = pneg %p83
    $region35: #{tpu_custom_call.1} parent=1 // pred_check_branch
      %86 = sbr.rel (%p84) target = $region37
    $region36: #{tpu_custom_call.1} parent=1 // pred_region
      %87 = vst [vmem:[#allocation3] sm:$0x3] 0.0
      %88 = vst [vmem:[#allocation4] sm:$0x3] 0.0
    $region37: #{tpu_custom_call.1} parent=1 // pred_fallthru
      _
    %v89 = vld [vmem:[#allocation5] sm:$0xff]
    %v90 = vld [vmem:[#allocation5 + $0x8] sm:$0xff]
    %v91 = vpack.c.bf16 %v90, %v89
    %v92 = vld [vmem:[#allocation8] sm:$0xff]
    %v93 = vld [vmem:[#allocation8 + $0x8] sm:$0xff]
    %v94 = vld [vmem:[#allocation8 + $0x10] sm:$0xff]
    %v95 = vld [vmem:[#allocation8 + $0x18] sm:$0xff]
    %v96 = vld [vmem:[#allocation11] sm:$0xf]
    %v98 = vperm.slane %v96, 0
    %v99 = vperm.slane %v96, 1
    %v100 = vperm.slane %v96, 2
    %v101 = vperm.slane %v96, 3
    %v110 = vunpack.c.l.b16 %v92
    %v111 = vunpack.c.h.b16 %v92
    %v112 = vunpack.c.l.b16 %v93
    %v113 = vunpack.c.h.b16 %v93
    %v114 = vunpack.c.l.b16 %v94
    %v115 = vunpack.c.h.b16 %v94
    %v116 = vunpack.c.l.b16 %v95
    %v117 = vunpack.c.h.b16 %v95
    %v118 = vpack.c.b16 %v114, %v110
    %v119 = vpack.c.b16 %v115, %v111
    %v120 = vpack.c.b16 %v116, %v112
    %v121 = vpack.c.b16 %v117, %v113
    %vm126 = vcmask 130048
    %v128 = vsel %vm126, %v91, 0
    %130 = vmatpush.bf16.msra.mxu0 0
    %131 = vmatpush.bf16.msra.mxu0 0
    %132 = vmatpush.bf16.msra.mxu0 0
    %133 = vmatpush.bf16.msra.mxu0 0
    %134 = vmatpush.bf16.msra.mxu0 0
    %135 = vmatpush.bf16.msra.mxu0 0
    %136 = vmatpush.bf16.msra.mxu0 0
    %137 = vmatpush.bf16.msra.mxu0 %v118
    %138 = vmatmul.bf16.gmra.mxu0 %v128
    %v139 = vpop.f32.mrf.mxu0
    %v140 = vadd.f32 %v98, %v139
    %v141 = vpop.f32.mrf.mxu0
    %v142 = vadd.f32 %v98, %v141
    %143 = vdwg.mxu0
    %144 = vmatpush.bf16.msra.mxu0 0
    %145 = vmatpush.bf16.msra.mxu0 0
    %146 = vmatpush.bf16.msra.mxu0 0
    %147 = vmatpush.bf16.msra.mxu0 0
    %148 = vmatpush.bf16.msra.mxu0 0
    %149 = vmatpush.bf16.msra.mxu0 0
    %150 = vmatpush.bf16.msra.mxu0 0
    %151 = vmatpush.bf16.msra.mxu0 %v119
    %152 = vmatmul.bf16.gmra.mxu0 %v128
    %v153 = vpop.f32.mrf.mxu0
    %v154 = vadd.f32 %v99, %v153
    %v155 = vpop.f32.mrf.mxu0
    %v156 = vadd.f32 %v99, %v155
    %157 = vdwg.mxu0
    %158 = vmatpush.bf16.msra.mxu0 0
    %159 = vmatpush.bf16.msra.mxu0 0
    %160 = vmatpush.bf16.msra.mxu0 0
    %161 = vmatpush.bf16.msra.mxu0 0
    %162 = vmatpush.bf16.msra.mxu0 0
    %163 = vmatpush.bf16.msra.mxu0 0
    %164 = vmatpush.bf16.msra.mxu0 0
    %165 = vmatpush.bf16.msra.mxu0 %v120
    %166 = vmatmul.bf16.gmra.mxu0 %v128
    %v167 = vpop.f32.mrf.mxu0
    %v168 = vadd.f32 %v100, %v167
    %v169 = vpop.f32.mrf.mxu0
    %v170 = vadd.f32 %v100, %v169
    %171 = vdwg.mxu0
    %172 = vmatpush.bf16.msra.mxu0 0
    %173 = vmatpush.bf16.msra.mxu0 0
    %174 = vmatpush.bf16.msra.mxu0 0
    %175 = vmatpush.bf16.msra.mxu0 0
    %176 = vmatpush.bf16.msra.mxu0 0
    %177 = vmatpush.bf16.msra.mxu0 0
    %178 = vmatpush.bf16.msra.mxu0 0
    %179 = vmatpush.bf16.msra.mxu0 %v121
    %180 = vmatmul.bf16.gmra.mxu0 %v128
    %v181 = vpop.f32.mrf.mxu0
    %v182 = vadd.f32 %v101, %v181
    %v183 = vpop.f32.mrf.mxu0
    %v184 = vadd.f32 %v101, %v183
    %185 = vdwg.mxu0
    %v190 = vrot.slane %v154, 7
    %v191 = vrot.slane %v168, 6
    %v192 = vrot.slane %v182, 5
    %vm193 = vcmask 1040384
    %v194 = vsel %vm193, %v140, %v190
    %vm195 = vcmask 1042434
    %v196 = vsel %vm195, %v191, %v192
    %vm197 = vcmask 1041408
    %v198 = vsel %vm197, %v194, %v196
    %vm199 = vcmask 1041409
    %v200 = vsel %vm199, %v140, %v190
    %vm201 = vcmask 1043459
    %v202 = vsel %vm201, %v191, %v192
    %vm203 = vcmask 1042433
    %v204 = vsel %vm203, %v200, %v202
    %v205 = vrot.slane %v204, 1
    %v206 = vsel %vm195, %v140, %v190
    %vm207 = vcmask 1044484
    %v208 = vsel %vm207, %v191, %v192
    %vm209 = vcmask 1043458
    %v210 = vsel %vm209, %v206, %v208
    %v211 = vrot.slane %v210, 2
    %v212 = vsel %vm201, %v140, %v190
    %vm213 = vcmask 1045509
    %v214 = vsel %vm213, %v191, %v192
    %vm215 = vcmask 1044483
    %v216 = vsel %vm215, %v212, %v214
    %v217 = vrot.slane %v216, 3
    %v218 = vsel %vm207, %v140, %v190
    %vm219 = vcmask 1046534
    %v220 = vsel %vm219, %v191, %v192
    %vm221 = vcmask 1045508
    %v222 = vsel %vm221, %v218, %v220
    %v223 = vrot.slane %v222, 4
    %v224 = vsel %vm213, %v140, %v190
    %vm225 = vcmask 1046528
    %v226 = vsel %vm225, %v192, %v191
    %vm227 = vcmask 1046533
    %v228 = vsel %vm227, %v224, %v226
    %v229 = vrot.slane %v228, 5
    %v230 = vsel %vm219, %v140, %v190
    %v231 = vsel %vm193, %v191, %v192
    %vm232 = vcmask 1045504
    %v233 = vsel %vm232, %v231, %v230
    %v234 = vrot.slane %v233, 6
    %v235 = vsel %vm225, %v190, %v140
    %v236 = vsel %vm199, %v191, %v192
    %vm237 = vcmask 1046529
    %v238 = vsel %vm237, %v236, %v235
    %v239 = vrot.slane %v238, 7
    %v248 = vlaneseq
    %vm249 = vcmp.ge.s32.totalorder %v248, 0
    %vm250 = vcmp.lt.s32.totalorder %v248, 512
    %vm251 = vmand %vm249, %vm250
    %252 = vst.msk [vmem:[#allocation2] ss:$2 sm:$0xf] %vm251, %v198
    %s253 = scalar_lea.vmem [#allocation2], 8
    %254 = vst.msk [vmem:[%s253] ss:$2 sm:$0xf] %vm251, %v205
    %s255 = scalar_lea.vmem [#allocation2], 16
    %256 = vst.msk [vmem:[%s255] ss:$2 sm:$0xf] %vm251, %v211
    %s257 = scalar_lea.vmem [#allocation2], 24
    %258 = vst.msk [vmem:[%s257] ss:$2 sm:$0xf] %vm251, %v217
    %s259 = scalar_lea.vmem [#allocation2], 32
    %260 = vst.msk [vmem:[%s259] ss:$2 sm:$0xf] %vm251, %v223
    %s261 = scalar_lea.vmem [#allocation2], 40
    %262 = vst.msk [vmem:[%s261] ss:$2 sm:$0xf] %vm251, %v229
    %s263 = scalar_lea.vmem [#allocation2], 48
    %264 = vst.msk [vmem:[%s263] ss:$2 sm:$0xf] %vm251, %v234
    %s265 = scalar_lea.vmem [#allocation2], 56
    %266 = vst.msk [vmem:[%s265] ss:$2 sm:$0xf] %vm251, %v239
    %v271 = vrot.slane %v156, 7
    %v272 = vrot.slane %v170, 6
    %v273 = vrot.slane %v184, 5
    %v274 = vsel %vm193, %v142, %v271
    %v275 = vsel %vm195, %v272, %v273
    %v276 = vsel %vm197, %v274, %v275
    %v277 = vsel %vm199, %v142, %v271
    %v278 = vsel %vm201, %v272, %v273
    %v279 = vsel %vm203, %v277, %v278
    %v280 = vrot.slane %v279, 1
    %v281 = vsel %vm195, %v142, %v271
    %v282 = vsel %vm207, %v272, %v273
    %v283 = vsel %vm209, %v281, %v282
    %v284 = vrot.slane %v283, 2
    %v285 = vsel %vm201, %v142, %v271
    %v286 = vsel %vm213, %v272, %v273
    %v287 = vsel %vm215, %v285, %v286
    %v288 = vrot.slane %v287, 3
    %v289 = vsel %vm207, %v142, %v271
    %v290 = vsel %vm219, %v272, %v273
    %v291 = vsel %vm221, %v289, %v290
    %v292 = vrot.slane %v291, 4
    %v293 = vsel %vm213, %v142, %v271
    %v294 = vsel %vm225, %v273, %v272
    %v295 = vsel %vm227, %v293, %v294
    %v296 = vrot.slane %v295, 5
    %v297 = vsel %vm219, %v142, %v271
    %v298 = vsel %vm193, %v272, %v273
    %v299 = vsel %vm232, %v298, %v297
    %v300 = vrot.slane %v299, 6
    %v301 = vsel %vm225, %v271, %v142
    %v302 = vsel %vm199, %v272, %v273
    %v303 = vsel %vm237, %v302, %v301
    %v304 = vrot.slane %v303, 7
    %s313 = scalar_lea.vmem [#allocation2], 1
    %314 = vst.msk [vmem:[%s313] ss:$2 sm:$0xf] %vm251, %v276
    %s315 = scalar_lea.vmem [#allocation2], 9
    %316 = vst.msk [vmem:[%s315] ss:$2 sm:$0xf] %vm251, %v280
    %s317 = scalar_lea.vmem [#allocation2], 17
    %318 = vst.msk [vmem:[%s317] ss:$2 sm:$0xf] %vm251, %v284
    %s319 = scalar_lea.vmem [#allocation2], 25
    %320 = vst.msk [vmem:[%s319] ss:$2 sm:$0xf] %vm251, %v288
    %s321 = scalar_lea.vmem [#allocation2], 33
    %322 = vst.msk [vmem:[%s321] ss:$2 sm:$0xf] %vm251, %v292
    %s323 = scalar_lea.vmem [#allocation2], 41
    %324 = vst.msk [vmem:[%s323] ss:$2 sm:$0xf] %vm251, %v296
    %s325 = scalar_lea.vmem [#allocation2], 49
    %326 = vst.msk [vmem:[%s325] ss:$2 sm:$0xf] %vm251, %v300
    %s327 = scalar_lea.vmem [#allocation2], 57
    %328 = vst.msk [vmem:[%s327] ss:$2 sm:$0xf] %vm251, %v304
    %v329 = vld [vmem:[#allocation10] sm:$0xff]
    %v330 = vld [vmem:[#allocation10 + $0x8] sm:$0xff]
    %v331 = vld [vmem:[#allocation10 + $0x10] sm:$0xff]
    %v332 = vld [vmem:[#allocation10 + $0x18] sm:$0xff]
    %v333 = vld [vmem:[#allocation10 + $0x20] sm:$0xff]
    %v334 = vld [vmem:[#allocation10 + $0x28] sm:$0xff]
    %v335 = vld [vmem:[#allocation10 + $0x30] sm:$0xff]
    %v336 = vld [vmem:[#allocation10 + $0x38] sm:$0xff]
    %v337 = vld [vmem:[#allocation10 + $0x40] sm:$0xff]
    %v338 = vld [vmem:[#allocation10 + $0x48] sm:$0xff]
    %v339 = vld [vmem:[#allocation10 + $0x50] sm:$0xff]
    %v340 = vld [vmem:[#allocation10 + $0x58] sm:$0xff]
    %v341 = vld [vmem:[#allocation10 + $0x60] sm:$0xff]
    %v342 = vld [vmem:[#allocation10 + $0x68] sm:$0xff]
    %v343 = vld [vmem:[#allocation10 + $0x70] sm:$0xff]
    %v344 = vld [vmem:[#allocation10 + $0x78] sm:$0xff]
    %v345 = vld [vmem:[#allocation10 + $0x80] sm:$0xff]
    %v346 = vld [vmem:[#allocation10 + $0x88] sm:$0xff]
    %v347 = vld [vmem:[#allocation10 + $0x90] sm:$0xff]
    %v348 = vld [vmem:[#allocation10 + $0x98] sm:$0xff]
    %v349 = vld [vmem:[#allocation10 + $0xa0] sm:$0xff]
    %v350 = vld [vmem:[#allocation10 + $0xa8] sm:$0xff]
    %v351 = vld [vmem:[#allocation10 + $0xb0] sm:$0xff]
    %v352 = vld [vmem:[#allocation10 + $0xb8] sm:$0xff]
    %v353 = vld [vmem:[#allocation10 + $0xc0] sm:$0xff]
    %v354 = vld [vmem:[#allocation10 + $0xc8] sm:$0xff]
    %v355 = vld [vmem:[#allocation10 + $0xd0] sm:$0xff]
    %v356 = vld [vmem:[#allocation10 + $0xd8] sm:$0xff]
    %v357 = vld [vmem:[#allocation10 + $0xe0] sm:$0xff]
    %v358 = vld [vmem:[#allocation10 + $0xe8] sm:$0xff]
    %v359 = vld [vmem:[#allocation10 + $0xf0] sm:$0xff]
    %v360 = vld [vmem:[#allocation10 + $0xf8] sm:$0xff]
    %v361 = vld [vmem:[#allocation3] sm:$0x3]
    %v362 = vld [vmem:[#allocation4] sm:$0x3]
    %v363 = vld [vmem:[#allocation2] sm:$0xff]
    %v364 = vpack.c.bf16 %v361, %v361
    %v397 = vunpack.c.l.b16 %v329
    %v398 = vunpack.c.h.b16 %v329
    %v399 = vunpack.c.l.b16 %v330
    %v400 = vunpack.c.h.b16 %v330
    %v401 = vunpack.c.l.b16 %v331
    %v402 = vunpack.c.h.b16 %v331
    %v403 = vunpack.c.l.b16 %v332
    %v404 = vunpack.c.h.b16 %v332
    %v405 = vunpack.c.l.b16 %v333
    %v406 = vunpack.c.h.b16 %v333
    %v407 = vunpack.c.l.b16 %v334
    %v408 = vunpack.c.h.b16 %v334
    %v409 = vunpack.c.l.b16 %v335
    %v410 = vunpack.c.h.b16 %v335
    %v411 = vunpack.c.l.b16 %v336
    %v412 = vunpack.c.h.b16 %v336
    %v413 = vunpack.c.l.b16 %v337
    %v414 = vunpack.c.h.b16 %v337
    %v415 = vunpack.c.l.b16 %v338
    %v416 = vunpack.c.h.b16 %v338
    %v417 = vunpack.c.l.b16 %v339
    %v418 = vunpack.c.h.b16 %v339
    %v419 = vunpack.c.l.b16 %v340
    %v420 = vunpack.c.h.b16 %v340
    %v421 = vunpack.c.l.b16 %v341
    %v422 = vunpack.c.h.b16 %v341
    %v423 = vunpack.c.l.b16 %v342
    %v424 = vunpack.c.h.b16 %v342
    %v425 = vunpack.c.l.b16 %v343
    %v426 = vunpack.c.h.b16 %v343
    %v427 = vunpack.c.l.b16 %v344
    %v428 = vunpack.c.h.b16 %v344
    %v429 = vunpack.c.l.b16 %v345
    %v430 = vunpack.c.h.b16 %v345
    %v431 = vunpack.c.l.b16 %v346
    %v432 = vunpack.c.h.b16 %v346
    %v433 = vunpack.c.l.b16 %v347
    %v434 = vunpack.c.h.b16 %v347
    %v435 = vunpack.c.l.b16 %v348
    %v436 = vunpack.c.h.b16 %v348
    %v437 = vunpack.c.l.b16 %v349
    %v438 = vunpack.c.h.b16 %v349
    %v439 = vunpack.c.l.b16 %v350
    %v440 = vunpack.c.h.b16 %v350
    %v441 = vunpack.c.l.b16 %v351
    %v442 = vunpack.c.h.b16 %v351
    %v443 = vunpack.c.l.b16 %v352
    %v444 = vunpack.c.h.b16 %v352
    %v445 = vunpack.c.l.b16 %v353
    %v446 = vunpack.c.h.b16 %v353
    %v447 = vunpack.c.l.b16 %v354
    %v448 = vunpack.c.h.b16 %v354
    %v449 = vunpack.c.l.b16 %v355
    %v450 = vunpack.c.h.b16 %v355
    %v451 = vunpack.c.l.b16 %v356
    %v452 = vunpack.c.h.b16 %v356
    %v453 = vunpack.c.l.b16 %v357
    %v454 = vunpack.c.h.b16 %v357
    %v455 = vunpack.c.l.b16 %v358
    %v456 = vunpack.c.h.b16 %v358
    %v457 = vunpack.c.l.b16 %v359
    %v458 = vunpack.c.h.b16 %v359
    %v459 = vunpack.c.l.b16 %v360
    %v460 = vunpack.c.h.b16 %v360
    %v461 = vpack.c.b16 %v401, %v397
    %v462 = vpack.c.b16 %v402, %v398
    %v463 = vpack.c.b16 %v403, %v399
    %v464 = vpack.c.b16 %v404, %v400
    %v465 = vpack.c.b16 %v409, %v405
    %v466 = vpack.c.b16 %v410, %v406
    %v467 = vpack.c.b16 %v411, %v407
    %v468 = vpack.c.b16 %v412, %v408
    %v469 = vpack.c.b16 %v417, %v413
    %v470 = vpack.c.b16 %v418, %v414
    %v471 = vpack.c.b16 %v419, %v415
    %v472 = vpack.c.b16 %v420, %v416
    %v473 = vpack.c.b16 %v425, %v421
    %v474 = vpack.c.b16 %v426, %v422
    %v475 = vpack.c.b16 %v427, %v423
    %v476 = vpack.c.b16 %v428, %v424
    %v477 = vpack.c.b16 %v433, %v429
    %v478 = vpack.c.b16 %v434, %v430
    %v479 = vpack.c.b16 %v435, %v431
    %v480 = vpack.c.b16 %v436, %v432
    %v481 = vpack.c.b16 %v441, %v437
    %v482 = vpack.c.b16 %v442, %v438
    %v483 = vpack.c.b16 %v443, %v439
    %v484 = vpack.c.b16 %v444, %v440
    %v485 = vpack.c.b16 %v449, %v445
    %v486 = vpack.c.b16 %v450, %v446
    %v487 = vpack.c.b16 %v451, %v447
    %v488 = vpack.c.b16 %v452, %v448
    %v489 = vpack.c.b16 %v457, %v453
    %v490 = vpack.c.b16 %v458, %v454
    %v491 = vpack.c.b16 %v459, %v455
    %v492 = vpack.c.b16 %v460, %v456
    %525 = vmatpush.bf16.msra.mxu0 %v489
    %526 = vmatpush.bf16.msra.mxu0 %v485
    %527 = vmatpush.bf16.msra.mxu0 %v481
    %528 = vmatpush.bf16.msra.mxu0 %v477
    %529 = vmatpush.bf16.msra.mxu0 %v473
    %530 = vmatpush.bf16.msra.mxu0 %v469
    %531 = vmatpush.bf16.msra.mxu0 %v465
    %532 = vmatpush.bf16.msra.mxu0 %v461
    %533 = vmatmul.bf16.gmra.mxu0 %v364
    %v534 = vpop.f32.mrf.mxu0
    %v535 = vadd.f32 0.0, %v534
    %v536 = vpop.f32.mrf.mxu0
    %537 = vdwg.mxu0
    %538 = vmatpush.bf16.msra.mxu0 %v490
    %539 = vmatpush.bf16.msra.mxu0 %v486
    %540 = vmatpush.bf16.msra.mxu0 %v482
    %541 = vmatpush.bf16.msra.mxu0 %v478
    %542 = vmatpush.bf16.msra.mxu0 %v474
    %543 = vmatpush.bf16.msra.mxu0 %v470
    %544 = vmatpush.bf16.msra.mxu0 %v466
    %545 = vmatpush.bf16.msra.mxu0 %v462
    %546 = vmatmul.bf16.gmra.mxu0 %v364
    %v547 = vpop.f32.mrf.mxu0
    %v548 = vadd.f32 0.0, %v547
    %v549 = vpop.f32.mrf.mxu0
    %550 = vdwg.mxu0
    %551 = vmatpush.bf16.msra.mxu0 %v491
    %552 = vmatpush.bf16.msra.mxu0 %v487
    %553 = vmatpush.bf16.msra.mxu0 %v483
    %554 = vmatpush.bf16.msra.mxu0 %v479
    %555 = vmatpush.bf16.msra.mxu0 %v475
    %556 = vmatpush.bf16.msra.mxu0 %v471
    %557 = vmatpush.bf16.msra.mxu0 %v467
    %558 = vmatpush.bf16.msra.mxu0 %v463
    %559 = vmatmul.bf16.gmra.mxu0 %v364
    %v560 = vpop.f32.mrf.mxu0
    %v561 = vadd.f32 0.0, %v560
    %v562 = vpop.f32.mrf.mxu0
    %563 = vdwg.mxu0
    %564 = vmatpush.bf16.msra.mxu0 %v492
    %565 = vmatpush.bf16.msra.mxu0 %v488
    %566 = vmatpush.bf16.msra.mxu0 %v484
    %567 = vmatpush.bf16.msra.mxu0 %v480
    %568 = vmatpush.bf16.msra.mxu0 %v476
    %569 = vmatpush.bf16.msra.mxu0 %v472
    %570 = vmatpush.bf16.msra.mxu0 %v468
    %571 = vmatpush.bf16.msra.mxu0 %v464
    %572 = vmatmul.bf16.gmra.mxu0 %v364
    %v573 = vpop.f32.mrf.mxu0
    %v574 = vadd.f32 0.0, %v573
    %v575 = vpop.f32.mrf.mxu0
    %576 = vdwg.mxu0
    %v581 = vrot.slane %v548, 6
    %v582 = vrot.slane %v561, 4
    %v583 = vrot.slane %v574, 2
    %v584 = vsel %vm197, %v535, %v581
    %v585 = vsel %vm221, %v582, %v583
    %vm586 = vcmask 1043456
    %v587 = vsel %vm586, %v584, %v585
    %v589 = vadd.f32 %v363, %v587
    %v590 = vmul.f32 %v589, 0.5
    %v591 = vtanh.pop %v590
    %v592 = vmul.f32 %v591, 0.5
    %v593 = vadd.f32 %v592, 0.5
    %v595 = vrot.slane %v589, 2
    %v597 = vmul.f32 %v595, 0.5
    %v598 = vtanh.pop %v597
    %v599 = vmul.f32 %v598, 0.5
    %v600 = vadd.f32 %v599, 0.5
    %v601 = vrot.slane %v589, 4
    %v603 = vtanh.pop %v601
    %v604 = vrot.slane %v589, 6
    %v606 = vmul.f32 %v604, 0.5
    %v607 = vtanh.pop %v606
    %v608 = vmul.f32 %v607, 0.5
    %v609 = vadd.f32 %v608, 0.5
    %v610 = vmul.f32 %v600, %v362
    %v611 = vmul.f32 %v593, %v603
    %v612 = vadd.f32 %v610, %v611
    %v613 = vtanh.pop %v612
    %v614 = vmul.f32 %v609, %v613
    %615 = vst [vmem:[#allocation13] sm:$0x3] %v614
    %s616 = scalar_lea.vmem [#allocation2], 8
    %v617 = vld [vmem:[%s616] sm:$0xff]
    %v618 = vpack.c.bf16 %v614, %v614
    %619 = vmatpush.bf16.msra.mxu0 %v489
    %620 = vmatpush.bf16.msra.mxu0 %v485
    %621 = vmatpush.bf16.msra.mxu0 %v481
    %622 = vmatpush.bf16.msra.mxu0 %v477
    %623 = vmatpush.bf16.msra.mxu0 %v473
    %624 = vmatpush.bf16.msra.mxu0 %v469
    %625 = vmatpush.bf16.msra.mxu0 %v465
    %626 = vmatpush.bf16.msra.mxu0 %v461
    %627 = vmatmul.bf16.gmra.mxu0 %v618
    %v628 = vpop.f32.mrf.mxu0
    %v629 = vadd.f32 0.0, %v628
    %v630 = vpop.f32.mrf.mxu0
    %631 = vdwg.mxu0
    %632 = vmatpush.bf16.msra.mxu0 %v490
    %633 = vmatpush.bf16.msra.mxu0 %v486
    %634 = vmatpush.bf16.msra.mxu0 %v482
    %635 = vmatpush.bf16.msra.mxu0 %v478
    %636 = vmatpush.bf16.msra.mxu0 %v474
    %637 = vmatpush.bf16.msra.mxu0 %v470
    %638 = vmatpush.bf16.msra.mxu0 %v466
    %639 = vmatpush.bf16.msra.mxu0 %v462
    %640 = vmatmul.bf16.gmra.mxu0 %v618
    %v641 = vpop.f32.mrf.mxu0
    %v642 = vadd.f32 0.0, %v641
    %v643 = vpop.f32.mrf.mxu0
    %644 = vdwg.mxu0
    %645 = vmatpush.bf16.msra.mxu0 %v491
    %646 = vmatpush.bf16.msra.mxu0 %v487
    %647 = vmatpush.bf16.msra.mxu0 %v483
    %648 = vmatpush.bf16.msra.mxu0 %v479
    %649 = vmatpush.bf16.msra.mxu0 %v475
    %650 = vmatpush.bf16.msra.mxu0 %v471
    %651 = vmatpush.bf16.msra.mxu0 %v467
    %652 = vmatpush.bf16.msra.mxu0 %v463
    %653 = vmatmul.bf16.gmra.mxu0 %v618
    %v654 = vpop.f32.mrf.mxu0
    %v655 = vadd.f32 0.0, %v654
    %v656 = vpop.f32.mrf.mxu0
    %657 = vdwg.mxu0
    %658 = vmatpush.bf16.msra.mxu0 %v492
    %659 = vmatpush.bf16.msra.mxu0 %v488
    %660 = vmatpush.bf16.msra.mxu0 %v484
    %661 = vmatpush.bf16.msra.mxu0 %v480
    %662 = vmatpush.bf16.msra.mxu0 %v476
    %663 = vmatpush.bf16.msra.mxu0 %v472
    %664 = vmatpush.bf16.msra.mxu0 %v468
    %665 = vmatpush.bf16.msra.mxu0 %v464
    %666 = vmatmul.bf16.gmra.mxu0 %v618
    %v667 = vpop.f32.mrf.mxu0
    %v668 = vadd.f32 0.0, %v667
    %v669 = vpop.f32.mrf.mxu0
    %670 = vdwg.mxu0
    %v675 = vrot.slane %v642, 6
    %v676 = vrot.slane %v655, 4
    %v677 = vrot.slane %v668, 2
    %v678 = vsel %vm197, %v629, %v675
    %v679 = vsel %vm221, %v676, %v677
    %v680 = vsel %vm586, %v678, %v679
    %v682 = vadd.f32 %v617, %v680
    %v683 = vmul.f32 %v682, 0.5
    %v684 = vtanh.pop %v683
    %v685 = vmul.f32 %v684, 0.5
    %v686 = vadd.f32 %v685, 0.5
    %v688 = vrot.slane %v682, 2
    %v690 = vmul.f32 %v688, 0.5
    %v691 = vtanh.pop %v690
    %v692 = vmul.f32 %v691, 0.5
    %v693 = vadd.f32 %v692, 0.5
    %v694 = vrot.slane %v682, 4
    %v696 = vtanh.pop %v694
    %v697 = vrot.slane %v682, 6
    %v699 = vmul.f32 %v697, 0.5
    %v700 = vtanh.pop %v699
    %v701 = vmul.f32 %v700, 0.5
    %v702 = vadd.f32 %v701, 0.5
    %v703 = vmul.f32 %v693, %v612
    %v704 = vmul.f32 %v686, %v696
    %v705 = vadd.f32 %v703, %v704
    %v706 = vtanh.pop %v705
    %v707 = vmul.f32 %v702, %v706
    %s708 = scalar_lea.vmem [#allocation13], 2
    %709 = vst [vmem:[%s708] sm:$0x3] %v707
    %s710 = scalar_lea.vmem [#allocation2], 16
    %v711 = vld [vmem:[%s710] sm:$0xff]
    %v712 = vpack.c.bf16 %v707, %v707
    %713 = vmatpush.bf16.msra.mxu0 %v489
    %714 = vmatpush.bf16.msra.mxu0 %v485
    %715 = vmatpush.bf16.msra.mxu0 %v481
    %716 = vmatpush.bf16.msra.mxu0 %v477
    %717 = vmatpush.bf16.msra.mxu0 %v473
    %718 = vmatpush.bf16.msra.mxu0 %v469
    %719 = vmatpush.bf16.msra.mxu0 %v465
    %720 = vmatpush.bf16.msra.mxu0 %v461
    %721 = vmatmul.bf16.gmra.mxu0 %v712
    %v722 = vpop.f32.mrf.mxu0
    %v723 = vadd.f32 0.0, %v722
    %v724 = vpop.f32.mrf.mxu0
    %725 = vdwg.mxu0
    %726 = vmatpush.bf16.msra.mxu0 %v490
    %727 = vmatpush.bf16.msra.mxu0 %v486
    %728 = vmatpush.bf16.msra.mxu0 %v482
    %729 = vmatpush.bf16.msra.mxu0 %v478
    %730 = vmatpush.bf16.msra.mxu0 %v474
    %731 = vmatpush.bf16.msra.mxu0 %v470
    %732 = vmatpush.bf16.msra.mxu0 %v466
    %733 = vmatpush.bf16.msra.mxu0 %v462
    %734 = vmatmul.bf16.gmra.mxu0 %v712
    %v735 = vpop.f32.mrf.mxu0
    %v736 = vadd.f32 0.0, %v735
    %v737 = vpop.f32.mrf.mxu0
    %738 = vdwg.mxu0
    %739 = vmatpush.bf16.msra.mxu0 %v491
    %740 = vmatpush.bf16.msra.mxu0 %v487
    %741 = vmatpush.bf16.msra.mxu0 %v483
    %742 = vmatpush.bf16.msra.mxu0 %v479
    %743 = vmatpush.bf16.msra.mxu0 %v475
    %744 = vmatpush.bf16.msra.mxu0 %v471
    %745 = vmatpush.bf16.msra.mxu0 %v467
    %746 = vmatpush.bf16.msra.mxu0 %v463
    %747 = vmatmul.bf16.gmra.mxu0 %v712
    %v748 = vpop.f32.mrf.mxu0
    %v749 = vadd.f32 0.0, %v748
    %v750 = vpop.f32.mrf.mxu0
    %751 = vdwg.mxu0
    %752 = vmatpush.bf16.msra.mxu0 %v492
    %753 = vmatpush.bf16.msra.mxu0 %v488
    %754 = vmatpush.bf16.msra.mxu0 %v484
    %755 = vmatpush.bf16.msra.mxu0 %v480
    %756 = vmatpush.bf16.msra.mxu0 %v476
    %757 = vmatpush.bf16.msra.mxu0 %v472
    %758 = vmatpush.bf16.msra.mxu0 %v468
    %759 = vmatpush.bf16.msra.mxu0 %v464
    %760 = vmatmul.bf16.gmra.mxu0 %v712
    %v761 = vpop.f32.mrf.mxu0
    %v762 = vadd.f32 0.0, %v761
    %v763 = vpop.f32.mrf.mxu0
    %764 = vdwg.mxu0
    %v769 = vrot.slane %v736, 6
    %v770 = vrot.slane %v749, 4
    %v771 = vrot.slane %v762, 2
    %v772 = vsel %vm197, %v723, %v769
    %v773 = vsel %vm221, %v770, %v771
    %v774 = vsel %vm586, %v772, %v773
    %v776 = vadd.f32 %v711, %v774
    %v777 = vmul.f32 %v776, 0.5
    %v778 = vtanh.pop %v777
    %v779 = vmul.f32 %v778, 0.5
    %v780 = vadd.f32 %v779, 0.5
    %v782 = vrot.slane %v776, 2
    %v784 = vmul.f32 %v782, 0.5
    %v785 = vtanh.pop %v784
    %v786 = vmul.f32 %v785, 0.5
    %v787 = vadd.f32 %v786, 0.5
    %v788 = vrot.slane %v776, 4
    %v790 = vtanh.pop %v788
    %v791 = vrot.slane %v776, 6
    %v793 = vmul.f32 %v791, 0.5
    %v794 = vtanh.pop %v793
    %v795 = vmul.f32 %v794, 0.5
    %v796 = vadd.f32 %v795, 0.5
    %v797 = vmul.f32 %v787, %v705
    %v798 = vmul.f32 %v780, %v790
    %v799 = vadd.f32 %v797, %v798
    %v800 = vtanh.pop %v799
    %v801 = vmul.f32 %v796, %v800
    %s802 = scalar_lea.vmem [#allocation13], 4
    %803 = vst [vmem:[%s802] sm:$0x3] %v801
    %s804 = scalar_lea.vmem [#allocation2], 24
    %v805 = vld [vmem:[%s804] sm:$0xff]
    %v806 = vpack.c.bf16 %v801, %v801
    %807 = vmatpush.bf16.msra.mxu0 %v489
    %808 = vmatpush.bf16.msra.mxu0 %v485
    %809 = vmatpush.bf16.msra.mxu0 %v481
    %810 = vmatpush.bf16.msra.mxu0 %v477
    %811 = vmatpush.bf16.msra.mxu0 %v473
    %812 = vmatpush.bf16.msra.mxu0 %v469
    %813 = vmatpush.bf16.msra.mxu0 %v465
    %814 = vmatpush.bf16.msra.mxu0 %v461
    %815 = vmatmul.bf16.gmra.mxu0 %v806
    %v816 = vpop.f32.mrf.mxu0
    %v817 = vadd.f32 0.0, %v816
    %v818 = vpop.f32.mrf.mxu0
    %819 = vdwg.mxu0
    %820 = vmatpush.bf16.msra.mxu0 %v490
    %821 = vmatpush.bf16.msra.mxu0 %v486
    %822 = vmatpush.bf16.msra.mxu0 %v482
    %823 = vmatpush.bf16.msra.mxu0 %v478
    %824 = vmatpush.bf16.msra.mxu0 %v474
    %825 = vmatpush.bf16.msra.mxu0 %v470
    %826 = vmatpush.bf16.msra.mxu0 %v466
    %827 = vmatpush.bf16.msra.mxu0 %v462
    %828 = vmatmul.bf16.gmra.mxu0 %v806
    %v829 = vpop.f32.mrf.mxu0
    %v830 = vadd.f32 0.0, %v829
    %v831 = vpop.f32.mrf.mxu0
    %832 = vdwg.mxu0
    %833 = vmatpush.bf16.msra.mxu0 %v491
    %834 = vmatpush.bf16.msra.mxu0 %v487
    %835 = vmatpush.bf16.msra.mxu0 %v483
    %836 = vmatpush.bf16.msra.mxu0 %v479
    %837 = vmatpush.bf16.msra.mxu0 %v475
    %838 = vmatpush.bf16.msra.mxu0 %v471
    %839 = vmatpush.bf16.msra.mxu0 %v467
    %840 = vmatpush.bf16.msra.mxu0 %v463
    %841 = vmatmul.bf16.gmra.mxu0 %v806
    %v842 = vpop.f32.mrf.mxu0
    %v843 = vadd.f32 0.0, %v842
    %v844 = vpop.f32.mrf.mxu0
    %845 = vdwg.mxu0
    %846 = vmatpush.bf16.msra.mxu0 %v492
    %847 = vmatpush.bf16.msra.mxu0 %v488
    %848 = vmatpush.bf16.msra.mxu0 %v484
    %849 = vmatpush.bf16.msra.mxu0 %v480
    %850 = vmatpush.bf16.msra.mxu0 %v476
    %851 = vmatpush.bf16.msra.mxu0 %v472
    %852 = vmatpush.bf16.msra.mxu0 %v468
    %853 = vmatpush.bf16.msra.mxu0 %v464
    %854 = vmatmul.bf16.gmra.mxu0 %v806
    %v855 = vpop.f32.mrf.mxu0
    %v856 = vadd.f32 0.0, %v855
    %v857 = vpop.f32.mrf.mxu0
    %858 = vdwg.mxu0
    %v863 = vrot.slane %v830, 6
    %v864 = vrot.slane %v843, 4
    %v865 = vrot.slane %v856, 2
    %v866 = vsel %vm197, %v817, %v863
    %v867 = vsel %vm221, %v864, %v865
    %v868 = vsel %vm586, %v866, %v867
    %v870 = vadd.f32 %v805, %v868
    %v871 = vmul.f32 %v870, 0.5
    %v872 = vtanh.pop %v871
    %v873 = vmul.f32 %v872, 0.5
    %v874 = vadd.f32 %v873, 0.5
    %v876 = vrot.slane %v870, 2
    %v878 = vmul.f32 %v876, 0.5
    %v879 = vtanh.pop %v878
    %v880 = vmul.f32 %v879, 0.5
    %v881 = vadd.f32 %v880, 0.5
    %v882 = vrot.slane %v870, 4
    %v884 = vtanh.pop %v882
    %v885 = vrot.slane %v870, 6
    %v887 = vmul.f32 %v885, 0.5
    %v888 = vtanh.pop %v887
    %v889 = vmul.f32 %v888, 0.5
    %v890 = vadd.f32 %v889, 0.5
    %v891 = vmul.f32 %v881, %v799
    %v892 = vmul.f32 %v874, %v884
    %v893 = vadd.f32 %v891, %v892
    %v894 = vtanh.pop %v893
    %v895 = vmul.f32 %v890, %v894
    %s896 = scalar_lea.vmem [#allocation13], 6
    %897 = vst [vmem:[%s896] sm:$0x3] %v895
    %s898 = scalar_lea.vmem [#allocation2], 32
    %v899 = vld [vmem:[%s898] sm:$0xff]
    %v900 = vpack.c.bf16 %v895, %v895
    %901 = vmatpush.bf16.msra.mxu0 %v489
    %902 = vmatpush.bf16.msra.mxu0 %v485
    %903 = vmatpush.bf16.msra.mxu0 %v481
    %904 = vmatpush.bf16.msra.mxu0 %v477
    %905 = vmatpush.bf16.msra.mxu0 %v473
    %906 = vmatpush.bf16.msra.mxu0 %v469
    %907 = vmatpush.bf16.msra.mxu0 %v465
    %908 = vmatpush.bf16.msra.mxu0 %v461
    %909 = vmatmul.bf16.gmra.mxu0 %v900
    %v910 = vpop.f32.mrf.mxu0
    %v911 = vadd.f32 0.0, %v910
    %v912 = vpop.f32.mrf.mxu0
    %913 = vdwg.mxu0
    %914 = vmatpush.bf16.msra.mxu0 %v490
    %915 = vmatpush.bf16.msra.mxu0 %v486
    %916 = vmatpush.bf16.msra.mxu0 %v482
    %917 = vmatpush.bf16.msra.mxu0 %v478
    %918 = vmatpush.bf16.msra.mxu0 %v474
    %919 = vmatpush.bf16.msra.mxu0 %v470
    %920 = vmatpush.bf16.msra.mxu0 %v466
    %921 = vmatpush.bf16.msra.mxu0 %v462
    %922 = vmatmul.bf16.gmra.mxu0 %v900
    %v923 = vpop.f32.mrf.mxu0
    %v924 = vadd.f32 0.0, %v923
    %v925 = vpop.f32.mrf.mxu0
    %926 = vdwg.mxu0
    %927 = vmatpush.bf16.msra.mxu0 %v491
    %928 = vmatpush.bf16.msra.mxu0 %v487
    %929 = vmatpush.bf16.msra.mxu0 %v483
    %930 = vmatpush.bf16.msra.mxu0 %v479
    %931 = vmatpush.bf16.msra.mxu0 %v475
    %932 = vmatpush.bf16.msra.mxu0 %v471
    %933 = vmatpush.bf16.msra.mxu0 %v467
    %934 = vmatpush.bf16.msra.mxu0 %v463
    %935 = vmatmul.bf16.gmra.mxu0 %v900
    %v936 = vpop.f32.mrf.mxu0
    %v937 = vadd.f32 0.0, %v936
    %v938 = vpop.f32.mrf.mxu0
    %939 = vdwg.mxu0
    %940 = vmatpush.bf16.msra.mxu0 %v492
    %941 = vmatpush.bf16.msra.mxu0 %v488
    %942 = vmatpush.bf16.msra.mxu0 %v484
    %943 = vmatpush.bf16.msra.mxu0 %v480
    %944 = vmatpush.bf16.msra.mxu0 %v476
    %945 = vmatpush.bf16.msra.mxu0 %v472
    %946 = vmatpush.bf16.msra.mxu0 %v468
    %947 = vmatpush.bf16.msra.mxu0 %v464
    %948 = vmatmul.bf16.gmra.mxu0 %v900
    %v949 = vpop.f32.mrf.mxu0
    %v950 = vadd.f32 0.0, %v949
    %v951 = vpop.f32.mrf.mxu0
    %952 = vdwg.mxu0
    %v957 = vrot.slane %v924, 6
    %v958 = vrot.slane %v937, 4
    %v959 = vrot.slane %v950, 2
    %v960 = vsel %vm197, %v911, %v957
    %v961 = vsel %vm221, %v958, %v959
    %v962 = vsel %vm586, %v960, %v961
    %v964 = vadd.f32 %v899, %v962
    %v965 = vmul.f32 %v964, 0.5
    %v966 = vtanh.pop %v965
    %v967 = vmul.f32 %v966, 0.5
    %v968 = vadd.f32 %v967, 0.5
    %v970 = vrot.slane %v964, 2
    %v972 = vmul.f32 %v970, 0.5
    %v973 = vtanh.pop %v972
    %v974 = vmul.f32 %v973, 0.5
    %v975 = vadd.f32 %v974, 0.5
    %v976 = vrot.slane %v964, 4
    %v978 = vtanh.pop %v976
    %v979 = vrot.slane %v964, 6
    %v981 = vmul.f32 %v979, 0.5
    %v982 = vtanh.pop %v981
    %v983 = vmul.f32 %v982, 0.5
    %v984 = vadd.f32 %v983, 0.5
    %v985 = vmul.f32 %v975, %v893
    %v986 = vmul.f32 %v968, %v978
    %v987 = vadd.f32 %v985, %v986
    %v988 = vtanh.pop %v987
    %v989 = vmul.f32 %v984, %v988
    %s990 = scalar_lea.vmem [#allocation13], 8
    %991 = vst [vmem:[%s990] sm:$0x3] %v989
    %s992 = scalar_lea.vmem [#allocation2], 40
    %v993 = vld [vmem:[%s992] sm:$0xff]
    %v994 = vpack.c.bf16 %v989, %v989
    %995 = vmatpush.bf16.msra.mxu0 %v489
    %996 = vmatpush.bf16.msra.mxu0 %v485
    %997 = vmatpush.bf16.msra.mxu0 %v481
    %998 = vmatpush.bf16.msra.mxu0 %v477
    %999 = vmatpush.bf16.msra.mxu0 %v473
    %1000 = vmatpush.bf16.msra.mxu0 %v469
    %1001 = vmatpush.bf16.msra.mxu0 %v465
    %1002 = vmatpush.bf16.msra.mxu0 %v461
    %1003 = vmatmul.bf16.gmra.mxu0 %v994
    %v1004 = vpop.f32.mrf.mxu0
    %v1005 = vadd.f32 0.0, %v1004
    %v1006 = vpop.f32.mrf.mxu0
    %1007 = vdwg.mxu0
    %1008 = vmatpush.bf16.msra.mxu0 %v490
    %1009 = vmatpush.bf16.msra.mxu0 %v486
    %1010 = vmatpush.bf16.msra.mxu0 %v482
    %1011 = vmatpush.bf16.msra.mxu0 %v478
    %1012 = vmatpush.bf16.msra.mxu0 %v474
    %1013 = vmatpush.bf16.msra.mxu0 %v470
    %1014 = vmatpush.bf16.msra.mxu0 %v466
    %1015 = vmatpush.bf16.msra.mxu0 %v462
    %1016 = vmatmul.bf16.gmra.mxu0 %v994
    %v1017 = vpop.f32.mrf.mxu0
    %v1018 = vadd.f32 0.0, %v1017
    %v1019 = vpop.f32.mrf.mxu0
    %1020 = vdwg.mxu0
    %1021 = vmatpush.bf16.msra.mxu0 %v491
    %1022 = vmatpush.bf16.msra.mxu0 %v487
    %1023 = vmatpush.bf16.msra.mxu0 %v483
    %1024 = vmatpush.bf16.msra.mxu0 %v479
    %1025 = vmatpush.bf16.msra.mxu0 %v475
    %1026 = vmatpush.bf16.msra.mxu0 %v471
    %1027 = vmatpush.bf16.msra.mxu0 %v467
    %1028 = vmatpush.bf16.msra.mxu0 %v463
    %1029 = vmatmul.bf16.gmra.mxu0 %v994
    %v1030 = vpop.f32.mrf.mxu0
    %v1031 = vadd.f32 0.0, %v1030
    %v1032 = vpop.f32.mrf.mxu0
    %1033 = vdwg.mxu0
    %1034 = vmatpush.bf16.msra.mxu0 %v492
    %1035 = vmatpush.bf16.msra.mxu0 %v488
    %1036 = vmatpush.bf16.msra.mxu0 %v484
    %1037 = vmatpush.bf16.msra.mxu0 %v480
    %1038 = vmatpush.bf16.msra.mxu0 %v476
    %1039 = vmatpush.bf16.msra.mxu0 %v472
    %1040 = vmatpush.bf16.msra.mxu0 %v468
    %1041 = vmatpush.bf16.msra.mxu0 %v464
    %1042 = vmatmul.bf16.gmra.mxu0 %v994
    %v1043 = vpop.f32.mrf.mxu0
    %v1044 = vadd.f32 0.0, %v1043
    %v1045 = vpop.f32.mrf.mxu0
    %1046 = vdwg.mxu0
    %v1051 = vrot.slane %v1018, 6
    %v1052 = vrot.slane %v1031, 4
    %v1053 = vrot.slane %v1044, 2
    %v1054 = vsel %vm197, %v1005, %v1051
    %v1055 = vsel %vm221, %v1052, %v1053
    %v1056 = vsel %vm586, %v1054, %v1055
    %v1058 = vadd.f32 %v993, %v1056
    %v1059 = vmul.f32 %v1058, 0.5
    %v1060 = vtanh.pop %v1059
    %v1061 = vmul.f32 %v1060, 0.5
    %v1062 = vadd.f32 %v1061, 0.5
    %v1064 = vrot.slane %v1058, 2
    %v1066 = vmul.f32 %v1064, 0.5
    %v1067 = vtanh.pop %v1066
    %v1068 = vmul.f32 %v1067, 0.5
    %v1069 = vadd.f32 %v1068, 0.5
    %v1070 = vrot.slane %v1058, 4
    %v1072 = vtanh.pop %v1070
    %v1073 = vrot.slane %v1058, 6
    %v1075 = vmul.f32 %v1073, 0.5
    %v1076 = vtanh.pop %v1075
    %v1077 = vmul.f32 %v1076, 0.5
    %v1078 = vadd.f32 %v1077, 0.5
    %v1079 = vmul.f32 %v1069, %v987
    %v1080 = vmul.f32 %v1062, %v1072
    %v1081 = vadd.f32 %v1079, %v1080
    %v1082 = vtanh.pop %v1081
    %v1083 = vmul.f32 %v1078, %v1082
    %s1084 = scalar_lea.vmem [#allocation13], 10
    %1085 = vst [vmem:[%s1084] sm:$0x3] %v1083
    %s1086 = scalar_lea.vmem [#allocation2], 48
    %v1087 = vld [vmem:[%s1086] sm:$0xff]
    %v1088 = vpack.c.bf16 %v1083, %v1083
    %1089 = vmatpush.bf16.msra.mxu0 %v489
    %1090 = vmatpush.bf16.msra.mxu0 %v485
    %1091 = vmatpush.bf16.msra.mxu0 %v481
    %1092 = vmatpush.bf16.msra.mxu0 %v477
    %1093 = vmatpush.bf16.msra.mxu0 %v473
    %1094 = vmatpush.bf16.msra.mxu0 %v469
    %1095 = vmatpush.bf16.msra.mxu0 %v465
    %1096 = vmatpush.bf16.msra.mxu0 %v461
    %1097 = vmatmul.bf16.gmra.mxu0 %v1088
    %v1098 = vpop.f32.mrf.mxu0
    %v1099 = vadd.f32 0.0, %v1098
    %v1100 = vpop.f32.mrf.mxu0
    %1101 = vdwg.mxu0
    %1102 = vmatpush.bf16.msra.mxu0 %v490
    %1103 = vmatpush.bf16.msra.mxu0 %v486
    %1104 = vmatpush.bf16.msra.mxu0 %v482
    %1105 = vmatpush.bf16.msra.mxu0 %v478
    %1106 = vmatpush.bf16.msra.mxu0 %v474
    %1107 = vmatpush.bf16.msra.mxu0 %v470
    %1108 = vmatpush.bf16.msra.mxu0 %v466
    %1109 = vmatpush.bf16.msra.mxu0 %v462
    %1110 = vmatmul.bf16.gmra.mxu0 %v1088
    %v1111 = vpop.f32.mrf.mxu0
    %v1112 = vadd.f32 0.0, %v1111
    %v1113 = vpop.f32.mrf.mxu0
    %1114 = vdwg.mxu0
    %1115 = vmatpush.bf16.msra.mxu0 %v491
    %1116 = vmatpush.bf16.msra.mxu0 %v487
    %1117 = vmatpush.bf16.msra.mxu0 %v483
    %1118 = vmatpush.bf16.msra.mxu0 %v479
    %1119 = vmatpush.bf16.msra.mxu0 %v475
    %1120 = vmatpush.bf16.msra.mxu0 %v471
    %1121 = vmatpush.bf16.msra.mxu0 %v467
    %1122 = vmatpush.bf16.msra.mxu0 %v463
    %1123 = vmatmul.bf16.gmra.mxu0 %v1088
    %v1124 = vpop.f32.mrf.mxu0
    %v1125 = vadd.f32 0.0, %v1124
    %v1126 = vpop.f32.mrf.mxu0
    %1127 = vdwg.mxu0
    %1128 = vmatpush.bf16.msra.mxu0 %v492
    %1129 = vmatpush.bf16.msra.mxu0 %v488
    %1130 = vmatpush.bf16.msra.mxu0 %v484
    %1131 = vmatpush.bf16.msra.mxu0 %v480
    %1132 = vmatpush.bf16.msra.mxu0 %v476
    %1133 = vmatpush.bf16.msra.mxu0 %v472
    %1134 = vmatpush.bf16.msra.mxu0 %v468
    %1135 = vmatpush.bf16.msra.mxu0 %v464
    %1136 = vmatmul.bf16.gmra.mxu0 %v1088
    %v1137 = vpop.f32.mrf.mxu0
    %v1138 = vadd.f32 0.0, %v1137
    %v1139 = vpop.f32.mrf.mxu0
    %1140 = vdwg.mxu0
    %v1145 = vrot.slane %v1112, 6
    %v1146 = vrot.slane %v1125, 4
    %v1147 = vrot.slane %v1138, 2
    %v1148 = vsel %vm197, %v1099, %v1145
    %v1149 = vsel %vm221, %v1146, %v1147
    %v1150 = vsel %vm586, %v1148, %v1149
    %v1152 = vadd.f32 %v1087, %v1150
    %v1153 = vmul.f32 %v1152, 0.5
    %v1154 = vtanh.pop %v1153
    %v1155 = vmul.f32 %v1154, 0.5
    %v1156 = vadd.f32 %v1155, 0.5
    %v1158 = vrot.slane %v1152, 2
    %v1160 = vmul.f32 %v1158, 0.5
    %v1161 = vtanh.pop %v1160
    %v1162 = vmul.f32 %v1161, 0.5
    %v1163 = vadd.f32 %v1162, 0.5
    %v1164 = vrot.slane %v1152, 4
    %v1166 = vtanh.pop %v1164
    %v1167 = vrot.slane %v1152, 6
    %v1169 = vmul.f32 %v1167, 0.5
    %v1170 = vtanh.pop %v1169
    %v1171 = vmul.f32 %v1170, 0.5
    %v1172 = vadd.f32 %v1171, 0.5
    %v1173 = vmul.f32 %v1163, %v1081
    %v1174 = vmul.f32 %v1156, %v1166
    %v1175 = vadd.f32 %v1173, %v1174
    %v1176 = vtanh.pop %v1175
    %v1177 = vmul.f32 %v1172, %v1176
    %s1178 = scalar_lea.vmem [#allocation13], 12
    %1179 = vst [vmem:[%s1178] sm:$0x3] %v1177
    %s1180 = scalar_lea.vmem [#allocation2], 56
    %v1181 = vld [vmem:[%s1180] sm:$0xff]
    %v1182 = vpack.c.bf16 %v1177, %v1177
    %1183 = vmatpush.bf16.msra.mxu0 %v489
    %1184 = vmatpush.bf16.msra.mxu0 %v485
    %1185 = vmatpush.bf16.msra.mxu0 %v481
    %1186 = vmatpush.bf16.msra.mxu0 %v477
    %1187 = vmatpush.bf16.msra.mxu0 %v473
    %1188 = vmatpush.bf16.msra.mxu0 %v469
    %1189 = vmatpush.bf16.msra.mxu0 %v465
    %1190 = vmatpush.bf16.msra.mxu0 %v461
    %1191 = vmatmul.bf16.gmra.mxu0 %v1182
    %v1192 = vpop.f32.mrf.mxu0
    %v1193 = vadd.f32 0.0, %v1192
    %v1194 = vpop.f32.mrf.mxu0
    %1195 = vdwg.mxu0
    %1196 = vmatpush.bf16.msra.mxu0 %v490
    %1197 = vmatpush.bf16.msra.mxu0 %v486
    %1198 = vmatpush.bf16.msra.mxu0 %v482
    %1199 = vmatpush.bf16.msra.mxu0 %v478
    %1200 = vmatpush.bf16.msra.mxu0 %v474
    %1201 = vmatpush.bf16.msra.mxu0 %v470
    %1202 = vmatpush.bf16.msra.mxu0 %v466
    %1203 = vmatpush.bf16.msra.mxu0 %v462
    %1204 = vmatmul.bf16.gmra.mxu0 %v1182
    %v1205 = vpop.f32.mrf.mxu0
    %v1206 = vadd.f32 0.0, %v1205
    %v1207 = vpop.f32.mrf.mxu0
    %1208 = vdwg.mxu0
    %1209 = vmatpush.bf16.msra.mxu0 %v491
    %1210 = vmatpush.bf16.msra.mxu0 %v487
    %1211 = vmatpush.bf16.msra.mxu0 %v483
    %1212 = vmatpush.bf16.msra.mxu0 %v479
    %1213 = vmatpush.bf16.msra.mxu0 %v475
    %1214 = vmatpush.bf16.msra.mxu0 %v471
    %1215 = vmatpush.bf16.msra.mxu0 %v467
    %1216 = vmatpush.bf16.msra.mxu0 %v463
    %1217 = vmatmul.bf16.gmra.mxu0 %v1182
    %v1218 = vpop.f32.mrf.mxu0
    %v1219 = vadd.f32 0.0, %v1218
    %v1220 = vpop.f32.mrf.mxu0
    %1221 = vdwg.mxu0
    %1222 = vmatpush.bf16.msra.mxu0 %v492
    %1223 = vmatpush.bf16.msra.mxu0 %v488
    %1224 = vmatpush.bf16.msra.mxu0 %v484
    %1225 = vmatpush.bf16.msra.mxu0 %v480
    %1226 = vmatpush.bf16.msra.mxu0 %v476
    %1227 = vmatpush.bf16.msra.mxu0 %v472
    %1228 = vmatpush.bf16.msra.mxu0 %v468
    %1229 = vmatpush.bf16.msra.mxu0 %v464
    %1230 = vmatmul.bf16.gmra.mxu0 %v1182
    %v1231 = vpop.f32.mrf.mxu0
    %v1232 = vadd.f32 0.0, %v1231
    %v1233 = vpop.f32.mrf.mxu0
    %1234 = vdwg.mxu0
    %v1239 = vrot.slane %v1206, 6
    %v1240 = vrot.slane %v1219, 4
    %v1241 = vrot.slane %v1232, 2
    %v1242 = vsel %vm197, %v1193, %v1239
    %v1243 = vsel %vm221, %v1240, %v1241
    %v1244 = vsel %vm586, %v1242, %v1243
    %v1246 = vadd.f32 %v1181, %v1244
    %v1247 = vmul.f32 %v1246, 0.5
    %v1248 = vtanh.pop %v1247
    %v1249 = vmul.f32 %v1248, 0.5
    %v1250 = vadd.f32 %v1249, 0.5
    %v1252 = vrot.slane %v1246, 2
    %v1254 = vmul.f32 %v1252, 0.5
    %v1255 = vtanh.pop %v1254
    %v1256 = vmul.f32 %v1255, 0.5
    %v1257 = vadd.f32 %v1256, 0.5
    %v1258 = vrot.slane %v1246, 4
    %v1260 = vtanh.pop %v1258
    %v1261 = vrot.slane %v1246, 6
    %v1263 = vmul.f32 %v1261, 0.5
    %v1264 = vtanh.pop %v1263
    %v1265 = vmul.f32 %v1264, 0.5
    %v1266 = vadd.f32 %v1265, 0.5
    %v1267 = vmul.f32 %v1257, %v1175
    %v1268 = vmul.f32 %v1250, %v1260
    %v1269 = vadd.f32 %v1267, %v1268
    %v1270 = vtanh.pop %v1269
    %v1271 = vmul.f32 %v1266, %v1270
    %s1272 = scalar_lea.vmem [#allocation13], 14
    %1273 = vst [vmem:[%s1272] sm:$0x3] %v1271
    %1274 = vst [vmem:[#allocation3] sm:$0x3] %v1271
    %1275 = vst [vmem:[#allocation4] sm:$0x3] %v1269
    %v1276 = vld [vmem:[#allocation4] sm:$0x3]
    %1277 = vst [vmem:[#allocation14] sm:$0x3] %v1276
    // Predicated region
    $region38: #{tpu_custom_call.1} parent=1 // pred_check
      _
    $region39: #{tpu_custom_call.1} parent=1 // pred_check_branch
      %1279 = sbr.rel (0) target = $region41
    $region40: #{tpu_custom_call.1} parent=1 // pred_region
      %1281 = vsyncadd [#allocation7], 0
      %s1282 = sshll.u32 [#allocation13], 4
      %s1283 = int_to_ptr.vmem [resolvable:$true] %s1282
      %s1284 = sshll.u32 %s4, 4
      %s1285 = int_to_ptr.hbm [resolvable:$true] %s1284
      %1290 = dma.vmem_to_hbm [thread:$0]  %s1283, 256, %s1285, [#allocation7], 32, 32, 2
    $region41: #{tpu_custom_call.1} parent=1 // pred_fallthru
      _
    // Predicated region
    $region42: #{tpu_custom_call.1} parent=1 // pred_check
      _
    $region43: #{tpu_custom_call.1} parent=1 // pred_check_branch
      %1292 = sbr.rel (0) target = $region45
    $region44: #{tpu_custom_call.1} parent=1 // pred_region
      %1294 = vsyncadd [#allocation15], 0
      %s1296 = sshll.u32 [#allocation14], 4
      %s1297 = int_to_ptr.vmem [resolvable:$true] %s1296
      %s1298 = sshll.u32 %s5, 4
      %s1299 = int_to_ptr.hbm [resolvable:$true] %s1298
      %1301 = dma.vmem_to_hbm [thread:$0]  %s1297, 32, %s1299, [#allocation15]
    $region45: #{tpu_custom_call.1} parent=1 // pred_fallthru
      _
    // Predicated region
    $region46: #{tpu_custom_call.1} parent=1 // pred_check
      _
    $region47: #{tpu_custom_call.1} parent=1 // pred_check_branch
      %1303 = sbr.rel (0) target = $region49
    $region48: #{tpu_custom_call.1} parent=1 // pred_region
      %1305 = dma.done [#allocation7], 256
    $region49: #{tpu_custom_call.1} parent=1 // pred_fallthru
      _
    // Predicated region
    $region50: #{tpu_custom_call.1} parent=1 // pred_check
      _
    $region51: #{tpu_custom_call.1} parent=1 // pred_check_branch
      %1307 = sbr.rel (0) target = $region53
    $region52: #{tpu_custom_call.1} parent=1 // pred_region
      %1309 = dma.done [#allocation15], 32
    $region53: #{tpu_custom_call.1} parent=1 // pred_fallthru
      _
    %1310 = vsyncpa [#allocation6], 1
    %1311 = vsyncpa [#allocation9], 1
    %1312 = vsyncpa [#allocation12], 1
    %1313 = vsyncpa [#allocation7], 1
    %1314 = vsyncpa [#allocation15], 1

// kernel: tpu_custom_call.1
$region0: #{tpu_custom_call.1}
  #allocation0 [shape = 'u32[]', space=smem, size = 0x4, offset = 0x4, fixed_abs, tag = 'smem constant byte address 0x4 - core index']
  #allocation1 [shape = 'u32[72,128]{1,0:T(1,128)}', space=vmem, size = 0x9000, scoped, tag = 'internal scratch']
  #allocation2 [shape = 'f32[8,2,512]{2,1,0:T(2,128)}', space=vmem, size = 0x8000, scoped, tag = 'scratch operand']
  #allocation3 [shape = 'f32[2,128]{1,0:T(2,128)}', space=vmem, size = 0x400, scoped, tag = 'scratch operand']
  #allocation4 [shape = 'f32[2,128]{1,0:T(2,128)}', space=vmem, size = 0x400, scoped, tag = 'scratch operand']
  %s0 = inlined_call_operand.hbm [shape: f32[2,8,16], index: 0, kind: input, shape index: {}]
  %s1 = inlined_call_operand.hbm [shape: bf16[16,512], index: 1, kind: input, shape index: {}]
  %s2 = inlined_call_operand.hbm [shape: bf16[128,512], index: 2, kind: input, shape index: {}]
  %s3 = inlined_call_operand.hbm [shape: f32[1,512], index: 3, kind: input, shape index: {}]
  %s4 = inlined_call_operand.hbm [shape: f32[8,2,128], index: 4, kind: output, shape index: {0}]
  %s5 = inlined_call_operand.hbm [shape: f32[2,128], index: 5, kind: output, shape index: {1}]
  %6 = xla_tuple %s4, %s5
  %s7 = sld [smem:[#allocation0]]
  $region54: #{tpu_custom_call.1} parent=0
    _
  %s9 = ssub.s32 1, %s7
  %s10 = scalar_select 0, %s9, %s7
  $region1: #{tpu_custom_call.1} parent=0
    #allocation5 [shape = 'u8[8192]{0}', space=vmem, size = 0x2000, scoped, tag = 'input window, operand 0, single buffered']
    #allocation6 [shape = 's32[1]{0}', space=sflag, size = 0x4, scoped, tag = 'scoped memory for tpu_custom_call.1']
    #allocation7 [shape = 's32[1]{0}', space=sflag, size = 0x4, scoped, tag = 'scoped memory for tpu_custom_call.1']
    #allocation8 [shape = 'u8[16384]{0}', space=vmem, size = 0x4000, scoped, tag = 'input window, operand 1, single buffered']
    #allocation9 [shape = 's32[1]{0}', space=sflag, size = 0x4, scoped, tag = 'scoped memory for tpu_custom_call.1']
    #allocation10 [shape = 'u8[131072]{0}', space=vmem, size = 0x20000, scoped, tag = 'input window, operand 2, single buffered']
    #allocation11 [shape = 'u8[2048]{0}', space=vmem, size = 0x800, scoped, tag = 'input window, operand 3, single buffered']
    #allocation12 [shape = 's32[1]{0}', space=sflag, size = 0x4, scoped, tag = 'scoped memory for tpu_custom_call.1']
    #allocation13 [shape = 'u8[8192]{0}', space=vmem, size = 0x2000, scoped, tag = 'output window, operand 0, single buffered']
    #allocation14 [shape = 'u8[1024]{0}', space=vmem, size = 0x400, scoped, tag = 'output window, operand 1, single buffered']
    #allocation15 [shape = 's32[1]{0}', space=sflag, size = 0x4, scoped, tag = 'scoped memory for tpu_custom_call.1']
    %11 = vsyncpa [#allocation6], 0
    %12 = vsyncpa [#allocation9], 0
    %13 = vsyncpa [#allocation12], 0
    %14 = vsyncpa [#allocation7], 0
    %15 = vsyncpa [#allocation15], 0
    // Predicated region
    $region2: #{tpu_custom_call.1} parent=1 // pred_check
      _
    $region3: #{tpu_custom_call.1} parent=1 // pred_check_branch
      %17 = sbr.rel (0) target = $region5
    $region4: #{tpu_custom_call.1} parent=1 // pred_region
      %19 = vsyncadd [#allocation6], 0
      %s20 = sshll.u32 %s0, 4
      %s21 = int_to_ptr.hbm [resolvable:$true] %s20
      %s22 = sshll.u32 [#allocation5], 4
      %s23 = int_to_ptr.vmem [resolvable:$true] %s22
      %28 = dma.hbm_to_vmem [thread:$0]  %s21, 256, %s23, [#allocation6], 128, 128, 8
    $region5: #{tpu_custom_call.1} parent=1 // pred_fallthru
      _
    // Predicated region
    $region6: #{tpu_custom_call.1} parent=1 // pred_check
      _
    $region7: #{tpu_custom_call.1} parent=1 // pred_check_branch
      %30 = sbr.rel (0) target = $region9
    $region8: #{tpu_custom_call.1} parent=1 // pred_region
      %32 = vsyncadd [#allocation9], 0
      %s33 = sshll.u32 %s1, 4
      %s34 = int_to_ptr.hbm [resolvable:$true] %s33
      %s35 = sshll.u32 [#allocation8], 4
      %s36 = int_to_ptr.vmem [resolvable:$true] %s35
      %41 = dma.hbm_to_vmem [thread:$0]  %s34, 512, %s36, [#allocation9], 256, 256, 16
    $region9: #{tpu_custom_call.1} parent=1 // pred_fallthru
      _
    // Predicated region
    $region10: #{tpu_custom_call.1} parent=1 // pred_check
      _
    $region11: #{tpu_custom_call.1} parent=1 // pred_check_branch
      %43 = sbr.rel (0) target = $region13
    $region12: #{tpu_custom_call.1} parent=1 // pred_region
      %45 = vsyncadd [#allocation9], 0
      %s46 = sshll.u32 %s2, 4
      %s47 = int_to_ptr.hbm [resolvable:$true] %s46
      %s48 = sshll.u32 [#allocation10], 4
      %s49 = int_to_ptr.vmem [resolvable:$true] %s48
      %54 = dma.hbm_to_vmem [thread:$0]  %s47, 4096, %s49, [#allocation9], 256, 256, 16
    $region13: #{tpu_custom_call.1} parent=1 // pred_fallthru
      _
    // Predicated region
    $region14: #{tpu_custom_call.1} parent=1 // pred_check
      _
    $region15: #{tpu_custom_call.1} parent=1 // pred_check_branch
      %56 = sbr.rel (0) target = $region17
    $region16: #{tpu_custom_call.1} parent=1 // pred_region
      %58 = vsyncadd [#allocation12], 0
      %s60 = sshll.u32 %s3, 4
      %s61 = int_to_ptr.hbm [resolvable:$true] %s60
      %s62 = sshll.u32 [#allocation11], 4
      %s63 = int_to_ptr.vmem [resolvable:$true] %s62
      %65 = dma.hbm_to_vmem [thread:$0]  %s61, 64, %s63, [#allocation12]
    $region17: #{tpu_custom_call.1} parent=1 // pred_fallthru
      _
    // Predicated region
    $region18: #{tpu_custom_call.1} parent=1 // pred_check
      _
    $region19: #{tpu_custom_call.1} parent=1 // pred_check_branch
      %67 = sbr.rel (0) target = $region21
    $region20: #{tpu_custom_call.1} parent=1 // pred_region
      %69 = dma.done [#allocation6], 256
    $region21: #{tpu_custom_call.1} parent=1 // pred_fallthru
      _
    // Predicated region
    $region22: #{tpu_custom_call.1} parent=1 // pred_check
      _
    $region23: #{tpu_custom_call.1} parent=1 // pred_check_branch
      %71 = sbr.rel (0) target = $region25
    $region24: #{tpu_custom_call.1} parent=1 // pred_region
      %73 = dma.done [#allocation9], 512
    $region25: #{tpu_custom_call.1} parent=1 // pred_fallthru
      _
    // Predicated region
    $region26: #{tpu_custom_call.1} parent=1 // pred_check
      _
    $region27: #{tpu_custom_call.1} parent=1 // pred_check_branch
      %75 = sbr.rel (0) target = $region29
    $region28: #{tpu_custom_call.1} parent=1 // pred_region
      %77 = dma.done [#allocation9], 4096
    $region29: #{tpu_custom_call.1} parent=1 // pred_fallthru
      _
    // Predicated region
    $region30: #{tpu_custom_call.1} parent=1 // pred_check
      _
    $region31: #{tpu_custom_call.1} parent=1 // pred_check_branch
      %79 = sbr.rel (0) target = $region33
    $region32: #{tpu_custom_call.1} parent=1 // pred_region
      %81 = dma.done [#allocation12], 64
    $region33: #{tpu_custom_call.1} parent=1 // pred_fallthru
      _
    %p83 = scmp.eq.s32.totalorder 0, 0
    // Predicated region
    $region34: #{tpu_custom_call.1} parent=1 // pred_check
      %p84 = pneg %p83
    $region35: #{tpu_custom_call.1} parent=1 // pred_check_branch
      %86 = sbr.rel (%p84) target = $region37
    $region36: #{tpu_custom_call.1} parent=1 // pred_region
      %87 = vst [vmem:[#allocation3] sm:$0x3] 0.0
      %88 = vst [vmem:[#allocation4] sm:$0x3] 0.0
    $region37: #{tpu_custom_call.1} parent=1 // pred_fallthru
      _
    %v89 = vld [vmem:[#allocation5] sm:$0xff]
    %v90 = vld [vmem:[#allocation5 + $0x8] sm:$0xff]
    %v91 = vpack.c.bf16 %v90, %v89
    %v92 = vld [vmem:[#allocation8] sm:$0xff]
    %v93 = vld [vmem:[#allocation8 + $0x8] sm:$0xff]
    %v94 = vld [vmem:[#allocation8 + $0x10] sm:$0xff]
    %v95 = vld [vmem:[#allocation8 + $0x18] sm:$0xff]
    %v96 = vld [vmem:[#allocation11] sm:$0xf]
    %v98 = vperm.slane %v96, 0
    %v99 = vperm.slane %v96, 1
    %v100 = vperm.slane %v96, 2
    %v101 = vperm.slane %v96, 3
    %v110 = vunpack.c.l.b16 %v92
    %v111 = vunpack.c.h.b16 %v92
    %v112 = vunpack.c.l.b16 %v93
    %v113 = vunpack.c.h.b16 %v93
    %v114 = vunpack.c.l.b16 %v94
    %v115 = vunpack.c.h.b16 %v94
    %v116 = vunpack.c.l.b16 %v95
    %v117 = vunpack.c.h.b16 %v95
    %v118 = vpack.c.b16 %v114, %v110
    %v119 = vpack.c.b16 %v115, %v111
    %v120 = vpack.c.b16 %v116, %v112
    %v121 = vpack.c.b16 %v117, %v113
    %vm126 = vcmask 130048
    %v128 = vsel %vm126, %v91, 0
    %130 = vmatpush.bf16.msra.mxu0 0
    %131 = vmatpush.bf16.msra.mxu0 0
    %132 = vmatpush.bf16.msra.mxu0 0
    %133 = vmatpush.bf16.msra.mxu0 0
    %134 = vmatpush.bf16.msra.mxu0 0
    %135 = vmatpush.bf16.msra.mxu0 0
    %136 = vmatpush.bf16.msra.mxu0 0
    %137 = vmatpush.bf16.msra.mxu0 %v118
    %138 = vmatmul.bf16.gmra.mxu0 %v128
    %v139 = vpop.f32.mrf.mxu0
    %v140 = vadd.f32 %v98, %v139
    %v141 = vpop.f32.mrf.mxu0
    %v142 = vadd.f32 %v98, %v141
    %143 = vdwg.mxu0
    %144 = vmatpush.bf16.msra.mxu0 0
    %145 = vmatpush.bf16.msra.mxu0 0
    %146 = vmatpush.bf16.msra.mxu0 0
    %147 = vmatpush.bf16.msra.mxu0 0
    %148 = vmatpush.bf16.msra.mxu0 0
    %149 = vmatpush.bf16.msra.mxu0 0
    %150 = vmatpush.bf16.msra.mxu0 0
    %151 = vmatpush.bf16.msra.mxu0 %v119
    %152 = vmatmul.bf16.gmra.mxu0 %v128
    %v153 = vpop.f32.mrf.mxu0
    %v154 = vadd.f32 %v99, %v153
    %v155 = vpop.f32.mrf.mxu0
    %v156 = vadd.f32 %v99, %v155
    %157 = vdwg.mxu0
    %158 = vmatpush.bf16.msra.mxu0 0
    %159 = vmatpush.bf16.msra.mxu0 0
    %160 = vmatpush.bf16.msra.mxu0 0
    %161 = vmatpush.bf16.msra.mxu0 0
    %162 = vmatpush.bf16.msra.mxu0 0
    %163 = vmatpush.bf16.msra.mxu0 0
    %164 = vmatpush.bf16.msra.mxu0 0
    %165 = vmatpush.bf16.msra.mxu0 %v120
    %166 = vmatmul.bf16.gmra.mxu0 %v128
    %v167 = vpop.f32.mrf.mxu0
    %v168 = vadd.f32 %v100, %v167
    %v169 = vpop.f32.mrf.mxu0
    %v170 = vadd.f32 %v100, %v169
    %171 = vdwg.mxu0
    %172 = vmatpush.bf16.msra.mxu0 0
    %173 = vmatpush.bf16.msra.mxu0 0
    %174 = vmatpush.bf16.msra.mxu0 0
    %175 = vmatpush.bf16.msra.mxu0 0
    %176 = vmatpush.bf16.msra.mxu0 0
    %177 = vmatpush.bf16.msra.mxu0 0
    %178 = vmatpush.bf16.msra.mxu0 0
    %179 = vmatpush.bf16.msra.mxu0 %v121
    %180 = vmatmul.bf16.gmra.mxu0 %v128
    %v181 = vpop.f32.mrf.mxu0
    %v182 = vadd.f32 %v101, %v181
    %v183 = vpop.f32.mrf.mxu0
    %v184 = vadd.f32 %v101, %v183
    %185 = vdwg.mxu0
    %v190 = vrot.slane %v154, 7
    %v191 = vrot.slane %v168, 6
    %v192 = vrot.slane %v182, 5
    %vm193 = vcmask 1040384
    %v194 = vsel %vm193, %v140, %v190
    %vm195 = vcmask 1042434
    %v196 = vsel %vm195, %v191, %v192
    %vm197 = vcmask 1041408
    %v198 = vsel %vm197, %v194, %v196
    %vm199 = vcmask 1041409
    %v200 = vsel %vm199, %v140, %v190
    %vm201 = vcmask 1043459
    %v202 = vsel %vm201, %v191, %v192
    %vm203 = vcmask 1042433
    %v204 = vsel %vm203, %v200, %v202
    %v205 = vrot.slane %v204, 1
    %v206 = vsel %vm195, %v140, %v190
    %vm207 = vcmask 1044484
    %v208 = vsel %vm207, %v191, %v192
    %vm209 = vcmask 1043458
    %v210 = vsel %vm209, %v206, %v208
    %v211 = vrot.slane %v210, 2
    %v212 = vsel %vm201, %v140, %v190
    %vm213 = vcmask 1045509
    %v214 = vsel %vm213, %v191, %v192
    %vm215 = vcmask 1044483
    %v216 = vsel %vm215, %v212, %v214
    %v217 = vrot.slane %v216, 3
    %v218 = vsel %vm207, %v140, %v190
    %vm219 = vcmask 1046534
    %v220 = vsel %vm219, %v191, %v192
    %vm221 = vcmask 1045508
    %v222 = vsel %vm221, %v218, %v220
    %v223 = vrot.slane %v222, 4
    %v224 = vsel %vm213, %v140, %v190
    %vm225 = vcmask 1046528
    %v226 = vsel %vm225, %v192, %v191
    %vm227 = vcmask 1046533
    %v228 = vsel %vm227, %v224, %v226
    %v229 = vrot.slane %v228, 5
    %v230 = vsel %vm219, %v140, %v190
    %v231 = vsel %vm193, %v191, %v192
    %vm232 = vcmask 1045504
    %v233 = vsel %vm232, %v231, %v230
    %v234 = vrot.slane %v233, 6
    %v235 = vsel %vm225, %v190, %v140
    %v236 = vsel %vm199, %v191, %v192
    %vm237 = vcmask 1046529
    %v238 = vsel %vm237, %v236, %v235
    %v239 = vrot.slane %v238, 7
    %v248 = vlaneseq
    %vm249 = vcmp.ge.s32.totalorder %v248, 0
    %vm250 = vcmp.lt.s32.totalorder %v248, 512
    %vm251 = vmand %vm249, %vm250
    %252 = vst.msk [vmem:[#allocation2] ss:$2 sm:$0xf] %vm251, %v198
    %s253 = scalar_lea.vmem [#allocation2], 8
    %254 = vst.msk [vmem:[%s253] ss:$2 sm:$0xf] %vm251, %v205
    %s255 = scalar_lea.vmem [#allocation2], 16
    %256 = vst.msk [vmem:[%s255] ss:$2 sm:$0xf] %vm251, %v211
    %s257 = scalar_lea.vmem [#allocation2], 24
    %258 = vst.msk [vmem:[%s257] ss:$2 sm:$0xf] %vm251, %v217
    %s259 = scalar_lea.vmem [#allocation2], 32
    %260 = vst.msk [vmem:[%s259] ss:$2 sm:$0xf] %vm251, %v223
    %s261 = scalar_lea.vmem [#allocation2], 40
    %262 = vst.msk [vmem:[%s261] ss:$2 sm:$0xf] %vm251, %v229
    %s263 = scalar_lea.vmem [#allocation2], 48
    %264 = vst.msk [vmem:[%s263] ss:$2 sm:$0xf] %vm251, %v234
    %s265 = scalar_lea.vmem [#allocation2], 56
    %266 = vst.msk [vmem:[%s265] ss:$2 sm:$0xf] %vm251, %v239
    %v271 = vrot.slane %v156, 7
    %v272 = vrot.slane %v170, 6
    %v273 = vrot.slane %v184, 5
    %v274 = vsel %vm193, %v142, %v271
    %v275 = vsel %vm195, %v272, %v273
    %v276 = vsel %vm197, %v274, %v275
    %v277 = vsel %vm199, %v142, %v271
    %v278 = vsel %vm201, %v272, %v273
    %v279 = vsel %vm203, %v277, %v278
    %v280 = vrot.slane %v279, 1
    %v281 = vsel %vm195, %v142, %v271
    %v282 = vsel %vm207, %v272, %v273
    %v283 = vsel %vm209, %v281, %v282
    %v284 = vrot.slane %v283, 2
    %v285 = vsel %vm201, %v142, %v271
    %v286 = vsel %vm213, %v272, %v273
    %v287 = vsel %vm215, %v285, %v286
    %v288 = vrot.slane %v287, 3
    %v289 = vsel %vm207, %v142, %v271
    %v290 = vsel %vm219, %v272, %v273
    %v291 = vsel %vm221, %v289, %v290
    %v292 = vrot.slane %v291, 4
    %v293 = vsel %vm213, %v142, %v271
    %v294 = vsel %vm225, %v273, %v272
    %v295 = vsel %vm227, %v293, %v294
    %v296 = vrot.slane %v295, 5
    %v297 = vsel %vm219, %v142, %v271
    %v298 = vsel %vm193, %v272, %v273
    %v299 = vsel %vm232, %v298, %v297
    %v300 = vrot.slane %v299, 6
    %v301 = vsel %vm225, %v271, %v142
    %v302 = vsel %vm199, %v272, %v273
    %v303 = vsel %vm237, %v302, %v301
    %v304 = vrot.slane %v303, 7
    %s313 = scalar_lea.vmem [#allocation2], 1
    %314 = vst.msk [vmem:[%s313] ss:$2 sm:$0xf] %vm251, %v276
    %s315 = scalar_lea.vmem [#allocation2], 9
    %316 = vst.msk [vmem:[%s315] ss:$2 sm:$0xf] %vm251, %v280
    %s317 = scalar_lea.vmem [#allocation2], 17
    %318 = vst.msk [vmem:[%s317] ss:$2 sm:$0xf] %vm251, %v284
    %s319 = scalar_lea.vmem [#allocation2], 25
    %320 = vst.msk [vmem:[%s319] ss:$2 sm:$0xf] %vm251, %v288
    %s321 = scalar_lea.vmem [#allocation2], 33
    %322 = vst.msk [vmem:[%s321] ss:$2 sm:$0xf] %vm251, %v292
    %s323 = scalar_lea.vmem [#allocation2], 41
    %324 = vst.msk [vmem:[%s323] ss:$2 sm:$0xf] %vm251, %v296
    %s325 = scalar_lea.vmem [#allocation2], 49
    %326 = vst.msk [vmem:[%s325] ss:$2 sm:$0xf] %vm251, %v300
    %s327 = scalar_lea.vmem [#allocation2], 57
    %328 = vst.msk [vmem:[%s327] ss:$2 sm:$0xf] %vm251, %v304
    %v329 = vld [vmem:[#allocation10] sm:$0xff]
    %v330 = vld [vmem:[#allocation10 + $0x8] sm:$0xff]
    %v331 = vld [vmem:[#allocation10 + $0x10] sm:$0xff]
    %v332 = vld [vmem:[#allocation10 + $0x18] sm:$0xff]
    %v333 = vld [vmem:[#allocation10 + $0x20] sm:$0xff]
    %v334 = vld [vmem:[#allocation10 + $0x28] sm:$0xff]
    %v335 = vld [vmem:[#allocation10 + $0x30] sm:$0xff]
    %v336 = vld [vmem:[#allocation10 + $0x38] sm:$0xff]
    %v337 = vld [vmem:[#allocation10 + $0x40] sm:$0xff]
    %v338 = vld [vmem:[#allocation10 + $0x48] sm:$0xff]
    %v339 = vld [vmem:[#allocation10 + $0x50] sm:$0xff]
    %v340 = vld [vmem:[#allocation10 + $0x58] sm:$0xff]
    %v341 = vld [vmem:[#allocation10 + $0x60] sm:$0xff]
    %v342 = vld [vmem:[#allocation10 + $0x68] sm:$0xff]
    %v343 = vld [vmem:[#allocation10 + $0x70] sm:$0xff]
    %v344 = vld [vmem:[#allocation10 + $0x78] sm:$0xff]
    %v345 = vld [vmem:[#allocation10 + $0x80] sm:$0xff]
    %v346 = vld [vmem:[#allocation10 + $0x88] sm:$0xff]
    %v347 = vld [vmem:[#allocation10 + $0x90] sm:$0xff]
    %v348 = vld [vmem:[#allocation10 + $0x98] sm:$0xff]
    %v349 = vld [vmem:[#allocation10 + $0xa0] sm:$0xff]
    %v350 = vld [vmem:[#allocation10 + $0xa8] sm:$0xff]
    %v351 = vld [vmem:[#allocation10 + $0xb0] sm:$0xff]
    %v352 = vld [vmem:[#allocation10 + $0xb8] sm:$0xff]
    %v353 = vld [vmem:[#allocation10 + $0xc0] sm:$0xff]
    %v354 = vld [vmem:[#allocation10 + $0xc8] sm:$0xff]
    %v355 = vld [vmem:[#allocation10 + $0xd0] sm:$0xff]
    %v356 = vld [vmem:[#allocation10 + $0xd8] sm:$0xff]
    %v357 = vld [vmem:[#allocation10 + $0xe0] sm:$0xff]
    %v358 = vld [vmem:[#allocation10 + $0xe8] sm:$0xff]
    %v359 = vld [vmem:[#allocation10 + $0xf0] sm:$0xff]
    %v360 = vld [vmem:[#allocation10 + $0xf8] sm:$0xff]
    %v361 = vld [vmem:[#allocation3] sm:$0x3]
    %v362 = vld [vmem:[#allocation4] sm:$0x3]
    %v363 = vld [vmem:[#allocation2] sm:$0xff]
    %v364 = vpack.c.bf16 %v361, %v361
    %v397 = vunpack.c.l.b16 %v329
    %v398 = vunpack.c.h.b16 %v329
    %v399 = vunpack.c.l.b16 %v330
    %v400 = vunpack.c.h.b16 %v330
    %v401 = vunpack.c.l.b16 %v331
    %v402 = vunpack.c.h.b16 %v331
    %v403 = vunpack.c.l.b16 %v332
    %v404 = vunpack.c.h.b16 %v332
    %v405 = vunpack.c.l.b16 %v333
    %v406 = vunpack.c.h.b16 %v333
    %v407 = vunpack.c.l.b16 %v334
    %v408 = vunpack.c.h.b16 %v334
    %v409 = vunpack.c.l.b16 %v335
    %v410 = vunpack.c.h.b16 %v335
    %v411 = vunpack.c.l.b16 %v336
    %v412 = vunpack.c.h.b16 %v336
    %v413 = vunpack.c.l.b16 %v337
    %v414 = vunpack.c.h.b16 %v337
    %v415 = vunpack.c.l.b16 %v338
    %v416 = vunpack.c.h.b16 %v338
    %v417 = vunpack.c.l.b16 %v339
    %v418 = vunpack.c.h.b16 %v339
    %v419 = vunpack.c.l.b16 %v340
    %v420 = vunpack.c.h.b16 %v340
    %v421 = vunpack.c.l.b16 %v341
    %v422 = vunpack.c.h.b16 %v341
    %v423 = vunpack.c.l.b16 %v342
    %v424 = vunpack.c.h.b16 %v342
    %v425 = vunpack.c.l.b16 %v343
    %v426 = vunpack.c.h.b16 %v343
    %v427 = vunpack.c.l.b16 %v344
    %v428 = vunpack.c.h.b16 %v344
    %v429 = vunpack.c.l.b16 %v345
    %v430 = vunpack.c.h.b16 %v345
    %v431 = vunpack.c.l.b16 %v346
    %v432 = vunpack.c.h.b16 %v346
    %v433 = vunpack.c.l.b16 %v347
    %v434 = vunpack.c.h.b16 %v347
    %v435 = vunpack.c.l.b16 %v348
    %v436 = vunpack.c.h.b16 %v348
    %v437 = vunpack.c.l.b16 %v349
    %v438 = vunpack.c.h.b16 %v349
    %v439 = vunpack.c.l.b16 %v350
    %v440 = vunpack.c.h.b16 %v350
    %v441 = vunpack.c.l.b16 %v351
    %v442 = vunpack.c.h.b16 %v351
    %v443 = vunpack.c.l.b16 %v352
    %v444 = vunpack.c.h.b16 %v352
    %v445 = vunpack.c.l.b16 %v353
    %v446 = vunpack.c.h.b16 %v353
    %v447 = vunpack.c.l.b16 %v354
    %v448 = vunpack.c.h.b16 %v354
    %v449 = vunpack.c.l.b16 %v355
    %v450 = vunpack.c.h.b16 %v355
    %v451 = vunpack.c.l.b16 %v356
    %v452 = vunpack.c.h.b16 %v356
    %v453 = vunpack.c.l.b16 %v357
    %v454 = vunpack.c.h.b16 %v357
    %v455 = vunpack.c.l.b16 %v358
    %v456 = vunpack.c.h.b16 %v358
    %v457 = vunpack.c.l.b16 %v359
    %v458 = vunpack.c.h.b16 %v359
    %v459 = vunpack.c.l.b16 %v360
    %v460 = vunpack.c.h.b16 %v360
    %v461 = vpack.c.b16 %v401, %v397
    %v462 = vpack.c.b16 %v402, %v398
    %v463 = vpack.c.b16 %v403, %v399
    %v464 = vpack.c.b16 %v404, %v400
    %v465 = vpack.c.b16 %v409, %v405
    %v466 = vpack.c.b16 %v410, %v406
    %v467 = vpack.c.b16 %v411, %v407
    %v468 = vpack.c.b16 %v412, %v408
    %v469 = vpack.c.b16 %v417, %v413
    %v470 = vpack.c.b16 %v418, %v414
    %v471 = vpack.c.b16 %v419, %v415
    %v472 = vpack.c.b16 %v420, %v416
    %v473 = vpack.c.b16 %v425, %v421
    %v474 = vpack.c.b16 %v426, %v422
    %v475 = vpack.c.b16 %v427, %v423
    %v476 = vpack.c.b16 %v428, %v424
    %v477 = vpack.c.b16 %v433, %v429
    %v478 = vpack.c.b16 %v434, %v430
    %v479 = vpack.c.b16 %v435, %v431
    %v480 = vpack.c.b16 %v436, %v432
    %v481 = vpack.c.b16 %v441, %v437
    %v482 = vpack.c.b16 %v442, %v438
    %v483 = vpack.c.b16 %v443, %v439
    %v484 = vpack.c.b16 %v444, %v440
    %v485 = vpack.c.b16 %v449, %v445
    %v486 = vpack.c.b16 %v450, %v446
    %v487 = vpack.c.b16 %v451, %v447
    %v488 = vpack.c.b16 %v452, %v448
    %v489 = vpack.c.b16 %v457, %v453
    %v490 = vpack.c.b16 %v458, %v454
    %v491 = vpack.c.b16 %v459, %v455
    %v492 = vpack.c.b16 %v460, %v456
    %525 = vmatpush.bf16.msra.mxu0 %v489
    %526 = vmatpush.bf16.msra.mxu0 %v485
    %527 = vmatpush.bf16.msra.mxu0 %v481
    %528 = vmatpush.bf16.msra.mxu0 %v477
    %529 = vmatpush.bf16.msra.mxu0 %v473
    %530 = vmatpush.bf16.msra.mxu0 %v469
    %531 = vmatpush.bf16.msra.mxu0 %v465
    %532 = vmatpush.bf16.msra.mxu0 %v461
    %533 = vmatmul.bf16.gmra.mxu0 %v364
    %v534 = vpop.f32.mrf.mxu0
    %v535 = vadd.f32 0.0, %v534
    %v536 = vpop.f32.mrf.mxu0
    %537 = vdwg.mxu0
    %538 = vmatpush.bf16.msra.mxu0 %v490
    %539 = vmatpush.bf16.msra.mxu0 %v486
    %540 = vmatpush.bf16.msra.mxu0 %v482
    %541 = vmatpush.bf16.msra.mxu0 %v478
    %542 = vmatpush.bf16.msra.mxu0 %v474
    %543 = vmatpush.bf16.msra.mxu0 %v470
    %544 = vmatpush.bf16.msra.mxu0 %v466
    %545 = vmatpush.bf16.msra.mxu0 %v462
    %546 = vmatmul.bf16.gmra.mxu0 %v364
    %v547 = vpop.f32.mrf.mxu0
    %v548 = vadd.f32 0.0, %v547
    %v549 = vpop.f32.mrf.mxu0
    %550 = vdwg.mxu0
    %551 = vmatpush.bf16.msra.mxu0 %v491
    %552 = vmatpush.bf16.msra.mxu0 %v487
    %553 = vmatpush.bf16.msra.mxu0 %v483
    %554 = vmatpush.bf16.msra.mxu0 %v479
    %555 = vmatpush.bf16.msra.mxu0 %v475
    %556 = vmatpush.bf16.msra.mxu0 %v471
    %557 = vmatpush.bf16.msra.mxu0 %v467
    %558 = vmatpush.bf16.msra.mxu0 %v463
    %559 = vmatmul.bf16.gmra.mxu0 %v364
    %v560 = vpop.f32.mrf.mxu0
    %v561 = vadd.f32 0.0, %v560
    %v562 = vpop.f32.mrf.mxu0
    %563 = vdwg.mxu0
    %564 = vmatpush.bf16.msra.mxu0 %v492
    %565 = vmatpush.bf16.msra.mxu0 %v488
    %566 = vmatpush.bf16.msra.mxu0 %v484
    %567 = vmatpush.bf16.msra.mxu0 %v480
    %568 = vmatpush.bf16.msra.mxu0 %v476
    %569 = vmatpush.bf16.msra.mxu0 %v472
    %570 = vmatpush.bf16.msra.mxu0 %v468
    %571 = vmatpush.bf16.msra.mxu0 %v464
    %572 = vmatmul.bf16.gmra.mxu0 %v364
    %v573 = vpop.f32.mrf.mxu0
    %v574 = vadd.f32 0.0, %v573
    %v575 = vpop.f32.mrf.mxu0
    %576 = vdwg.mxu0
    %v581 = vrot.slane %v548, 6
    %v582 = vrot.slane %v561, 4
    %v583 = vrot.slane %v574, 2
    %v584 = vsel %vm197, %v535, %v581
    %v585 = vsel %vm221, %v582, %v583
    %vm586 = vcmask 1043456
    %v587 = vsel %vm586, %v584, %v585
    %v589 = vadd.f32 %v363, %v587
    %v590 = vmul.f32 %v589, 0.5
    %v591 = vtanh.pop %v590
    %v592 = vmul.f32 %v591, 0.5
    %v593 = vadd.f32 %v592, 0.5
    %v595 = vrot.slane %v589, 2
    %v597 = vmul.f32 %v595, 0.5
    %v598 = vtanh.pop %v597
    %v599 = vmul.f32 %v598, 0.5
    %v600 = vadd.f32 %v599, 0.5
    %v601 = vrot.slane %v589, 4
    %v603 = vtanh.pop %v601
    %v604 = vrot.slane %v589, 6
    %v606 = vmul.f32 %v604, 0.5
    %v607 = vtanh.pop %v606
    %v608 = vmul.f32 %v607, 0.5
    %v609 = vadd.f32 %v608, 0.5
    %v610 = vmul.f32 %v600, %v362
    %v611 = vmul.f32 %v593, %v603
    %v612 = vadd.f32 %v610, %v611
    %v613 = vtanh.pop %v612
    %v614 = vmul.f32 %v609, %v613
    %615 = vst [vmem:[#allocation13] sm:$0x3] %v614
    %s616 = scalar_lea.vmem [#allocation2], 8
    %v617 = vld [vmem:[%s616] sm:$0xff]
    %v618 = vpack.c.bf16 %v614, %v614
    %619 = vmatpush.bf16.msra.mxu0 %v489
    %620 = vmatpush.bf16.msra.mxu0 %v485
    %621 = vmatpush.bf16.msra.mxu0 %v481
    %622 = vmatpush.bf16.msra.mxu0 %v477
    %623 = vmatpush.bf16.msra.mxu0 %v473
    %624 = vmatpush.bf16.msra.mxu0 %v469
    %625 = vmatpush.bf16.msra.mxu0 %v465
    %626 = vmatpush.bf16.msra.mxu0 %v461
    %627 = vmatmul.bf16.gmra.mxu0 %v618
    %v628 = vpop.f32.mrf.mxu0
    %v629 = vadd.f32 0.0, %v628
    %v630 = vpop.f32.mrf.mxu0
    %631 = vdwg.mxu0
    %632 = vmatpush.bf16.msra.mxu0 %v490
    %633 = vmatpush.bf16.msra.mxu0 %v486
    %634 = vmatpush.bf16.msra.mxu0 %v482
    %635 = vmatpush.bf16.msra.mxu0 %v478
    %636 = vmatpush.bf16.msra.mxu0 %v474
    %637 = vmatpush.bf16.msra.mxu0 %v470
    %638 = vmatpush.bf16.msra.mxu0 %v466
    %639 = vmatpush.bf16.msra.mxu0 %v462
    %640 = vmatmul.bf16.gmra.mxu0 %v618
    %v641 = vpop.f32.mrf.mxu0
    %v642 = vadd.f32 0.0, %v641
    %v643 = vpop.f32.mrf.mxu0
    %644 = vdwg.mxu0
    %645 = vmatpush.bf16.msra.mxu0 %v491
    %646 = vmatpush.bf16.msra.mxu0 %v487
    %647 = vmatpush.bf16.msra.mxu0 %v483
    %648 = vmatpush.bf16.msra.mxu0 %v479
    %649 = vmatpush.bf16.msra.mxu0 %v475
    %650 = vmatpush.bf16.msra.mxu0 %v471
    %651 = vmatpush.bf16.msra.mxu0 %v467
    %652 = vmatpush.bf16.msra.mxu0 %v463
    %653 = vmatmul.bf16.gmra.mxu0 %v618
    %v654 = vpop.f32.mrf.mxu0
    %v655 = vadd.f32 0.0, %v654
    %v656 = vpop.f32.mrf.mxu0
    %657 = vdwg.mxu0
    %658 = vmatpush.bf16.msra.mxu0 %v492
    %659 = vmatpush.bf16.msra.mxu0 %v488
    %660 = vmatpush.bf16.msra.mxu0 %v484
    %661 = vmatpush.bf16.msra.mxu0 %v480
    %662 = vmatpush.bf16.msra.mxu0 %v476
    %663 = vmatpush.bf16.msra.mxu0 %v472
    %664 = vmatpush.bf16.msra.mxu0 %v468
    %665 = vmatpush.bf16.msra.mxu0 %v464
    %666 = vmatmul.bf16.gmra.mxu0 %v618
    %v667 = vpop.f32.mrf.mxu0
    %v668 = vadd.f32 0.0, %v667
    %v669 = vpop.f32.mrf.mxu0
    %670 = vdwg.mxu0
    %v675 = vrot.slane %v642, 6
    %v676 = vrot.slane %v655, 4
    %v677 = vrot.slane %v668, 2
    %v678 = vsel %vm197, %v629, %v675
    %v679 = vsel %vm221, %v676, %v677
    %v680 = vsel %vm586, %v678, %v679
    %v682 = vadd.f32 %v617, %v680
    %v683 = vmul.f32 %v682, 0.5
    %v684 = vtanh.pop %v683
    %v685 = vmul.f32 %v684, 0.5
    %v686 = vadd.f32 %v685, 0.5
    %v688 = vrot.slane %v682, 2
    %v690 = vmul.f32 %v688, 0.5
    %v691 = vtanh.pop %v690
    %v692 = vmul.f32 %v691, 0.5
    %v693 = vadd.f32 %v692, 0.5
    %v694 = vrot.slane %v682, 4
    %v696 = vtanh.pop %v694
    %v697 = vrot.slane %v682, 6
    %v699 = vmul.f32 %v697, 0.5
    %v700 = vtanh.pop %v699
    %v701 = vmul.f32 %v700, 0.5
    %v702 = vadd.f32 %v701, 0.5
    %v703 = vmul.f32 %v693, %v612
    %v704 = vmul.f32 %v686, %v696
    %v705 = vadd.f32 %v703, %v704
    %v706 = vtanh.pop %v705
    %v707 = vmul.f32 %v702, %v706
    %s708 = scalar_lea.vmem [#allocation13], 2
    %709 = vst [vmem:[%s708] sm:$0x3] %v707
    %s710 = scalar_lea.vmem [#allocation2], 16
    %v711 = vld [vmem:[%s710] sm:$0xff]
    %v712 = vpack.c.bf16 %v707, %v707
    %713 = vmatpush.bf16.msra.mxu0 %v489
    %714 = vmatpush.bf16.msra.mxu0 %v485
    %715 = vmatpush.bf16.msra.mxu0 %v481
    %716 = vmatpush.bf16.msra.mxu0 %v477
    %717 = vmatpush.bf16.msra.mxu0 %v473
    %718 = vmatpush.bf16.msra.mxu0 %v469
    %719 = vmatpush.bf16.msra.mxu0 %v465
    %720 = vmatpush.bf16.msra.mxu0 %v461
    %721 = vmatmul.bf16.gmra.mxu0 %v712
    %v722 = vpop.f32.mrf.mxu0
    %v723 = vadd.f32 0.0, %v722
    %v724 = vpop.f32.mrf.mxu0
    %725 = vdwg.mxu0
    %726 = vmatpush.bf16.msra.mxu0 %v490
    %727 = vmatpush.bf16.msra.mxu0 %v486
    %728 = vmatpush.bf16.msra.mxu0 %v482
    %729 = vmatpush.bf16.msra.mxu0 %v478
    %730 = vmatpush.bf16.msra.mxu0 %v474
    %731 = vmatpush.bf16.msra.mxu0 %v470
    %732 = vmatpush.bf16.msra.mxu0 %v466
    %733 = vmatpush.bf16.msra.mxu0 %v462
    %734 = vmatmul.bf16.gmra.mxu0 %v712
    %v735 = vpop.f32.mrf.mxu0
    %v736 = vadd.f32 0.0, %v735
    %v737 = vpop.f32.mrf.mxu0
    %738 = vdwg.mxu0
    %739 = vmatpush.bf16.msra.mxu0 %v491
    %740 = vmatpush.bf16.msra.mxu0 %v487
    %741 = vmatpush.bf16.msra.mxu0 %v483
    %742 = vmatpush.bf16.msra.mxu0 %v479
    %743 = vmatpush.bf16.msra.mxu0 %v475
    %744 = vmatpush.bf16.msra.mxu0 %v471
    %745 = vmatpush.bf16.msra.mxu0 %v467
    %746 = vmatpush.bf16.msra.mxu0 %v463
    %747 = vmatmul.bf16.gmra.mxu0 %v712
    %v748 = vpop.f32.mrf.mxu0
    %v749 = vadd.f32 0.0, %v748
    %v750 = vpop.f32.mrf.mxu0
    %751 = vdwg.mxu0
    %752 = vmatpush.bf16.msra.mxu0 %v492
    %753 = vmatpush.bf16.msra.mxu0 %v488
    %754 = vmatpush.bf16.msra.mxu0 %v484
    %755 = vmatpush.bf16.msra.mxu0 %v480
    %756 = vmatpush.bf16.msra.mxu0 %v476
    %757 = vmatpush.bf16.msra.mxu0 %v472
    %758 = vmatpush.bf16.msra.mxu0 %v468
    %759 = vmatpush.bf16.msra.mxu0 %v464
    %760 = vmatmul.bf16.gmra.mxu0 %v712
    %v761 = vpop.f32.mrf.mxu0
    %v762 = vadd.f32 0.0, %v761
    %v763 = vpop.f32.mrf.mxu0
    %764 = vdwg.mxu0
    %v769 = vrot.slane %v736, 6
    %v770 = vrot.slane %v749, 4
    %v771 = vrot.slane %v762, 2
    %v772 = vsel %vm197, %v723, %v769
    %v773 = vsel %vm221, %v770, %v771
    %v774 = vsel %vm586, %v772, %v773
    %v776 = vadd.f32 %v711, %v774
    %v777 = vmul.f32 %v776, 0.5
    %v778 = vtanh.pop %v777
    %v779 = vmul.f32 %v778, 0.5
    %v780 = vadd.f32 %v779, 0.5
    %v782 = vrot.slane %v776, 2
    %v784 = vmul.f32 %v782, 0.5
    %v785 = vtanh.pop %v784
    %v786 = vmul.f32 %v785, 0.5
    %v787 = vadd.f32 %v786, 0.5
    %v788 = vrot.slane %v776, 4
    %v790 = vtanh.pop %v788
    %v791 = vrot.slane %v776, 6
    %v793 = vmul.f32 %v791, 0.5
    %v794 = vtanh.pop %v793
    %v795 = vmul.f32 %v794, 0.5
    %v796 = vadd.f32 %v795, 0.5
    %v797 = vmul.f32 %v787, %v705
    %v798 = vmul.f32 %v780, %v790
    %v799 = vadd.f32 %v797, %v798
    %v800 = vtanh.pop %v799
    %v801 = vmul.f32 %v796, %v800
    %s802 = scalar_lea.vmem [#allocation13], 4
    %803 = vst [vmem:[%s802] sm:$0x3] %v801
    %s804 = scalar_lea.vmem [#allocation2], 24
    %v805 = vld [vmem:[%s804] sm:$0xff]
    %v806 = vpack.c.bf16 %v801, %v801
    %807 = vmatpush.bf16.msra.mxu0 %v489
    %808 = vmatpush.bf16.msra.mxu0 %v485
    %809 = vmatpush.bf16.msra.mxu0 %v481
    %810 = vmatpush.bf16.msra.mxu0 %v477
    %811 = vmatpush.bf16.msra.mxu0 %v473
    %812 = vmatpush.bf16.msra.mxu0 %v469
    %813 = vmatpush.bf16.msra.mxu0 %v465
    %814 = vmatpush.bf16.msra.mxu0 %v461
    %815 = vmatmul.bf16.gmra.mxu0 %v806
    %v816 = vpop.f32.mrf.mxu0
    %v817 = vadd.f32 0.0, %v816
    %v818 = vpop.f32.mrf.mxu0
    %819 = vdwg.mxu0
    %820 = vmatpush.bf16.msra.mxu0 %v490
    %821 = vmatpush.bf16.msra.mxu0 %v486
    %822 = vmatpush.bf16.msra.mxu0 %v482
    %823 = vmatpush.bf16.msra.mxu0 %v478
    %824 = vmatpush.bf16.msra.mxu0 %v474
    %825 = vmatpush.bf16.msra.mxu0 %v470
    %826 = vmatpush.bf16.msra.mxu0 %v466
    %827 = vmatpush.bf16.msra.mxu0 %v462
    %828 = vmatmul.bf16.gmra.mxu0 %v806
    %v829 = vpop.f32.mrf.mxu0
    %v830 = vadd.f32 0.0, %v829
    %v831 = vpop.f32.mrf.mxu0
    %832 = vdwg.mxu0
    %833 = vmatpush.bf16.msra.mxu0 %v491
    %834 = vmatpush.bf16.msra.mxu0 %v487
    %835 = vmatpush.bf16.msra.mxu0 %v483
    %836 = vmatpush.bf16.msra.mxu0 %v479
    %837 = vmatpush.bf16.msra.mxu0 %v475
    %838 = vmatpush.bf16.msra.mxu0 %v471
    %839 = vmatpush.bf16.msra.mxu0 %v467
    %840 = vmatpush.bf16.msra.mxu0 %v463
    %841 = vmatmul.bf16.gmra.mxu0 %v806
    %v842 = vpop.f32.mrf.mxu0
    %v843 = vadd.f32 0.0, %v842
    %v844 = vpop.f32.mrf.mxu0
    %845 = vdwg.mxu0
    %846 = vmatpush.bf16.msra.mxu0 %v492
    %847 = vmatpush.bf16.msra.mxu0 %v488
    %848 = vmatpush.bf16.msra.mxu0 %v484
    %849 = vmatpush.bf16.msra.mxu0 %v480
    %850 = vmatpush.bf16.msra.mxu0 %v476
    %851 = vmatpush.bf16.msra.mxu0 %v472
    %852 = vmatpush.bf16.msra.mxu0 %v468
    %853 = vmatpush.bf16.msra.mxu0 %v464
    %854 = vmatmul.bf16.gmra.mxu0 %v806
    %v855 = vpop.f32.mrf.mxu0
    %v856 = vadd.f32 0.0, %v855
    %v857 = vpop.f32.mrf.mxu0
    %858 = vdwg.mxu0
    %v863 = vrot.slane %v830, 6
    %v864 = vrot.slane %v843, 4
    %v865 = vrot.slane %v856, 2
    %v866 = vsel %vm197, %v817, %v863
    %v867 = vsel %vm221, %v864, %v865
    %v868 = vsel %vm586, %v866, %v867
    %v870 = vadd.f32 %v805, %v868
    %v871 = vmul.f32 %v870, 0.5
    %v872 = vtanh.pop %v871
    %v873 = vmul.f32 %v872, 0.5
    %v874 = vadd.f32 %v873, 0.5
    %v876 = vrot.slane %v870, 2
    %v878 = vmul.f32 %v876, 0.5
    %v879 = vtanh.pop %v878
    %v880 = vmul.f32 %v879, 0.5
    %v881 = vadd.f32 %v880, 0.5
    %v882 = vrot.slane %v870, 4
    %v884 = vtanh.pop %v882
    %v885 = vrot.slane %v870, 6
    %v887 = vmul.f32 %v885, 0.5
    %v888 = vtanh.pop %v887
    %v889 = vmul.f32 %v888, 0.5
    %v890 = vadd.f32 %v889, 0.5
    %v891 = vmul.f32 %v881, %v799
    %v892 = vmul.f32 %v874, %v884
    %v893 = vadd.f32 %v891, %v892
    %v894 = vtanh.pop %v893
    %v895 = vmul.f32 %v890, %v894
    %s896 = scalar_lea.vmem [#allocation13], 6
    %897 = vst [vmem:[%s896] sm:$0x3] %v895
    %s898 = scalar_lea.vmem [#allocation2], 32
    %v899 = vld [vmem:[%s898] sm:$0xff]
    %v900 = vpack.c.bf16 %v895, %v895
    %901 = vmatpush.bf16.msra.mxu0 %v489
    %902 = vmatpush.bf16.msra.mxu0 %v485
    %903 = vmatpush.bf16.msra.mxu0 %v481
    %904 = vmatpush.bf16.msra.mxu0 %v477
    %905 = vmatpush.bf16.msra.mxu0 %v473
    %906 = vmatpush.bf16.msra.mxu0 %v469
    %907 = vmatpush.bf16.msra.mxu0 %v465
    %908 = vmatpush.bf16.msra.mxu0 %v461
    %909 = vmatmul.bf16.gmra.mxu0 %v900
    %v910 = vpop.f32.mrf.mxu0
    %v911 = vadd.f32 0.0, %v910
    %v912 = vpop.f32.mrf.mxu0
    %913 = vdwg.mxu0
    %914 = vmatpush.bf16.msra.mxu0 %v490
    %915 = vmatpush.bf16.msra.mxu0 %v486
    %916 = vmatpush.bf16.msra.mxu0 %v482
    %917 = vmatpush.bf16.msra.mxu0 %v478
    %918 = vmatpush.bf16.msra.mxu0 %v474
    %919 = vmatpush.bf16.msra.mxu0 %v470
    %920 = vmatpush.bf16.msra.mxu0 %v466
    %921 = vmatpush.bf16.msra.mxu0 %v462
    %922 = vmatmul.bf16.gmra.mxu0 %v900
    %v923 = vpop.f32.mrf.mxu0
    %v924 = vadd.f32 0.0, %v923
    %v925 = vpop.f32.mrf.mxu0
    %926 = vdwg.mxu0
    %927 = vmatpush.bf16.msra.mxu0 %v491
    %928 = vmatpush.bf16.msra.mxu0 %v487
    %929 = vmatpush.bf16.msra.mxu0 %v483
    %930 = vmatpush.bf16.msra.mxu0 %v479
    %931 = vmatpush.bf16.msra.mxu0 %v475
    %932 = vmatpush.bf16.msra.mxu0 %v471
    %933 = vmatpush.bf16.msra.mxu0 %v467
    %934 = vmatpush.bf16.msra.mxu0 %v463
    %935 = vmatmul.bf16.gmra.mxu0 %v900
    %v936 = vpop.f32.mrf.mxu0
    %v937 = vadd.f32 0.0, %v936
    %v938 = vpop.f32.mrf.mxu0
    %939 = vdwg.mxu0
    %940 = vmatpush.bf16.msra.mxu0 %v492
    %941 = vmatpush.bf16.msra.mxu0 %v488
    %942 = vmatpush.bf16.msra.mxu0 %v484
    %943 = vmatpush.bf16.msra.mxu0 %v480
    %944 = vmatpush.bf16.msra.mxu0 %v476
    %945 = vmatpush.bf16.msra.mxu0 %v472
    %946 = vmatpush.bf16.msra.mxu0 %v468
    %947 = vmatpush.bf16.msra.mxu0 %v464
    %948 = vmatmul.bf16.gmra.mxu0 %v900
    %v949 = vpop.f32.mrf.mxu0
    %v950 = vadd.f32 0.0, %v949
    %v951 = vpop.f32.mrf.mxu0
    %952 = vdwg.mxu0
    %v957 = vrot.slane %v924, 6
    %v958 = vrot.slane %v937, 4
    %v959 = vrot.slane %v950, 2
    %v960 = vsel %vm197, %v911, %v957
    %v961 = vsel %vm221, %v958, %v959
    %v962 = vsel %vm586, %v960, %v961
    %v964 = vadd.f32 %v899, %v962
    %v965 = vmul.f32 %v964, 0.5
    %v966 = vtanh.pop %v965
    %v967 = vmul.f32 %v966, 0.5
    %v968 = vadd.f32 %v967, 0.5
    %v970 = vrot.slane %v964, 2
    %v972 = vmul.f32 %v970, 0.5
    %v973 = vtanh.pop %v972
    %v974 = vmul.f32 %v973, 0.5
    %v975 = vadd.f32 %v974, 0.5
    %v976 = vrot.slane %v964, 4
    %v978 = vtanh.pop %v976
    %v979 = vrot.slane %v964, 6
    %v981 = vmul.f32 %v979, 0.5
    %v982 = vtanh.pop %v981
    %v983 = vmul.f32 %v982, 0.5
    %v984 = vadd.f32 %v983, 0.5
    %v985 = vmul.f32 %v975, %v893
    %v986 = vmul.f32 %v968, %v978
    %v987 = vadd.f32 %v985, %v986
    %v988 = vtanh.pop %v987
    %v989 = vmul.f32 %v984, %v988
    %s990 = scalar_lea.vmem [#allocation13], 8
    %991 = vst [vmem:[%s990] sm:$0x3] %v989
    %s992 = scalar_lea.vmem [#allocation2], 40
    %v993 = vld [vmem:[%s992] sm:$0xff]
    %v994 = vpack.c.bf16 %v989, %v989
    %995 = vmatpush.bf16.msra.mxu0 %v489
    %996 = vmatpush.bf16.msra.mxu0 %v485
    %997 = vmatpush.bf16.msra.mxu0 %v481
    %998 = vmatpush.bf16.msra.mxu0 %v477
    %999 = vmatpush.bf16.msra.mxu0 %v473
    %1000 = vmatpush.bf16.msra.mxu0 %v469
    %1001 = vmatpush.bf16.msra.mxu0 %v465
    %1002 = vmatpush.bf16.msra.mxu0 %v461
    %1003 = vmatmul.bf16.gmra.mxu0 %v994
    %v1004 = vpop.f32.mrf.mxu0
    %v1005 = vadd.f32 0.0, %v1004
    %v1006 = vpop.f32.mrf.mxu0
    %1007 = vdwg.mxu0
    %1008 = vmatpush.bf16.msra.mxu0 %v490
    %1009 = vmatpush.bf16.msra.mxu0 %v486
    %1010 = vmatpush.bf16.msra.mxu0 %v482
    %1011 = vmatpush.bf16.msra.mxu0 %v478
    %1012 = vmatpush.bf16.msra.mxu0 %v474
    %1013 = vmatpush.bf16.msra.mxu0 %v470
    %1014 = vmatpush.bf16.msra.mxu0 %v466
    %1015 = vmatpush.bf16.msra.mxu0 %v462
    %1016 = vmatmul.bf16.gmra.mxu0 %v994
    %v1017 = vpop.f32.mrf.mxu0
    %v1018 = vadd.f32 0.0, %v1017
    %v1019 = vpop.f32.mrf.mxu0
    %1020 = vdwg.mxu0
    %1021 = vmatpush.bf16.msra.mxu0 %v491
    %1022 = vmatpush.bf16.msra.mxu0 %v487
    %1023 = vmatpush.bf16.msra.mxu0 %v483
    %1024 = vmatpush.bf16.msra.mxu0 %v479
    %1025 = vmatpush.bf16.msra.mxu0 %v475
    %1026 = vmatpush.bf16.msra.mxu0 %v471
    %1027 = vmatpush.bf16.msra.mxu0 %v467
    %1028 = vmatpush.bf16.msra.mxu0 %v463
    %1029 = vmatmul.bf16.gmra.mxu0 %v994
    %v1030 = vpop.f32.mrf.mxu0
    %v1031 = vadd.f32 0.0, %v1030
    %v1032 = vpop.f32.mrf.mxu0
    %1033 = vdwg.mxu0
    %1034 = vmatpush.bf16.msra.mxu0 %v492
    %1035 = vmatpush.bf16.msra.mxu0 %v488
    %1036 = vmatpush.bf16.msra.mxu0 %v484
    %1037 = vmatpush.bf16.msra.mxu0 %v480
    %1038 = vmatpush.bf16.msra.mxu0 %v476
    %1039 = vmatpush.bf16.msra.mxu0 %v472
    %1040 = vmatpush.bf16.msra.mxu0 %v468
    %1041 = vmatpush.bf16.msra.mxu0 %v464
    %1042 = vmatmul.bf16.gmra.mxu0 %v994
    %v1043 = vpop.f32.mrf.mxu0
    %v1044 = vadd.f32 0.0, %v1043
    %v1045 = vpop.f32.mrf.mxu0
    %1046 = vdwg.mxu0
    %v1051 = vrot.slane %v1018, 6
    %v1052 = vrot.slane %v1031, 4
    %v1053 = vrot.slane %v1044, 2
    %v1054 = vsel %vm197, %v1005, %v1051
    %v1055 = vsel %vm221, %v1052, %v1053
    %v1056 = vsel %vm586, %v1054, %v1055
    %v1058 = vadd.f32 %v993, %v1056
    %v1059 = vmul.f32 %v1058, 0.5
    %v1060 = vtanh.pop %v1059
    %v1061 = vmul.f32 %v1060, 0.5
    %v1062 = vadd.f32 %v1061, 0.5
    %v1064 = vrot.slane %v1058, 2
    %v1066 = vmul.f32 %v1064, 0.5
    %v1067 = vtanh.pop %v1066
    %v1068 = vmul.f32 %v1067, 0.5
    %v1069 = vadd.f32 %v1068, 0.5
    %v1070 = vrot.slane %v1058, 4
    %v1072 = vtanh.pop %v1070
    %v1073 = vrot.slane %v1058, 6
    %v1075 = vmul.f32 %v1073, 0.5
    %v1076 = vtanh.pop %v1075
    %v1077 = vmul.f32 %v1076, 0.5
    %v1078 = vadd.f32 %v1077, 0.5
    %v1079 = vmul.f32 %v1069, %v987
    %v1080 = vmul.f32 %v1062, %v1072
    %v1081 = vadd.f32 %v1079, %v1080
    %v1082 = vtanh.pop %v1081
    %v1083 = vmul.f32 %v1078, %v1082
    %s1084 = scalar_lea.vmem [#allocation13], 10
    %1085 = vst [vmem:[%s1084] sm:$0x3] %v1083
    %s1086 = scalar_lea.vmem [#allocation2], 48
    %v1087 = vld [vmem:[%s1086] sm:$0xff]
    %v1088 = vpack.c.bf16 %v1083, %v1083
    %1089 = vmatpush.bf16.msra.mxu0 %v489
    %1090 = vmatpush.bf16.msra.mxu0 %v485
    %1091 = vmatpush.bf16.msra.mxu0 %v481
    %1092 = vmatpush.bf16.msra.mxu0 %v477
    %1093 = vmatpush.bf16.msra.mxu0 %v473
    %1094 = vmatpush.bf16.msra.mxu0 %v469
    %1095 = vmatpush.bf16.msra.mxu0 %v465
    %1096 = vmatpush.bf16.msra.mxu0 %v461
    %1097 = vmatmul.bf16.gmra.mxu0 %v1088
    %v1098 = vpop.f32.mrf.mxu0
    %v1099 = vadd.f32 0.0, %v1098
    %v1100 = vpop.f32.mrf.mxu0
    %1101 = vdwg.mxu0
    %1102 = vmatpush.bf16.msra.mxu0 %v490
    %1103 = vmatpush.bf16.msra.mxu0 %v486
    %1104 = vmatpush.bf16.msra.mxu0 %v482
    %1105 = vmatpush.bf16.msra.mxu0 %v478
    %1106 = vmatpush.bf16.msra.mxu0 %v474
    %1107 = vmatpush.bf16.msra.mxu0 %v470
    %1108 = vmatpush.bf16.msra.mxu0 %v466
    %1109 = vmatpush.bf16.msra.mxu0 %v462
    %1110 = vmatmul.bf16.gmra.mxu0 %v1088
    %v1111 = vpop.f32.mrf.mxu0
    %v1112 = vadd.f32 0.0, %v1111
    %v1113 = vpop.f32.mrf.mxu0
    %1114 = vdwg.mxu0
    %1115 = vmatpush.bf16.msra.mxu0 %v491
    %1116 = vmatpush.bf16.msra.mxu0 %v487
    %1117 = vmatpush.bf16.msra.mxu0 %v483
    %1118 = vmatpush.bf16.msra.mxu0 %v479
    %1119 = vmatpush.bf16.msra.mxu0 %v475
    %1120 = vmatpush.bf16.msra.mxu0 %v471
    %1121 = vmatpush.bf16.msra.mxu0 %v467
    %1122 = vmatpush.bf16.msra.mxu0 %v463
    %1123 = vmatmul.bf16.gmra.mxu0 %v1088
    %v1124 = vpop.f32.mrf.mxu0
    %v1125 = vadd.f32 0.0, %v1124
    %v1126 = vpop.f32.mrf.mxu0
    %1127 = vdwg.mxu0
    %1128 = vmatpush.bf16.msra.mxu0 %v492
    %1129 = vmatpush.bf16.msra.mxu0 %v488
    %1130 = vmatpush.bf16.msra.mxu0 %v484
    %1131 = vmatpush.bf16.msra.mxu0 %v480
    %1132 = vmatpush.bf16.msra.mxu0 %v476
    %1133 = vmatpush.bf16.msra.mxu0 %v472
    %1134 = vmatpush.bf16.msra.mxu0 %v468
    %1135 = vmatpush.bf16.msra.mxu0 %v464
    %1136 = vmatmul.bf16.gmra.mxu0 %v1088
    %v1137 = vpop.f32.mrf.mxu0
    %v1138 = vadd.f32 0.0, %v1137
    %v1139 = vpop.f32.mrf.mxu0
    %1140 = vdwg.mxu0
    %v1145 = vrot.slane %v1112, 6
    %v1146 = vrot.slane %v1125, 4
    %v1147 = vrot.slane %v1138, 2
    %v1148 = vsel %vm197, %v1099, %v1145
    %v1149 = vsel %vm221, %v1146, %v1147
    %v1150 = vsel %vm586, %v1148, %v1149
    %v1152 = vadd.f32 %v1087, %v1150
    %v1153 = vmul.f32 %v1152, 0.5
    %v1154 = vtanh.pop %v1153
    %v1155 = vmul.f32 %v1154, 0.5
    %v1156 = vadd.f32 %v1155, 0.5
    %v1158 = vrot.slane %v1152, 2
    %v1160 = vmul.f32 %v1158, 0.5
    %v1161 = vtanh.pop %v1160
    %v1162 = vmul.f32 %v1161, 0.5
    %v1163 = vadd.f32 %v1162, 0.5
    %v1164 = vrot.slane %v1152, 4
    %v1166 = vtanh.pop %v1164
    %v1167 = vrot.slane %v1152, 6
    %v1169 = vmul.f32 %v1167, 0.5
    %v1170 = vtanh.pop %v1169
    %v1171 = vmul.f32 %v1170, 0.5
    %v1172 = vadd.f32 %v1171, 0.5
    %v1173 = vmul.f32 %v1163, %v1081
    %v1174 = vmul.f32 %v1156, %v1166
    %v1175 = vadd.f32 %v1173, %v1174
    %v1176 = vtanh.pop %v1175
    %v1177 = vmul.f32 %v1172, %v1176
    %s1178 = scalar_lea.vmem [#allocation13], 12
    %1179 = vst [vmem:[%s1178] sm:$0x3] %v1177
    %s1180 = scalar_lea.vmem [#allocation2], 56
    %v1181 = vld [vmem:[%s1180] sm:$0xff]
    %v1182 = vpack.c.bf16 %v1177, %v1177
    %1183 = vmatpush.bf16.msra.mxu0 %v489
    %1184 = vmatpush.bf16.msra.mxu0 %v485
    %1185 = vmatpush.bf16.msra.mxu0 %v481
    %1186 = vmatpush.bf16.msra.mxu0 %v477
    %1187 = vmatpush.bf16.msra.mxu0 %v473
    %1188 = vmatpush.bf16.msra.mxu0 %v469
    %1189 = vmatpush.bf16.msra.mxu0 %v465
    %1190 = vmatpush.bf16.msra.mxu0 %v461
    %1191 = vmatmul.bf16.gmra.mxu0 %v1182
    %v1192 = vpop.f32.mrf.mxu0
    %v1193 = vadd.f32 0.0, %v1192
    %v1194 = vpop.f32.mrf.mxu0
    %1195 = vdwg.mxu0
    %1196 = vmatpush.bf16.msra.mxu0 %v490
    %1197 = vmatpush.bf16.msra.mxu0 %v486
    %1198 = vmatpush.bf16.msra.mxu0 %v482
    %1199 = vmatpush.bf16.msra.mxu0 %v478
    %1200 = vmatpush.bf16.msra.mxu0 %v474
    %1201 = vmatpush.bf16.msra.mxu0 %v470
    %1202 = vmatpush.bf16.msra.mxu0 %v466
    %1203 = vmatpush.bf16.msra.mxu0 %v462
    %1204 = vmatmul.bf16.gmra.mxu0 %v1182
    %v1205 = vpop.f32.mrf.mxu0
    %v1206 = vadd.f32 0.0, %v1205
    %v1207 = vpop.f32.mrf.mxu0
    %1208 = vdwg.mxu0
    %1209 = vmatpush.bf16.msra.mxu0 %v491
    %1210 = vmatpush.bf16.msra.mxu0 %v487
    %1211 = vmatpush.bf16.msra.mxu0 %v483
    %1212 = vmatpush.bf16.msra.mxu0 %v479
    %1213 = vmatpush.bf16.msra.mxu0 %v475
    %1214 = vmatpush.bf16.msra.mxu0 %v471
    %1215 = vmatpush.bf16.msra.mxu0 %v467
    %1216 = vmatpush.bf16.msra.mxu0 %v463
    %1217 = vmatmul.bf16.gmra.mxu0 %v1182
    %v1218 = vpop.f32.mrf.mxu0
    %v1219 = vadd.f32 0.0, %v1218
    %v1220 = vpop.f32.mrf.mxu0
    %1221 = vdwg.mxu0
    %1222 = vmatpush.bf16.msra.mxu0 %v492
    %1223 = vmatpush.bf16.msra.mxu0 %v488
    %1224 = vmatpush.bf16.msra.mxu0 %v484
    %1225 = vmatpush.bf16.msra.mxu0 %v480
    %1226 = vmatpush.bf16.msra.mxu0 %v476
    %1227 = vmatpush.bf16.msra.mxu0 %v472
    %1228 = vmatpush.bf16.msra.mxu0 %v468
    %1229 = vmatpush.bf16.msra.mxu0 %v464
    %1230 = vmatmul.bf16.gmra.mxu0 %v1182
    %v1231 = vpop.f32.mrf.mxu0
    %v1232 = vadd.f32 0.0, %v1231
    %v1233 = vpop.f32.mrf.mxu0
    %1234 = vdwg.mxu0
    %v1239 = vrot.slane %v1206, 6
    %v1240 = vrot.slane %v1219, 4
    %v1241 = vrot.slane %v1232, 2
    %v1242 = vsel %vm197, %v1193, %v1239
    %v1243 = vsel %vm221, %v1240, %v1241
    %v1244 = vsel %vm586, %v1242, %v1243
    %v1246 = vadd.f32 %v1181, %v1244
    %v1247 = vmul.f32 %v1246, 0.5
    %v1248 = vtanh.pop %v1247
    %v1249 = vmul.f32 %v1248, 0.5
    %v1250 = vadd.f32 %v1249, 0.5
    %v1252 = vrot.slane %v1246, 2
    %v1254 = vmul.f32 %v1252, 0.5
    %v1255 = vtanh.pop %v1254
    %v1256 = vmul.f32 %v1255, 0.5
    %v1257 = vadd.f32 %v1256, 0.5
    %v1258 = vrot.slane %v1246, 4
    %v1260 = vtanh.pop %v1258
    %v1261 = vrot.slane %v1246, 6
    %v1263 = vmul.f32 %v1261, 0.5
    %v1264 = vtanh.pop %v1263
    %v1265 = vmul.f32 %v1264, 0.5
    %v1266 = vadd.f32 %v1265, 0.5
    %v1267 = vmul.f32 %v1257, %v1175
    %v1268 = vmul.f32 %v1250, %v1260
    %v1269 = vadd.f32 %v1267, %v1268
    %v1270 = vtanh.pop %v1269
    %v1271 = vmul.f32 %v1266, %v1270
    %s1272 = scalar_lea.vmem [#allocation13], 14
    %1273 = vst [vmem:[%s1272] sm:$0x3] %v1271
    %1274 = vst [vmem:[#allocation3] sm:$0x3] %v1271
    %1275 = vst [vmem:[#allocation4] sm:$0x3] %v1269
    %v1276 = vld [vmem:[#allocation4] sm:$0x3]
    %1277 = vst [vmem:[#allocation14] sm:$0x3] %v1276
    // Predicated region
    $region38: #{tpu_custom_call.1} parent=1 // pred_check
      _
    $region39: #{tpu_custom_call.1} parent=1 // pred_check_branch
      %1279 = sbr.rel (0) target = $region41
    $region40: #{tpu_custom_call.1} parent=1 // pred_region
      %1281 = vsyncadd [#allocation7], 0
      %s1282 = sshll.u32 [#allocation13], 4
      %s1283 = int_to_ptr.vmem [resolvable:$true] %s1282
      %s1284 = sshll.u32 %s4, 4
      %s1285 = int_to_ptr.hbm [resolvable:$true] %s1284
      %1290 = dma.vmem_to_hbm [thread:$0]  %s1283, 256, %s1285, [#allocation7], 32, 32, 2
    $region41: #{tpu_custom_call.1} parent=1 // pred_fallthru
      _
    // Predicated region
    $region42: #{tpu_custom_call.1} parent=1 // pred_check
      _
    $region43: #{tpu_custom_call.1} parent=1 // pred_check_branch
      %1292 = sbr.rel (0) target = $region45
    $region44: #{tpu_custom_call.1} parent=1 // pred_region
      %1294 = vsyncadd [#allocation15], 0
      %s1296 = sshll.u32 [#allocation14], 4
      %s1297 = int_to_ptr.vmem [resolvable:$true] %s1296
      %s1298 = sshll.u32 %s5, 4
      %s1299 = int_to_ptr.hbm [resolvable:$true] %s1298
      %1301 = dma.vmem_to_hbm [thread:$0]  %s1297, 32, %s1299, [#allocation15]
    $region45: #{tpu_custom_call.1} parent=1 // pred_fallthru
      _
    // Predicated region
    $region46: #{tpu_custom_call.1} parent=1 // pred_check
      _
    $region47: #{tpu_custom_call.1} parent=1 // pred_check_branch
      %1303 = sbr.rel (0) target = $region49
    $region48: #{tpu_custom_call.1} parent=1 // pred_region
      %1305 = dma.done [#allocation7], 256
    $region49: #{tpu_custom_call.1} parent=1 // pred_fallthru
      _
    // Predicated region
    $region50: #{tpu_custom_call.1} parent=1 // pred_check
      _
    $region51: #{tpu_custom_call.1} parent=1 // pred_check_branch
      %1307 = sbr.rel (0) target = $region53
    $region52: #{tpu_custom_call.1} parent=1 // pred_region
      %1309 = dma.done [#allocation15], 32
    $region53: #{tpu_custom_call.1} parent=1 // pred_fallthru
      _
    %1310 = vsyncpa [#allocation6], 1
    %1311 = vsyncpa [#allocation9], 1
    %1312 = vsyncpa [#allocation12], 1
    %1313 = vsyncpa [#allocation7], 1
    %1314 = vsyncpa [#allocation15], 1

</llo_original>
